<compile_context>
chip_gen: v5e
topology: v5e:2x2
jax: 0.10.0
libtpu: 0.0.40
codegen_flags: <defaults>
</compile_context>

<pallas_src>
import functools
import math

import jax
import jax.numpy as jnp
import numpy as np
from jax import lax
from jax.experimental import pallas as pl
from jax.experimental.pallas import tpu as pltpu


def _round_up(x, m):
    return -(-x // m) * m


# ----------------------------------------------------------------------------
# Kernel
# ----------------------------------------------------------------------------
def lstm_gen_kernel(x_ref, w_ih0_ref, w_hh0_ref, b0_ref, w_ih1_ref, w_hh1_ref,
                    b1_ref, w_lin_ref, b_lin_ref,
                    out_ref,
                    h0_ref, c0_ref, h1_ref, c1_ref, xproj_ref, h1_hist_ref,
                    *, block_t, nb, h, gp):
    """One (batch block, time block) step of the 2-layer LSTM + linear/tanh head.

    x_ref:        (block_t*nb, Ip)   bf16, time-major rows within the batch block
    w_ih0_ref:    (Ip, gp)           bf16, packed gate cols [i | f | o | g]
    w_hh0_ref:    (h,  gp)           bf16
    b0_ref:       (1,  gp)           f32  (b_ih0 + b_hh0)
    w_ih1_ref:    (h,  gp)           bf16
    w_hh1_ref:    (h,  gp)           bf16
    b1_ref:       (1,  gp)           f32
    w_lin_ref:    (h,  Op)           bf16
    b_lin_ref:    (1,  Op)           f32
    out_ref:      (block_t*nb, Op)   f32
    h*/c*:        (nb, h) f32 scratch, persistent across time blocks
    xproj_ref:    (block_t*nb, gp) f32 scratch (bulk layer-0 input projection)
    h1_hist_ref:  (block_t*nb, h) bf16 scratch (per-step layer-1 hidden)
    """
    # Zero the LSTM state on the first time block of each batch block only.
    @pl.when(pl.program_id(1) == 0)
    def _init():
        h0_ref[...] = jnp.zeros_like(h0_ref)
        c0_ref[...] = jnp.zeros_like(c0_ref)
        h1_ref[...] = jnp.zeros_like(h1_ref)
        c1_ref[...] = jnp.zeros_like(c1_ref)

    # Hoist weight / bias reads out of the recurrence (read once per block).
    w_hh0 = w_hh0_ref[...]
    w_ih1 = w_ih1_ref[...]
    w_hh1 = w_hh1_ref[...]
    b1 = jnp.broadcast_to(b1_ref[...], (nb, gp))

    # Per-column activation constants for the packed gate tile [i | f | o | g]:
    # sigmoid cols (first 3h): 0.5*tanh(0.5*z)+0.5 (exact sigmoid, one EUP push);
    # tanh cols (g, and any padding): 1.0*tanh(z)+0.0.
    col = lax.broadcasted_iota(jnp.int32, (nb, gp), 1)
    is_sig = col < 3 * h
    act_scale = jnp.where(is_sig, 0.5, 1.0).astype(jnp.float32)
    act_off = jnp.where(is_sig, 0.5, 0.0).astype(jnp.float32)

    # Bulk (non-recurrent) layer-0 input projection + bias for the whole block:
    # one big-M matmul, off the serial critical path.
    xproj_ref[...] = (
        jnp.dot(x_ref[...], w_ih0_ref[...], preferred_element_type=jnp.float32)
        + b0_ref[...])

    def lstm_update(z, c):
        # Single tanh over the whole packed gate tile, then in-tile slices.
        a = act_scale * jnp.tanh(act_scale * z) + act_off
        i_g = a[:, 0:h]
        f_g = a[:, h:2 * h]
        o_g = a[:, 2 * h:3 * h]
        g_g = a[:, 3 * h:4 * h]
        c_new = f_g * c + i_g * g_g
        h_new = o_g * jnp.tanh(c_new)
        return h_new, c_new

    def step(t, carry):
        h0, c0, h1, c1 = carry
        r0 = pl.multiple_of(t * nb, nb)
        # Layer 0: recurrent matmul only (input part precomputed in bulk above).
        g0 = xproj_ref[pl.ds(r0, nb), :] + jnp.dot(
            h0.astype(jnp.bfloat16), w_hh0, preferred_element_type=jnp.float32)
        h0, c0 = lstm_update(g0, c0)
        # Layer 1: two small accumulated matmuls (no per-step concatenate/cast
        # of a fused [h0, h1] operand).
        g1 = (b1
              + jnp.dot(h0.astype(jnp.bfloat16), w_ih1,
                        preferred_element_type=jnp.float32)
              + jnp.dot(h1.astype(jnp.bfloat16), w_hh1,
                        preferred_element_type=jnp.float32))
        h1, c1 = lstm_update(g1, c1)
        h1_hist_ref[pl.ds(r0, nb), :] = h1.astype(jnp.bfloat16)
        return (h0, c0, h1, c1)

    carry0 = (h0_ref[...], c0_ref[...], h1_ref[...], c1_ref[...])
    unroll = block_t if block_t <= 8 else 8
    h0, c0, h1, c1 = lax.fori_loop(0, block_t, step, carry0, unroll=unroll)
    h0_ref[...] = h0
    c0_ref[...] = c0
    h1_ref[...] = h1
    c1_ref[...] = c1

    # Bulk linear head + tanh over the whole time block (lane-dense output).
    # TODO(synk): optionally emit bf16 output to halve the HBM write stream on
    # v5e if downstream tolerates it (kept f32 to match the PyTorch module).
    y = jnp.dot(h1_hist_ref[...], w_lin_ref[...],
                preferred_element_type=jnp.float32) + b_lin_ref[...]
    out_ref[...] = jnp.tanh(y).astype(out_ref.dtype)


# ----------------------------------------------------------------------------
# Weight preparation (layout plumbing only — no compute hoisted out of kernel)
# ----------------------------------------------------------------------------
def _prep_gate_weight(w, H, k_pad, Gp):
    """torch (4H, K) weight, gate rows [i,f,g,o] -> (k_pad, Gp) with packed gate
    columns reordered to [i,f,o,g]; zero padding on K rows and gate columns."""
    wi, wf, wg, wo = w[0:H], w[H:2 * H], w[2 * H:3 * H], w[3 * H:4 * H]
    wt = jnp.concatenate([wi, wf, wo, wg], axis=0).T          # (K, 4H)
    K = wt.shape[0]
    return jnp.pad(wt, ((0, k_pad - K), (0, Gp - 4 * H)))


def _prep_gate_bias(b_ih, b_hh, H, Gp):
    b = (b_ih + b_hh).astype(jnp.float32)
    bi, bf, bg, bo = b[0:H], b[H:2 * H], b[2 * H:3 * H], b[3 * H:4 * H]
    br = jnp.concatenate([bi, bf, bo, bg])
    return jnp.pad(br, (0, Gp - 4 * H))[None, :]


# ----------------------------------------------------------------------------
# Hardware queries (best-effort; safe fallbacks)
# ----------------------------------------------------------------------------
def _tpu_vmem_capacity_bytes():
    try:
        return int(pltpu.get_tpu_info().vmem_capacity_bytes)
    except Exception:
        return 64 * 1024 * 1024        # conservative (v7x-sized) fallback


def _tensorcores_per_chip():
    try:
        info = pltpu.get_tpu_info()
        for attr in ("tensorcore_count", "num_tensorcores", "num_cores",
                     "core_count"):
            v = getattr(info, attr, None)
            if isinstance(v, int) and v >= 1:
                return v
    except Exception:
        pass
    return 1


# ----------------------------------------------------------------------------
# Wrapper
# ----------------------------------------------------------------------------
def lstm_generator_forward(x, params, hidden_dim, out_dim):
    """x: (B, T, in_dim) f32 -> (B, T, out_dim) f32."""
    B, T, in_dim = x.shape
    H = hidden_dim
    Gp = _round_up(4 * H, 128)      # packed gate width (one lane tile for H=32)
    Op = _round_up(out_dim, 128)    # lane-dense output dim
    Ip = _round_up(in_dim, 128)     # lane-dense input dim
    Bp = _round_up(B, 8)            # sublane-aligned batch

    # --- batch blocking: split across TensorCores on multi-TC chips (v7x) ----
    # On 1-TC chips a batch split would just serialize the recurrence twice
    # (per-step latency is flat in M), so only split when >= 2 cores exist.
    # Batch is the MXU M dimension: batching more sequences (Bp toward 128/256)
    # is the biggest throughput lever for this latency-bound recurrence.
    n_cores = _tensorcores_per_chip()
    if n_cores >= 2 and Bp >= 16:
        Bp = _round_up(Bp, 16)
        n_b = 2
    else:
        n_b = 1
    nb = Bp // n_b

    # --- time blocking from an explicit VMEM budget ---------------------------
    vmem_cap = _tpu_vmem_capacity_bytes()
    vmem_limit = min(vmem_cap * 3 // 4, 100 * 1024 * 1024)   # ~48 MiB v7x, ~96 MiB v5e/v6e
    fixed = ((Ip * Gp + 3 * H * Gp + H * Op) * 2             # bf16 weights (single buffer)
             + (2 * Gp + Op) * 4                             # f32 biases
             + 4 * nb * max(H, 128) * 4                      # state scratch (phys tiles)
             + (1 << 20))                                    # compiler-scratch slack
    per_row = (2 * Ip * 2        # x block, double buffered, bf16
               + 2 * Op * 4      # out block, double buffered, f32
               + Gp * 4          # xproj scratch, f32
               + H * 2)          # h1 history scratch, bf16
    rows_cap = max(nb, (int(vmem_limit * 0.85) - fixed) // per_row)
    block_t_cap = max(1, rows_cap // nb)
    if T <= block_t_cap:
        block_t = T
    else:
        block_t = max(8, (block_t_cap // 8) * 8)             # unroll-friendly
    T_pad = _round_up(T, block_t)
    n_t = T_pad // block_t
    rows = block_t * nb
    # TODO(synk): the last time block runs up to block_t-1 zero-padded steps;
    # a dynamic loop bound would avoid that wasted serial work but loses the
    # static unroll.

    # --- weights: gate-reorder/pack, pad, bf16 --------------------------------
    bf16 = jnp.bfloat16
    w_ih0 = _prep_gate_weight(params["w_ih0"], H, Ip, Gp).astype(bf16)   # (Ip, Gp)
    w_hh0 = _prep_gate_weight(params["w_hh0"], H, H, Gp).astype(bf16)    # (H, Gp)
    b0 = _prep_gate_bias(params["b_ih0"], params["b_hh0"], H, Gp)        # (1, Gp)
    w_ih1 = _prep_gate_weight(params["w_ih1"], H, H, Gp).astype(bf16)    # (H, Gp)
    w_hh1 = _prep_gate_weight(params["w_hh1"], H, H, Gp).astype(bf16)    # (H, Gp)
    b1 = _prep_gate_bias(params["b_ih1"], params["b_hh1"], H, Gp)        # (1, Gp)
    w_lin = jnp.pad(params["w_lin"].T,
                    ((0, 0), (0, Op - out_dim))).astype(bf16)            # (H, Op)
    b_lin = jnp.pad(params["b_lin"], (0, Op - out_dim)).astype(jnp.float32)[None, :]

    # --- input layout: batch blocks x time-major, lane-dense in_dim -----------
    x_p = jnp.pad(x.astype(jnp.float32),
                  ((0, Bp - B), (0, T_pad - T), (0, Ip - in_dim)))        # (Bp,T_pad,Ip)
    x_blk = x_p.reshape(n_b, nb, T_pad, Ip).transpose(0, 2, 1, 3)         # (n_b,T_pad,nb,Ip)
    x_flat = x_blk.reshape(n_b * T_pad * nb, Ip).astype(bf16)

    kernel = functools.partial(lstm_gen_kernel, block_t=block_t, nb=nb, h=H, gp=Gp)

    def build_call(single_buffer_weights):
        if single_buffer_weights:
            pm = dict(pipeline_mode=pl.Buffered(buffer_count=1))
        else:
            pm = {}

        def const_spec(shape):
            # Constant-index weight/bias blocks: single-buffered to save VMEM.
            return pl.BlockSpec(shape, lambda b, t: (0, 0), **pm)

        in_specs = [
            pl.BlockSpec((rows, Ip), lambda b, t: (b * n_t + t, 0)),      # x (streamed)
            const_spec((Ip, Gp)),                                         # W_ih0^T
            const_spec((H, Gp)),                                          # W_hh0^T
            const_spec((1, Gp)),                                          # b0
            const_spec((H, Gp)),                                          # W_ih1^T
            const_spec((H, Gp)),                                          # W_hh1^T
            const_spec((1, Gp)),                                          # b1
            const_spec((H, Op)),                                          # W_lin
            const_spec((1, Op)),                                          # b_lin
        ]
        out_spec = pl.BlockSpec((rows, Op), lambda b, t: (b * n_t + t, 0))
        return pl.pallas_call(
            kernel,
            out_shape=jax.ShapeDtypeStruct((n_b * T_pad * nb, Op), jnp.float32),
            grid_spec=pltpu.PrefetchScalarGridSpec(
                num_scalar_prefetch=0,
                grid=(n_b, n_t),
                in_specs=in_specs,
                out_specs=out_spec,
                scratch_shapes=[
                    pltpu.VMEM((nb, H), jnp.float32),        # h layer 0
                    pltpu.VMEM((nb, H), jnp.float32),        # c layer 0
                    pltpu.VMEM((nb, H), jnp.float32),        # h layer 1
                    pltpu.VMEM((nb, H), jnp.float32),        # c layer 1
                    pltpu.VMEM((rows, Gp), jnp.float32),     # bulk x-projection
                    pltpu.VMEM((rows, H), jnp.bfloat16),     # per-step h1 history
                ],
            ),
            compiler_params=pltpu.CompilerParams(
                dimension_semantics=("parallel", "arbitrary"),
                vmem_limit_bytes=int(vmem_limit),
            ),
        )

    args = (x_flat, w_ih0, w_hh0, b0, w_ih1, w_hh1, b1, w_lin, b_lin)
    try:
        out_flat = build_call(True)(*args)
    except Exception:
        # Fallback if this Pallas build rejects buffer_count=1 pipeline mode.
        out_flat = build_call(False)(*args)

    out = out_flat.reshape(n_b, T_pad, nb, Op).transpose(0, 2, 1, 3)
    out = out.reshape(Bp, T_pad, Op)[:B, :T, :out_dim]
    return out                                                            # (B, T, out)


# ----------------------------------------------------------------------------
# Params + pure-JAX reference (PyTorch semantics, f32)
# ----------------------------------------------------------------------------
def init_params(key, in_dim, hidden_dim, out_dim, n_layers=2):
    """Deterministic init mirroring PyTorch default U(-1/sqrt(H), 1/sqrt(H))."""
    assert n_layers == 2, "kernel wrapper is specialized for n_layers=2"
    k = 1.0 / math.sqrt(hidden_dim)
    keys = jax.random.split(key, 12)
    u = lambda kk, shape, bound: jax.random.uniform(
        kk, shape, jnp.float32, minval=-bound, maxval=bound)
    return {
        "w_ih0": u(keys[0], (4 * hidden_dim, in_dim), k),
        "w_hh0": u(keys[1], (4 * hidden_dim, hidden_dim), k),
        "b_ih0": u(keys[2], (4 * hidden_dim,), k),
        "b_hh0": u(keys[3], (4 * hidden_dim,), k),
        "w_ih1": u(keys[4], (4 * hidden_dim, hidden_dim), k),
        "w_hh1": u(keys[5], (4 * hidden_dim, hidden_dim), k),
        "b_ih1": u(keys[6], (4 * hidden_dim,), k),
        "b_hh1": u(keys[7], (4 * hidden_dim,), k),
        "w_lin": u(keys[8], (out_dim, hidden_dim), k),
        "b_lin": u(keys[9], (out_dim,), k),
    }


def lstm_generator_reference(x, params, hidden_dim, out_dim):
    B, T, in_dim = x.shape
    H = hidden_dim

    def cell(x_t, h, c, w_ih, w_hh, b_ih, b_hh):
        gates = x_t @ w_ih.T + b_ih + h @ w_hh.T + b_hh
        i = jax.nn.sigmoid(gates[:, 0:H])
        f = jax.nn.sigmoid(gates[:, H:2 * H])
        g = jnp.tanh(gates[:, 2 * H:3 * H])
        o = jax.nn.sigmoid(gates[:, 3 * H:4 * H])
        c_new = f * c + i * g
        return o * jnp.tanh(c_new), c_new

    def step(carry, x_t):
        h0, c0, h1, c1 = carry
        h0, c0 = cell(x_t, h0, c0, params["w_ih0"], params["w_hh0"],
                      params["b_ih0"], params["b_hh0"])
        h1, c1 = cell(h0, h1, c1, params["w_ih1"], params["w_hh1"],
                      params["b_ih1"], params["b_hh1"])
        y = jnp.tanh(h1 @ params["w_lin"].T + params["b_lin"])
        return (h0, c0, h1, c1), y

    zeros = jnp.zeros((B, H), jnp.float32)
    _, ys = lax.scan(step, (zeros, zeros, zeros, zeros),
                     jnp.transpose(x, (1, 0, 2)).astype(jnp.float32))
    return jnp.transpose(ys, (1, 0, 2))


if __name__ == "__main__":
    # noise (B, T, in_dim) -> (B, T, out_dim)
    B, T = 2, 8
    in_dim, hidden_dim, out_dim, n_layers = 4, 32, 4, 2

    key = jax.random.PRNGKey(0)
    k_param, k_x = jax.random.split(key)
    params = init_params(k_param, in_dim, hidden_dim, out_dim, n_layers)
    x = jax.random.normal(k_x, (B, T, in_dim), jnp.float32)

    out = jax.block_until_ready(lstm_generator_forward(x, params, hidden_dim, out_dim))
    ref = jax.block_until_ready(lstm_generator_reference(x, params, hidden_dim, out_dim))

    assert out.shape == (B, T, out_dim)
    # bf16 matmul operands (f32 accumulate) -> relaxed tolerance vs the f32 reference.
    np.testing.assert_allclose(np.asarray(out), np.asarray(ref), atol=3e-2, rtol=3e-2)
    print("KERNEL_OK")
</pallas_src>

<mosaic_0001>
module attributes {stable_mosaic.version = 11 : i64} {
  func.func @lstm_gen_kernel(%arg0: i32, %arg1: i32, %arg2: memref<64x128xbf16, #tpu.memory_space<vmem>>, %arg3: memref<128x128xbf16, #tpu.memory_space<vmem>>, %arg4: memref<32x128xbf16, #tpu.memory_space<vmem>>, %arg5: memref<1x128xf32, #tpu.memory_space<vmem>>, %arg6: memref<32x128xbf16, #tpu.memory_space<vmem>>, %arg7: memref<32x128xbf16, #tpu.memory_space<vmem>>, %arg8: memref<1x128xf32, #tpu.memory_space<vmem>>, %arg9: memref<32x128xbf16, #tpu.memory_space<vmem>>, %arg10: memref<1x128xf32, #tpu.memory_space<vmem>>, %arg11: memref<64x128xf32, #tpu.memory_space<vmem>>, %arg12: memref<8x32xf32, #tpu.memory_space<vmem>>, %arg13: memref<8x32xf32, #tpu.memory_space<vmem>>, %arg14: memref<8x32xf32, #tpu.memory_space<vmem>>, %arg15: memref<8x32xf32, #tpu.memory_space<vmem>>, %arg16: memref<64x128xf32, #tpu.memory_space<vmem>>, %arg17: memref<64x32xbf16, #tpu.memory_space<vmem>>) attributes {dimension_semantics = [#tpu.dimension_semantics<parallel>, #tpu.dimension_semantics<arbitrary>], iteration_bounds = array<i64: 1, 1>, scalar_prefetch = 0 : i64, scratch_operands = 6 : i64, tpu.core_type = #tpu.core_type<tc>, window_params = [{transform_indices = @transform_0, window_bounds = array<i64: 64, 128>}, {pipeline_mode = #tpu.pipeline_mode<synchronous>, transform_indices = @transform_1, window_bounds = array<i64: 128, 128>}, {pipeline_mode = #tpu.pipeline_mode<synchronous>, transform_indices = @transform_2, window_bounds = array<i64: 32, 128>}, {pipeline_mode = #tpu.pipeline_mode<synchronous>, transform_indices = @transform_3, window_bounds = array<i64: 1, 128>}, {pipeline_mode = #tpu.pipeline_mode<synchronous>, transform_indices = @transform_4, window_bounds = array<i64: 32, 128>}, {pipeline_mode = #tpu.pipeline_mode<synchronous>, transform_indices = @transform_5, window_bounds = array<i64: 32, 128>}, {pipeline_mode = #tpu.pipeline_mode<synchronous>, transform_indices = @transform_6, window_bounds = array<i64: 1, 128>}, {pipeline_mode = #tpu.pipeline_mode<synchronous>, transform_indices = @transform_7, window_bounds = array<i64: 32, 128>}, {pipeline_mode = #tpu.pipeline_mode<synchronous>, transform_indices = @transform_8, window_bounds = array<i64: 1, 128>}, {transform_indices = @transform_9, window_bounds = array<i64: 64, 128>}]} {
    %c0_i32 = arith.constant 0 : i32
    %0 = arith.cmpi eq, %arg1, %c0_i32 : i32
    %1 = arith.extui %0 : i1 to i32
    %c0_i32_0 = arith.constant 0 : i32
    %2 = arith.cmpi ne, %1, %c0_i32_0 : i32
    scf.if %2 {
      %cst_94 = arith.constant 0.000000e+00 : f32
      %377 = vector.broadcast %cst_94 : f32 to vector<8x32xf32>
      %c0_95 = arith.constant 0 : index
      %c0_96 = arith.constant 0 : index
      %378 = vector.load %arg12[%c0_95, %c0_96] : memref<8x32xf32, #tpu.memory_space<vmem>>, vector<8x32xf32>
      tpu.vector_store %arg12[%c0_95, %c0_96], %377 {strides = array<i32>} : memref<8x32xf32, #tpu.memory_space<vmem>>, vector<8x32xf32>,
      %cst_97 = arith.constant 0.000000e+00 : f32
      %379 = vector.broadcast %cst_97 : f32 to vector<8x32xf32>
      %c0_98 = arith.constant 0 : index
      %c0_99 = arith.constant 0 : index
      %380 = vector.load %arg13[%c0_98, %c0_99] : memref<8x32xf32, #tpu.memory_space<vmem>>, vector<8x32xf32>
      tpu.vector_store %arg13[%c0_98, %c0_99], %379 {strides = array<i32>} : memref<8x32xf32, #tpu.memory_space<vmem>>, vector<8x32xf32>,
      %cst_100 = arith.constant 0.000000e+00 : f32
      %381 = vector.broadcast %cst_100 : f32 to vector<8x32xf32>
      %c0_101 = arith.constant 0 : index
      %c0_102 = arith.constant 0 : index
      %382 = vector.load %arg14[%c0_101, %c0_102] : memref<8x32xf32, #tpu.memory_space<vmem>>, vector<8x32xf32>
      tpu.vector_store %arg14[%c0_101, %c0_102], %381 {strides = array<i32>} : memref<8x32xf32, #tpu.memory_space<vmem>>, vector<8x32xf32>,
      %cst_103 = arith.constant 0.000000e+00 : f32
      %383 = vector.broadcast %cst_103 : f32 to vector<8x32xf32>
      %c0_104 = arith.constant 0 : index
      %c0_105 = arith.constant 0 : index
      %384 = vector.load %arg15[%c0_104, %c0_105] : memref<8x32xf32, #tpu.memory_space<vmem>>, vector<8x32xf32>
      tpu.vector_store %arg15[%c0_104, %c0_105], %383 {strides = array<i32>} : memref<8x32xf32, #tpu.memory_space<vmem>>, vector<8x32xf32>,
    } else {
    }
    %c0 = arith.constant 0 : index
    %c0_1 = arith.constant 0 : index
    %3 = vector.load %arg4[%c0, %c0_1] : memref<32x128xbf16, #tpu.memory_space<vmem>>, vector<32x128xbf16>
    %c0_2 = arith.constant 0 : index
    %c0_3 = arith.constant 0 : index
    %4 = vector.load %arg6[%c0_2, %c0_3] : memref<32x128xbf16, #tpu.memory_space<vmem>>, vector<32x128xbf16>
    %c0_4 = arith.constant 0 : index
    %c0_5 = arith.constant 0 : index
    %5 = vector.load %arg7[%c0_4, %c0_5] : memref<32x128xbf16, #tpu.memory_space<vmem>>, vector<32x128xbf16>
    %c0_6 = arith.constant 0 : index
    %c0_7 = arith.constant 0 : index
    %6 = vector.load %arg8[%c0_6, %c0_7] : memref<1x128xf32, #tpu.memory_space<vmem>>, vector<1x128xf32>
    %7 = vector.shape_cast %6 : vector<1x128xf32> to vector<1x128xf32>
    %8 = vector.broadcast %7 : vector<1x128xf32> to vector<8x128xf32>
    %9 = tpu.iota {dimensions = array<i32: 1>} : vector<8x128xi32>
    %c96_i32 = arith.constant 96 : i32
    %10 = vector.broadcast %c96_i32 : i32 to vector<8x128xi32>
    %11 = arith.cmpi slt, %9, %10 : vector<8x128xi32>
    %cst = arith.constant 5.000000e-01 : f32
    %cst_8 = arith.constant 1.000000e+00 : f32
    %12 = vector.broadcast %cst : f32 to vector<8x128xf32>
    %13 = vector.broadcast %cst_8 : f32 to vector<8x128xf32>
    %14 = arith.select %11, %12, %13 : vector<8x128xi1>, vector<8x128xf32>
    %cst_9 = arith.constant 5.000000e-01 : f32
    %cst_10 = arith.constant 0.000000e+00 : f32
    %15 = vector.broadcast %cst_9 : f32 to vector<8x128xf32>
    %16 = vector.broadcast %cst_10 : f32 to vector<8x128xf32>
    %17 = arith.select %11, %15, %16 : vector<8x128xi1>, vector<8x128xf32>
    %c0_11 = arith.constant 0 : index
    %c0_12 = arith.constant 0 : index
    %18 = vector.load %arg2[%c0_11, %c0_12] : memref<64x128xbf16, #tpu.memory_space<vmem>>, vector<64x128xbf16>
    %c0_13 = arith.constant 0 : index
    %c0_14 = arith.constant 0 : index
    %19 = vector.load %arg3[%c0_13, %c0_14] : memref<128x128xbf16, #tpu.memory_space<vmem>>, vector<128x128xbf16>
    %cst_15 = arith.constant dense<0.000000e+00> : vector<64x128xf32>
    %20 = tpu.matmul %18, %19, %cst_15 {dimension_numbers = #tpu.dot_dimension_numbers<[1], [0], [0], [1], [0, 0, 1, 1], [], []>} : vector<64x128xbf16>, vector<128x128xbf16>, vector<64x128xf32> -> vector<64x128xf32>
    %c0_16 = arith.constant 0 : index
    %c0_17 = arith.constant 0 : index
    %21 = vector.load %arg5[%c0_16, %c0_17] : memref<1x128xf32, #tpu.memory_space<vmem>>, vector<1x128xf32>
    %22 = vector.broadcast %21 : vector<1x128xf32> to vector<64x128xf32>
    %23 = arith.addf %20, %22 : vector<64x128xf32>
    %c0_18 = arith.constant 0 : index
    %c0_19 = arith.constant 0 : index
    %24 = vector.load %arg16[%c0_18, %c0_19] : memref<64x128xf32, #tpu.memory_space<vmem>>, vector<64x128xf32>
    tpu.vector_store %arg16[%c0_18, %c0_19], %23 {strides = array<i32>} : memref<64x128xf32, #tpu.memory_space<vmem>>, vector<64x128xf32>,
    %c0_20 = arith.constant 0 : index
    %c0_21 = arith.constant 0 : index
    %25 = vector.load %arg12[%c0_20, %c0_21] : memref<8x32xf32, #tpu.memory_space<vmem>>, vector<8x32xf32>
    %c0_22 = arith.constant 0 : index
    %c0_23 = arith.constant 0 : index
    %26 = vector.load %arg13[%c0_22, %c0_23] : memref<8x32xf32, #tpu.memory_space<vmem>>, vector<8x32xf32>
    %c0_24 = arith.constant 0 : index
    %c0_25 = arith.constant 0 : index
    %27 = vector.load %arg14[%c0_24, %c0_25] : memref<8x32xf32, #tpu.memory_space<vmem>>, vector<8x32xf32>
    %c0_26 = arith.constant 0 : index
    %c0_27 = arith.constant 0 : index
    %28 = vector.load %arg15[%c0_26, %c0_27] : memref<8x32xf32, #tpu.memory_space<vmem>>, vector<8x32xf32>
    %c0_i32_28 = arith.constant 0 : i32
    %c8_i32 = arith.constant 8 : i32
    %29 = arith.muli %c0_i32_28, %c8_i32 : i32
    %30 = tpu.assume_multiple %29, 8 : i32
    %31 = arith.index_cast %30 : i32 to index
    %c0_29 = arith.constant 0 : index
    %32 = vector.load %arg16[%31, %c0_29] : memref<64x128xf32, #tpu.memory_space<vmem>>, vector<8x128xf32>
    %33 = arith.truncf %25 : vector<8x32xf32> to vector<8x32xbf16>
    %cst_30 = arith.constant dense<0.000000e+00> : vector<8x128xf32>
    %34 = tpu.matmul %33, %3, %cst_30 {dimension_numbers = #tpu.dot_dimension_numbers<[1], [0], [0], [1], [0, 0, 1, 1], [], []>} : vector<8x32xbf16>, vector<32x128xbf16>, vector<8x128xf32> -> vector<8x128xf32>
    %35 = arith.addf %32, %34 : vector<8x128xf32>
    %36 = arith.mulf %14, %35 : vector<8x128xf32>
    %37 = math.tanh %36 : vector<8x128xf32>
    %38 = arith.mulf %14, %37 : vector<8x128xf32>
    %39 = arith.addf %38, %17 : vector<8x128xf32>
    %40 = vector.extract_strided_slice %39 {offsets = [0, 0], sizes = [8, 32], strides = [1, 1]} : vector<8x128xf32> to vector<8x32xf32>
    %41 = vector.extract_strided_slice %39 {offsets = [0, 32], sizes = [8, 32], strides = [1, 1]} : vector<8x128xf32> to vector<8x32xf32>
    %42 = vector.extract_strided_slice %39 {offsets = [0, 64], sizes = [8, 32], strides = [1, 1]} : vector<8x128xf32> to vector<8x32xf32>
    %43 = vector.extract_strided_slice %39 {offsets = [0, 96], sizes = [8, 32], strides = [1, 1]} : vector<8x128xf32> to vector<8x32xf32>
    %44 = arith.mulf %41, %26 : vector<8x32xf32>
    %45 = arith.mulf %40, %43 : vector<8x32xf32>
    %46 = arith.addf %44, %45 : vector<8x32xf32>
    %47 = math.tanh %46 : vector<8x32xf32>
    %48 = arith.mulf %42, %47 : vector<8x32xf32>
    %49 = arith.truncf %48 : vector<8x32xf32> to vector<8x32xbf16>
    %cst_31 = arith.constant dense<0.000000e+00> : vector<8x128xf32>
    %50 = tpu.matmul %49, %4, %cst_31 {dimension_numbers = #tpu.dot_dimension_numbers<[1], [0], [0], [1], [0, 0, 1, 1], [], []>} : vector<8x32xbf16>, vector<32x128xbf16>, vector<8x128xf32> -> vector<8x128xf32>
    %51 = arith.addf %8, %50 : vector<8x128xf32>
    %52 = arith.truncf %27 : vector<8x32xf32> to vector<8x32xbf16>
    %cst_32 = arith.constant dense<0.000000e+00> : vector<8x128xf32>
    %53 = tpu.matmul %52, %5, %cst_32 {dimension_numbers = #tpu.dot_dimension_numbers<[1], [0], [0], [1], [0, 0, 1, 1], [], []>} : vector<8x32xbf16>, vector<32x128xbf16>, vector<8x128xf32> -> vector<8x128xf32>
    %54 = arith.addf %51, %53 : vector<8x128xf32>
    %55 = arith.mulf %14, %54 : vector<8x128xf32>
    %56 = math.tanh %55 : vector<8x128xf32>
    %57 = arith.mulf %14, %56 : vector<8x128xf32>
    %58 = arith.addf %57, %17 : vector<8x128xf32>
    %59 = vector.extract_strided_slice %58 {offsets = [0, 0], sizes = [8, 32], strides = [1, 1]} : vector<8x128xf32> to vector<8x32xf32>
    %60 = vector.extract_strided_slice %58 {offsets = [0, 32], sizes = [8, 32], strides = [1, 1]} : vector<8x128xf32> to vector<8x32xf32>
    %61 = vector.extract_strided_slice %58 {offsets = [0, 64], sizes = [8, 32], strides = [1, 1]} : vector<8x128xf32> to vector<8x32xf32>
    %62 = vector.extract_strided_slice %58 {offsets = [0, 96], sizes = [8, 32], strides = [1, 1]} : vector<8x128xf32> to vector<8x32xf32>
    %63 = arith.mulf %60, %28 : vector<8x32xf32>
    %64 = arith.mulf %59, %62 : vector<8x32xf32>
    %65 = arith.addf %63, %64 : vector<8x32xf32>
    %66 = math.tanh %65 : vector<8x32xf32>
    %67 = arith.mulf %61, %66 : vector<8x32xf32>
    %68 = arith.truncf %67 : vector<8x32xf32> to vector<8x32xbf16>
    %69 = arith.index_cast %30 : i32 to index
    %c0_33 = arith.constant 0 : index
    %70 = vector.load %arg17[%69, %c0_33] : memref<64x32xbf16, #tpu.memory_space<vmem>>, vector<8x32xbf16>
    tpu.vector_store %arg17[%69, %c0_33], %68 {strides = array<i32>} : memref<64x32xbf16, #tpu.memory_space<vmem>>, vector<8x32xbf16>,
    %c1_i32 = arith.constant 1 : i32
    %c8_i32_34 = arith.constant 8 : i32
    %71 = arith.muli %c1_i32, %c8_i32_34 : i32
    %72 = tpu.assume_multiple %71, 8 : i32
    %73 = arith.index_cast %72 : i32 to index
    %c0_35 = arith.constant 0 : index
    %74 = vector.load %arg16[%73, %c0_35] : memref<64x128xf32, #tpu.memory_space<vmem>>, vector<8x128xf32>
    %75 = arith.truncf %48 : vector<8x32xf32> to vector<8x32xbf16>
    %cst_36 = arith.constant dense<0.000000e+00> : vector<8x128xf32>
    %76 = tpu.matmul %75, %3, %cst_36 {dimension_numbers = #tpu.dot_dimension_numbers<[1], [0], [0], [1], [0, 0, 1, 1], [], []>} : vector<8x32xbf16>, vector<32x128xbf16>, vector<8x128xf32> -> vector<8x128xf32>
    %77 = arith.addf %74, %76 : vector<8x128xf32>
    %78 = arith.mulf %14, %77 : vector<8x128xf32>
    %79 = math.tanh %78 : vector<8x128xf32>
    %80 = arith.mulf %14, %79 : vector<8x128xf32>
    %81 = arith.addf %80, %17 : vector<8x128xf32>
    %82 = vector.extract_strided_slice %81 {offsets = [0, 0], sizes = [8, 32], strides = [1, 1]} : vector<8x128xf32> to vector<8x32xf32>
    %83 = vector.extract_strided_slice %81 {offsets = [0, 32], sizes = [8, 32], strides = [1, 1]} : vector<8x128xf32> to vector<8x32xf32>
    %84 = vector.extract_strided_slice %81 {offsets = [0, 64], sizes = [8, 32], strides = [1, 1]} : vector<8x128xf32> to vector<8x32xf32>
    %85 = vector.extract_strided_slice %81 {offsets = [0, 96], sizes = [8, 32], strides = [1, 1]} : vector<8x128xf32> to vector<8x32xf32>
    %86 = arith.mulf %83, %46 : vector<8x32xf32>
    %87 = arith.mulf %82, %85 : vector<8x32xf32>
    %88 = arith.addf %86, %87 : vector<8x32xf32>
    %89 = math.tanh %88 : vector<8x32xf32>
    %90 = arith.mulf %84, %89 : vector<8x32xf32>
    %91 = arith.truncf %90 : vector<8x32xf32> to vector<8x32xbf16>
    %cst_37 = arith.constant dense<0.000000e+00> : vector<8x128xf32>
    %92 = tpu.matmul %91, %4, %cst_37 {dimension_numbers = #tpu.dot_dimension_numbers<[1], [0], [0], [1], [0, 0, 1, 1], [], []>} : vector<8x32xbf16>, vector<32x128xbf16>, vector<8x128xf32> -> vector<8x128xf32>
    %93 = arith.addf %8, %92 : vector<8x128xf32>
    %94 = arith.truncf %67 : vector<8x32xf32> to vector<8x32xbf16>
    %cst_38 = arith.constant dense<0.000000e+00> : vector<8x128xf32>
    %95 = tpu.matmul %94, %5, %cst_38 {dimension_numbers = #tpu.dot_dimension_numbers<[1], [0], [0], [1], [0, 0, 1, 1], [], []>} : vector<8x32xbf16>, vector<32x128xbf16>, vector<8x128xf32> -> vector<8x128xf32>
    %96 = arith.addf %93, %95 : vector<8x128xf32>
    %97 = arith.mulf %14, %96 : vector<8x128xf32>
    %98 = math.tanh %97 : vector<8x128xf32>
    %99 = arith.mulf %14, %98 : vector<8x128xf32>
    %100 = arith.addf %99, %17 : vector<8x128xf32>
    %101 = vector.extract_strided_slice %100 {offsets = [0, 0], sizes = [8, 32], strides = [1, 1]} : vector<8x128xf32> to vector<8x32xf32>
    %102 = vector.extract_strided_slice %100 {offsets = [0, 32], sizes = [8, 32], strides = [1, 1]} : vector<8x128xf32> to vector<8x32xf32>
    %103 = vector.extract_strided_slice %100 {offsets = [0, 64], sizes = [8, 32], strides = [1, 1]} : vector<8x128xf32> to vector<8x32xf32>
    %104 = vector.extract_strided_slice %100 {offsets = [0, 96], sizes = [8, 32], strides = [1, 1]} : vector<8x128xf32> to vector<8x32xf32>
    %105 = arith.mulf %102, %65 : vector<8x32xf32>
    %106 = arith.mulf %101, %104 : vector<8x32xf32>
    %107 = arith.addf %105, %106 : vector<8x32xf32>
    %108 = math.tanh %107 : vector<8x32xf32>
    %109 = arith.mulf %103, %108 : vector<8x32xf32>
    %110 = arith.truncf %109 : vector<8x32xf32> to vector<8x32xbf16>
    %111 = arith.index_cast %72 : i32 to index
    %c0_39 = arith.constant 0 : index
    %112 = vector.load %arg17[%111, %c0_39] : memref<64x32xbf16, #tpu.memory_space<vmem>>, vector<8x32xbf16>
    tpu.vector_store %arg17[%111, %c0_39], %110 {strides = array<i32>} : memref<64x32xbf16, #tpu.memory_space<vmem>>, vector<8x32xbf16>,
    %c2_i32 = arith.constant 2 : i32
    %c8_i32_40 = arith.constant 8 : i32
    %113 = arith.muli %c2_i32, %c8_i32_40 : i32
    %114 = tpu.assume_multiple %113, 8 : i32
    %115 = arith.index_cast %114 : i32 to index
    %c0_41 = arith.constant 0 : index
    %116 = vector.load %arg16[%115, %c0_41] : memref<64x128xf32, #tpu.memory_space<vmem>>, vector<8x128xf32>
    %117 = arith.truncf %90 : vector<8x32xf32> to vector<8x32xbf16>
    %cst_42 = arith.constant dense<0.000000e+00> : vector<8x128xf32>
    %118 = tpu.matmul %117, %3, %cst_42 {dimension_numbers = #tpu.dot_dimension_numbers<[1], [0], [0], [1], [0, 0, 1, 1], [], []>} : vector<8x32xbf16>, vector<32x128xbf16>, vector<8x128xf32> -> vector<8x128xf32>
    %119 = arith.addf %116, %118 : vector<8x128xf32>
    %120 = arith.mulf %14, %119 : vector<8x128xf32>
    %121 = math.tanh %120 : vector<8x128xf32>
    %122 = arith.mulf %14, %121 : vector<8x128xf32>
    %123 = arith.addf %122, %17 : vector<8x128xf32>
    %124 = vector.extract_strided_slice %123 {offsets = [0, 0], sizes = [8, 32], strides = [1, 1]} : vector<8x128xf32> to vector<8x32xf32>
    %125 = vector.extract_strided_slice %123 {offsets = [0, 32], sizes = [8, 32], strides = [1, 1]} : vector<8x128xf32> to vector<8x32xf32>
    %126 = vector.extract_strided_slice %123 {offsets = [0, 64], sizes = [8, 32], strides = [1, 1]} : vector<8x128xf32> to vector<8x32xf32>
    %127 = vector.extract_strided_slice %123 {offsets = [0, 96], sizes = [8, 32], strides = [1, 1]} : vector<8x128xf32> to vector<8x32xf32>
    %128 = arith.mulf %125, %88 : vector<8x32xf32>
    %129 = arith.mulf %124, %127 : vector<8x32xf32>
    %130 = arith.addf %128, %129 : vector<8x32xf32>
    %131 = math.tanh %130 : vector<8x32xf32>
    %132 = arith.mulf %126, %131 : vector<8x32xf32>
    %133 = arith.truncf %132 : vector<8x32xf32> to vector<8x32xbf16>
    %cst_43 = arith.constant dense<0.000000e+00> : vector<8x128xf32>
    %134 = tpu.matmul %133, %4, %cst_43 {dimension_numbers = #tpu.dot_dimension_numbers<[1], [0], [0], [1], [0, 0, 1, 1], [], []>} : vector<8x32xbf16>, vector<32x128xbf16>, vector<8x128xf32> -> vector<8x128xf32>
    %135 = arith.addf %8, %134 : vector<8x128xf32>
    %136 = arith.truncf %109 : vector<8x32xf32> to vector<8x32xbf16>
    %cst_44 = arith.constant dense<0.000000e+00> : vector<8x128xf32>
    %137 = tpu.matmul %136, %5, %cst_44 {dimension_numbers = #tpu.dot_dimension_numbers<[1], [0], [0], [1], [0, 0, 1, 1], [], []>} : vector<8x32xbf16>, vector<32x128xbf16>, vector<8x128xf32> -> vector<8x128xf32>
    %138 = arith.addf %135, %137 : vector<8x128xf32>
    %139 = arith.mulf %14, %138 : vector<8x128xf32>
    %140 = math.tanh %139 : vector<8x128xf32>
    %141 = arith.mulf %14, %140 : vector<8x128xf32>
    %142 = arith.addf %141, %17 : vector<8x128xf32>
    %143 = vector.extract_strided_slice %142 {offsets = [0, 0], sizes = [8, 32], strides = [1, 1]} : vector<8x128xf32> to vector<8x32xf32>
    %144 = vector.extract_strided_slice %142 {offsets = [0, 32], sizes = [8, 32], strides = [1, 1]} : vector<8x128xf32> to vector<8x32xf32>
    %145 = vector.extract_strided_slice %142 {offsets = [0, 64], sizes = [8, 32], strides = [1, 1]} : vector<8x128xf32> to vector<8x32xf32>
    %146 = vector.extract_strided_slice %142 {offsets = [0, 96], sizes = [8, 32], strides = [1, 1]} : vector<8x128xf32> to vector<8x32xf32>
    %147 = arith.mulf %144, %107 : vector<8x32xf32>
    %148 = arith.mulf %143, %146 : vector<8x32xf32>
    %149 = arith.addf %147, %148 : vector<8x32xf32>
    %150 = math.tanh %149 : vector<8x32xf32>
    %151 = arith.mulf %145, %150 : vector<8x32xf32>
    %152 = arith.truncf %151 : vector<8x32xf32> to vector<8x32xbf16>
    %153 = arith.index_cast %114 : i32 to index
    %c0_45 = arith.constant 0 : index
    %154 = vector.load %arg17[%153, %c0_45] : memref<64x32xbf16, #tpu.memory_space<vmem>>, vector<8x32xbf16>
    tpu.vector_store %arg17[%153, %c0_45], %152 {strides = array<i32>} : memref<64x32xbf16, #tpu.memory_space<vmem>>, vector<8x32xbf16>,
    %c3_i32 = arith.constant 3 : i32
    %c8_i32_46 = arith.constant 8 : i32
    %155 = arith.muli %c3_i32, %c8_i32_46 : i32
    %156 = tpu.assume_multiple %155, 8 : i32
    %157 = arith.index_cast %156 : i32 to index
    %c0_47 = arith.constant 0 : index
    %158 = vector.load %arg16[%157, %c0_47] : memref<64x128xf32, #tpu.memory_space<vmem>>, vector<8x128xf32>
    %159 = arith.truncf %132 : vector<8x32xf32> to vector<8x32xbf16>
    %cst_48 = arith.constant dense<0.000000e+00> : vector<8x128xf32>
    %160 = tpu.matmul %159, %3, %cst_48 {dimension_numbers = #tpu.dot_dimension_numbers<[1], [0], [0], [1], [0, 0, 1, 1], [], []>} : vector<8x32xbf16>, vector<32x128xbf16>, vector<8x128xf32> -> vector<8x128xf32>
    %161 = arith.addf %158, %160 : vector<8x128xf32>
    %162 = arith.mulf %14, %161 : vector<8x128xf32>
    %163 = math.tanh %162 : vector<8x128xf32>
    %164 = arith.mulf %14, %163 : vector<8x128xf32>
    %165 = arith.addf %164, %17 : vector<8x128xf32>
    %166 = vector.extract_strided_slice %165 {offsets = [0, 0], sizes = [8, 32], strides = [1, 1]} : vector<8x128xf32> to vector<8x32xf32>
    %167 = vector.extract_strided_slice %165 {offsets = [0, 32], sizes = [8, 32], strides = [1, 1]} : vector<8x128xf32> to vector<8x32xf32>
    %168 = vector.extract_strided_slice %165 {offsets = [0, 64], sizes = [8, 32], strides = [1, 1]} : vector<8x128xf32> to vector<8x32xf32>
    %169 = vector.extract_strided_slice %165 {offsets = [0, 96], sizes = [8, 32], strides = [1, 1]} : vector<8x128xf32> to vector<8x32xf32>
    %170 = arith.mulf %167, %130 : vector<8x32xf32>
    %171 = arith.mulf %166, %169 : vector<8x32xf32>
    %172 = arith.addf %170, %171 : vector<8x32xf32>
    %173 = math.tanh %172 : vector<8x32xf32>
    %174 = arith.mulf %168, %173 : vector<8x32xf32>
    %175 = arith.truncf %174 : vector<8x32xf32> to vector<8x32xbf16>
    %cst_49 = arith.constant dense<0.000000e+00> : vector<8x128xf32>
    %176 = tpu.matmul %175, %4, %cst_49 {dimension_numbers = #tpu.dot_dimension_numbers<[1], [0], [0], [1], [0, 0, 1, 1], [], []>} : vector<8x32xbf16>, vector<32x128xbf16>, vector<8x128xf32> -> vector<8x128xf32>
    %177 = arith.addf %8, %176 : vector<8x128xf32>
    %178 = arith.truncf %151 : vector<8x32xf32> to vector<8x32xbf16>
    %cst_50 = arith.constant dense<0.000000e+00> : vector<8x128xf32>
    %179 = tpu.matmul %178, %5, %cst_50 {dimension_numbers = #tpu.dot_dimension_numbers<[1], [0], [0], [1], [0, 0, 1, 1], [], []>} : vector<8x32xbf16>, vector<32x128xbf16>, vector<8x128xf32> -> vector<8x128xf32>
    %180 = arith.addf %177, %179 : vector<8x128xf32>
    %181 = arith.mulf %14, %180 : vector<8x128xf32>
    %182 = math.tanh %181 : vector<8x128xf32>
    %183 = arith.mulf %14, %182 : vector<8x128xf32>
    %184 = arith.addf %183, %17 : vector<8x128xf32>
    %185 = vector.extract_strided_slice %184 {offsets = [0, 0], sizes = [8, 32], strides = [1, 1]} : vector<8x128xf32> to vector<8x32xf32>
    %186 = vector.extract_strided_slice %184 {offsets = [0, 32], sizes = [8, 32], strides = [1, 1]} : vector<8x128xf32> to vector<8x32xf32>
    %187 = vector.extract_strided_slice %184 {offsets = [0, 64], sizes = [8, 32], strides = [1, 1]} : vector<8x128xf32> to vector<8x32xf32>
    %188 = vector.extract_strided_slice %184 {offsets = [0, 96], sizes = [8, 32], strides = [1, 1]} : vector<8x128xf32> to vector<8x32xf32>
    %189 = arith.mulf %186, %149 : vector<8x32xf32>
    %190 = arith.mulf %185, %188 : vector<8x32xf32>
    %191 = arith.addf %189, %190 : vector<8x32xf32>
    %192 = math.tanh %191 : vector<8x32xf32>
    %193 = arith.mulf %187, %192 : vector<8x32xf32>
    %194 = arith.truncf %193 : vector<8x32xf32> to vector<8x32xbf16>
    %195 = arith.index_cast %156 : i32 to index
    %c0_51 = arith.constant 0 : index
    %196 = vector.load %arg17[%195, %c0_51] : memref<64x32xbf16, #tpu.memory_space<vmem>>, vector<8x32xbf16>
    tpu.vector_store %arg17[%195, %c0_51], %194 {strides = array<i32>} : memref<64x32xbf16, #tpu.memory_space<vmem>>, vector<8x32xbf16>,
    %c4_i32 = arith.constant 4 : i32
    %c8_i32_52 = arith.constant 8 : i32
    %197 = arith.muli %c4_i32, %c8_i32_52 : i32
    %198 = tpu.assume_multiple %197, 8 : i32
    %199 = arith.index_cast %198 : i32 to index
    %c0_53 = arith.constant 0 : index
    %200 = vector.load %arg16[%199, %c0_53] : memref<64x128xf32, #tpu.memory_space<vmem>>, vector<8x128xf32>
    %201 = arith.truncf %174 : vector<8x32xf32> to vector<8x32xbf16>
    %cst_54 = arith.constant dense<0.000000e+00> : vector<8x128xf32>
    %202 = tpu.matmul %201, %3, %cst_54 {dimension_numbers = #tpu.dot_dimension_numbers<[1], [0], [0], [1], [0, 0, 1, 1], [], []>} : vector<8x32xbf16>, vector<32x128xbf16>, vector<8x128xf32> -> vector<8x128xf32>
    %203 = arith.addf %200, %202 : vector<8x128xf32>
    %204 = arith.mulf %14, %203 : vector<8x128xf32>
    %205 = math.tanh %204 : vector<8x128xf32>
    %206 = arith.mulf %14, %205 : vector<8x128xf32>
    %207 = arith.addf %206, %17 : vector<8x128xf32>
    %208 = vector.extract_strided_slice %207 {offsets = [0, 0], sizes = [8, 32], strides = [1, 1]} : vector<8x128xf32> to vector<8x32xf32>
    %209 = vector.extract_strided_slice %207 {offsets = [0, 32], sizes = [8, 32], strides = [1, 1]} : vector<8x128xf32> to vector<8x32xf32>
    %210 = vector.extract_strided_slice %207 {offsets = [0, 64], sizes = [8, 32], strides = [1, 1]} : vector<8x128xf32> to vector<8x32xf32>
    %211 = vector.extract_strided_slice %207 {offsets = [0, 96], sizes = [8, 32], strides = [1, 1]} : vector<8x128xf32> to vector<8x32xf32>
    %212 = arith.mulf %209, %172 : vector<8x32xf32>
    %213 = arith.mulf %208, %211 : vector<8x32xf32>
    %214 = arith.addf %212, %213 : vector<8x32xf32>
    %215 = math.tanh %214 : vector<8x32xf32>
    %216 = arith.mulf %210, %215 : vector<8x32xf32>
    %217 = arith.truncf %216 : vector<8x32xf32> to vector<8x32xbf16>
    %cst_55 = arith.constant dense<0.000000e+00> : vector<8x128xf32>
    %218 = tpu.matmul %217, %4, %cst_55 {dimension_numbers = #tpu.dot_dimension_numbers<[1], [0], [0], [1], [0, 0, 1, 1], [], []>} : vector<8x32xbf16>, vector<32x128xbf16>, vector<8x128xf32> -> vector<8x128xf32>
    %219 = arith.addf %8, %218 : vector<8x128xf32>
    %220 = arith.truncf %193 : vector<8x32xf32> to vector<8x32xbf16>
    %cst_56 = arith.constant dense<0.000000e+00> : vector<8x128xf32>
    %221 = tpu.matmul %220, %5, %cst_56 {dimension_numbers = #tpu.dot_dimension_numbers<[1], [0], [0], [1], [0, 0, 1, 1], [], []>} : vector<8x32xbf16>, vector<32x128xbf16>, vector<8x128xf32> -> vector<8x128xf32>
    %222 = arith.addf %219, %221 : vector<8x128xf32>
    %223 = arith.mulf %14, %222 : vector<8x128xf32>
    %224 = math.tanh %223 : vector<8x128xf32>
    %225 = arith.mulf %14, %224 : vector<8x128xf32>
    %226 = arith.addf %225, %17 : vector<8x128xf32>
    %227 = vector.extract_strided_slice %226 {offsets = [0, 0], sizes = [8, 32], strides = [1, 1]} : vector<8x128xf32> to vector<8x32xf32>
    %228 = vector.extract_strided_slice %226 {offsets = [0, 32], sizes = [8, 32], strides = [1, 1]} : vector<8x128xf32> to vector<8x32xf32>
    %229 = vector.extract_strided_slice %226 {offsets = [0, 64], sizes = [8, 32], strides = [1, 1]} : vector<8x128xf32> to vector<8x32xf32>
    %230 = vector.extract_strided_slice %226 {offsets = [0, 96], sizes = [8, 32], strides = [1, 1]} : vector<8x128xf32> to vector<8x32xf32>
    %231 = arith.mulf %228, %191 : vector<8x32xf32>
    %232 = arith.mulf %227, %230 : vector<8x32xf32>
    %233 = arith.addf %231, %232 : vector<8x32xf32>
    %234 = math.tanh %233 : vector<8x32xf32>
    %235 = arith.mulf %229, %234 : vector<8x32xf32>
    %236 = arith.truncf %235 : vector<8x32xf32> to vector<8x32xbf16>
    %237 = arith.index_cast %198 : i32 to index
    %c0_57 = arith.constant 0 : index
    %238 = vector.load %arg17[%237, %c0_57] : memref<64x32xbf16, #tpu.memory_space<vmem>>, vector<8x32xbf16>
    tpu.vector_store %arg17[%237, %c0_57], %236 {strides = array<i32>} : memref<64x32xbf16, #tpu.memory_space<vmem>>, vector<8x32xbf16>,
    %c5_i32 = arith.constant 5 : i32
    %c8_i32_58 = arith.constant 8 : i32
    %239 = arith.muli %c5_i32, %c8_i32_58 : i32
    %240 = tpu.assume_multiple %239, 8 : i32
    %241 = arith.index_cast %240 : i32 to index
    %c0_59 = arith.constant 0 : index
    %242 = vector.load %arg16[%241, %c0_59] : memref<64x128xf32, #tpu.memory_space<vmem>>, vector<8x128xf32>
    %243 = arith.truncf %216 : vector<8x32xf32> to vector<8x32xbf16>
    %cst_60 = arith.constant dense<0.000000e+00> : vector<8x128xf32>
    %244 = tpu.matmul %243, %3, %cst_60 {dimension_numbers = #tpu.dot_dimension_numbers<[1], [0], [0], [1], [0, 0, 1, 1], [], []>} : vector<8x32xbf16>, vector<32x128xbf16>, vector<8x128xf32> -> vector<8x128xf32>
    %245 = arith.addf %242, %244 : vector<8x128xf32>
    %246 = arith.mulf %14, %245 : vector<8x128xf32>
    %247 = math.tanh %246 : vector<8x128xf32>
    %248 = arith.mulf %14, %247 : vector<8x128xf32>
    %249 = arith.addf %248, %17 : vector<8x128xf32>
    %250 = vector.extract_strided_slice %249 {offsets = [0, 0], sizes = [8, 32], strides = [1, 1]} : vector<8x128xf32> to vector<8x32xf32>
    %251 = vector.extract_strided_slice %249 {offsets = [0, 32], sizes = [8, 32], strides = [1, 1]} : vector<8x128xf32> to vector<8x32xf32>
    %252 = vector.extract_strided_slice %249 {offsets = [0, 64], sizes = [8, 32], strides = [1, 1]} : vector<8x128xf32> to vector<8x32xf32>
    %253 = vector.extract_strided_slice %249 {offsets = [0, 96], sizes = [8, 32], strides = [1, 1]} : vector<8x128xf32> to vector<8x32xf32>
    %254 = arith.mulf %251, %214 : vector<8x32xf32>
    %255 = arith.mulf %250, %253 : vector<8x32xf32>
    %256 = arith.addf %254, %255 : vector<8x32xf32>
    %257 = math.tanh %256 : vector<8x32xf32>
    %258 = arith.mulf %252, %257 : vector<8x32xf32>
    %259 = arith.truncf %258 : vector<8x32xf32> to vector<8x32xbf16>
    %cst_61 = arith.constant dense<0.000000e+00> : vector<8x128xf32>
    %260 = tpu.matmul %259, %4, %cst_61 {dimension_numbers = #tpu.dot_dimension_numbers<[1], [0], [0], [1], [0, 0, 1, 1], [], []>} : vector<8x32xbf16>, vector<32x128xbf16>, vector<8x128xf32> -> vector<8x128xf32>
    %261 = arith.addf %8, %260 : vector<8x128xf32>
    %262 = arith.truncf %235 : vector<8x32xf32> to vector<8x32xbf16>
    %cst_62 = arith.constant dense<0.000000e+00> : vector<8x128xf32>
    %263 = tpu.matmul %262, %5, %cst_62 {dimension_numbers = #tpu.dot_dimension_numbers<[1], [0], [0], [1], [0, 0, 1, 1], [], []>} : vector<8x32xbf16>, vector<32x128xbf16>, vector<8x128xf32> -> vector<8x128xf32>
    %264 = arith.addf %261, %263 : vector<8x128xf32>
    %265 = arith.mulf %14, %264 : vector<8x128xf32>
    %266 = math.tanh %265 : vector<8x128xf32>
    %267 = arith.mulf %14, %266 : vector<8x128xf32>
    %268 = arith.addf %267, %17 : vector<8x128xf32>
    %269 = vector.extract_strided_slice %268 {offsets = [0, 0], sizes = [8, 32], strides = [1, 1]} : vector<8x128xf32> to vector<8x32xf32>
    %270 = vector.extract_strided_slice %268 {offsets = [0, 32], sizes = [8, 32], strides = [1, 1]} : vector<8x128xf32> to vector<8x32xf32>
    %271 = vector.extract_strided_slice %268 {offsets = [0, 64], sizes = [8, 32], strides = [1, 1]} : vector<8x128xf32> to vector<8x32xf32>
    %272 = vector.extract_strided_slice %268 {offsets = [0, 96], sizes = [8, 32], strides = [1, 1]} : vector<8x128xf32> to vector<8x32xf32>
    %273 = arith.mulf %270, %233 : vector<8x32xf32>
    %274 = arith.mulf %269, %272 : vector<8x32xf32>
    %275 = arith.addf %273, %274 : vector<8x32xf32>
    %276 = math.tanh %275 : vector<8x32xf32>
    %277 = arith.mulf %271, %276 : vector<8x32xf32>
    %278 = arith.truncf %277 : vector<8x32xf32> to vector<8x32xbf16>
    %279 = arith.index_cast %240 : i32 to index
    %c0_63 = arith.constant 0 : index
    %280 = vector.load %arg17[%279, %c0_63] : memref<64x32xbf16, #tpu.memory_space<vmem>>, vector<8x32xbf16>
    tpu.vector_store %arg17[%279, %c0_63], %278 {strides = array<i32>} : memref<64x32xbf16, #tpu.memory_space<vmem>>, vector<8x32xbf16>,
    %c6_i32 = arith.constant 6 : i32
    %c8_i32_64 = arith.constant 8 : i32
    %281 = arith.muli %c6_i32, %c8_i32_64 : i32
    %282 = tpu.assume_multiple %281, 8 : i32
    %283 = arith.index_cast %282 : i32 to index
    %c0_65 = arith.constant 0 : index
    %284 = vector.load %arg16[%283, %c0_65] : memref<64x128xf32, #tpu.memory_space<vmem>>, vector<8x128xf32>
    %285 = arith.truncf %258 : vector<8x32xf32> to vector<8x32xbf16>
    %cst_66 = arith.constant dense<0.000000e+00> : vector<8x128xf32>
    %286 = tpu.matmul %285, %3, %cst_66 {dimension_numbers = #tpu.dot_dimension_numbers<[1], [0], [0], [1], [0, 0, 1, 1], [], []>} : vector<8x32xbf16>, vector<32x128xbf16>, vector<8x128xf32> -> vector<8x128xf32>
    %287 = arith.addf %284, %286 : vector<8x128xf32>
    %288 = arith.mulf %14, %287 : vector<8x128xf32>
    %289 = math.tanh %288 : vector<8x128xf32>
    %290 = arith.mulf %14, %289 : vector<8x128xf32>
    %291 = arith.addf %290, %17 : vector<8x128xf32>
    %292 = vector.extract_strided_slice %291 {offsets = [0, 0], sizes = [8, 32], strides = [1, 1]} : vector<8x128xf32> to vector<8x32xf32>
    %293 = vector.extract_strided_slice %291 {offsets = [0, 32], sizes = [8, 32], strides = [1, 1]} : vector<8x128xf32> to vector<8x32xf32>
    %294 = vector.extract_strided_slice %291 {offsets = [0, 64], sizes = [8, 32], strides = [1, 1]} : vector<8x128xf32> to vector<8x32xf32>
    %295 = vector.extract_strided_slice %291 {offsets = [0, 96], sizes = [8, 32], strides = [1, 1]} : vector<8x128xf32> to vector<8x32xf32>
    %296 = arith.mulf %293, %256 : vector<8x32xf32>
    %297 = arith.mulf %292, %295 : vector<8x32xf32>
    %298 = arith.addf %296, %297 : vector<8x32xf32>
    %299 = math.tanh %298 : vector<8x32xf32>
    %300 = arith.mulf %294, %299 : vector<8x32xf32>
    %301 = arith.truncf %300 : vector<8x32xf32> to vector<8x32xbf16>
    %cst_67 = arith.constant dense<0.000000e+00> : vector<8x128xf32>
    %302 = tpu.matmul %301, %4, %cst_67 {dimension_numbers = #tpu.dot_dimension_numbers<[1], [0], [0], [1], [0, 0, 1, 1], [], []>} : vector<8x32xbf16>, vector<32x128xbf16>, vector<8x128xf32> -> vector<8x128xf32>
    %303 = arith.addf %8, %302 : vector<8x128xf32>
    %304 = arith.truncf %277 : vector<8x32xf32> to vector<8x32xbf16>
    %cst_68 = arith.constant dense<0.000000e+00> : vector<8x128xf32>
    %305 = tpu.matmul %304, %5, %cst_68 {dimension_numbers = #tpu.dot_dimension_numbers<[1], [0], [0], [1], [0, 0, 1, 1], [], []>} : vector<8x32xbf16>, vector<32x128xbf16>, vector<8x128xf32> -> vector<8x128xf32>
    %306 = arith.addf %303, %305 : vector<8x128xf32>
    %307 = arith.mulf %14, %306 : vector<8x128xf32>
    %308 = math.tanh %307 : vector<8x128xf32>
    %309 = arith.mulf %14, %308 : vector<8x128xf32>
    %310 = arith.addf %309, %17 : vector<8x128xf32>
    %311 = vector.extract_strided_slice %310 {offsets = [0, 0], sizes = [8, 32], strides = [1, 1]} : vector<8x128xf32> to vector<8x32xf32>
    %312 = vector.extract_strided_slice %310 {offsets = [0, 32], sizes = [8, 32], strides = [1, 1]} : vector<8x128xf32> to vector<8x32xf32>
    %313 = vector.extract_strided_slice %310 {offsets = [0, 64], sizes = [8, 32], strides = [1, 1]} : vector<8x128xf32> to vector<8x32xf32>
    %314 = vector.extract_strided_slice %310 {offsets = [0, 96], sizes = [8, 32], strides = [1, 1]} : vector<8x128xf32> to vector<8x32xf32>
    %315 = arith.mulf %312, %275 : vector<8x32xf32>
    %316 = arith.mulf %311, %314 : vector<8x32xf32>
    %317 = arith.addf %315, %316 : vector<8x32xf32>
    %318 = math.tanh %317 : vector<8x32xf32>
    %319 = arith.mulf %313, %318 : vector<8x32xf32>
    %320 = arith.truncf %319 : vector<8x32xf32> to vector<8x32xbf16>
    %321 = arith.index_cast %282 : i32 to index
    %c0_69 = arith.constant 0 : index
    %322 = vector.load %arg17[%321, %c0_69] : memref<64x32xbf16, #tpu.memory_space<vmem>>, vector<8x32xbf16>
    tpu.vector_store %arg17[%321, %c0_69], %320 {strides = array<i32>} : memref<64x32xbf16, #tpu.memory_space<vmem>>, vector<8x32xbf16>,
    %c7_i32 = arith.constant 7 : i32
    %c8_i32_70 = arith.constant 8 : i32
    %323 = arith.muli %c7_i32, %c8_i32_70 : i32
    %324 = tpu.assume_multiple %323, 8 : i32
    %325 = arith.index_cast %324 : i32 to index
    %c0_71 = arith.constant 0 : index
    %326 = vector.load %arg16[%325, %c0_71] : memref<64x128xf32, #tpu.memory_space<vmem>>, vector<8x128xf32>
    %327 = arith.truncf %300 : vector<8x32xf32> to vector<8x32xbf16>
    %cst_72 = arith.constant dense<0.000000e+00> : vector<8x128xf32>
    %328 = tpu.matmul %327, %3, %cst_72 {dimension_numbers = #tpu.dot_dimension_numbers<[1], [0], [0], [1], [0, 0, 1, 1], [], []>} : vector<8x32xbf16>, vector<32x128xbf16>, vector<8x128xf32> -> vector<8x128xf32>
    %329 = arith.addf %326, %328 : vector<8x128xf32>
    %330 = arith.mulf %14, %329 : vector<8x128xf32>
    %331 = math.tanh %330 : vector<8x128xf32>
    %332 = arith.mulf %14, %331 : vector<8x128xf32>
    %333 = arith.addf %332, %17 : vector<8x128xf32>
    %334 = vector.extract_strided_slice %333 {offsets = [0, 0], sizes = [8, 32], strides = [1, 1]} : vector<8x128xf32> to vector<8x32xf32>
    %335 = vector.extract_strided_slice %333 {offsets = [0, 32], sizes = [8, 32], strides = [1, 1]} : vector<8x128xf32> to vector<8x32xf32>
    %336 = vector.extract_strided_slice %333 {offsets = [0, 64], sizes = [8, 32], strides = [1, 1]} : vector<8x128xf32> to vector<8x32xf32>
    %337 = vector.extract_strided_slice %333 {offsets = [0, 96], sizes = [8, 32], strides = [1, 1]} : vector<8x128xf32> to vector<8x32xf32>
    %338 = arith.mulf %335, %298 : vector<8x32xf32>
    %339 = arith.mulf %334, %337 : vector<8x32xf32>
    %340 = arith.addf %338, %339 : vector<8x32xf32>
    %341 = math.tanh %340 : vector<8x32xf32>
    %342 = arith.mulf %336, %341 : vector<8x32xf32>
    %343 = arith.truncf %342 : vector<8x32xf32> to vector<8x32xbf16>
    %cst_73 = arith.constant dense<0.000000e+00> : vector<8x128xf32>
    %344 = tpu.matmul %343, %4, %cst_73 {dimension_numbers = #tpu.dot_dimension_numbers<[1], [0], [0], [1], [0, 0, 1, 1], [], []>} : vector<8x32xbf16>, vector<32x128xbf16>, vector<8x128xf32> -> vector<8x128xf32>
    %345 = arith.addf %8, %344 : vector<8x128xf32>
    %346 = arith.truncf %319 : vector<8x32xf32> to vector<8x32xbf16>
    %cst_74 = arith.constant dense<0.000000e+00> : vector<8x128xf32>
    %347 = tpu.matmul %346, %5, %cst_74 {dimension_numbers = #tpu.dot_dimension_numbers<[1], [0], [0], [1], [0, 0, 1, 1], [], []>} : vector<8x32xbf16>, vector<32x128xbf16>, vector<8x128xf32> -> vector<8x128xf32>
    %348 = arith.addf %345, %347 : vector<8x128xf32>
    %349 = arith.mulf %14, %348 : vector<8x128xf32>
    %350 = math.tanh %349 : vector<8x128xf32>
    %351 = arith.mulf %14, %350 : vector<8x128xf32>
    %352 = arith.addf %351, %17 : vector<8x128xf32>
    %353 = vector.extract_strided_slice %352 {offsets = [0, 0], sizes = [8, 32], strides = [1, 1]} : vector<8x128xf32> to vector<8x32xf32>
    %354 = vector.extract_strided_slice %352 {offsets = [0, 32], sizes = [8, 32], strides = [1, 1]} : vector<8x128xf32> to vector<8x32xf32>
    %355 = vector.extract_strided_slice %352 {offsets = [0, 64], sizes = [8, 32], strides = [1, 1]} : vector<8x128xf32> to vector<8x32xf32>
    %356 = vector.extract_strided_slice %352 {offsets = [0, 96], sizes = [8, 32], strides = [1, 1]} : vector<8x128xf32> to vector<8x32xf32>
    %357 = arith.mulf %354, %317 : vector<8x32xf32>
    %358 = arith.mulf %353, %356 : vector<8x32xf32>
    %359 = arith.addf %357, %358 : vector<8x32xf32>
    %360 = math.tanh %359 : vector<8x32xf32>
    %361 = arith.mulf %355, %360 : vector<8x32xf32>
    %362 = arith.truncf %361 : vector<8x32xf32> to vector<8x32xbf16>
    %363 = arith.index_cast %324 : i32 to index
    %c0_75 = arith.constant 0 : index
    %364 = vector.load %arg17[%363, %c0_75] : memref<64x32xbf16, #tpu.memory_space<vmem>>, vector<8x32xbf16>
    tpu.vector_store %arg17[%363, %c0_75], %362 {strides = array<i32>} : memref<64x32xbf16, #tpu.memory_space<vmem>>, vector<8x32xbf16>,
    %c8_i32_76 = arith.constant 8 : i32
    %c0_77 = arith.constant 0 : index
    %c0_78 = arith.constant 0 : index
    %365 = vector.load %arg12[%c0_77, %c0_78] : memref<8x32xf32, #tpu.memory_space<vmem>>, vector<8x32xf32>
    tpu.vector_store %arg12[%c0_77, %c0_78], %342 {strides = array<i32>} : memref<8x32xf32, #tpu.memory_space<vmem>>, vector<8x32xf32>,
    %c0_79 = arith.constant 0 : index
    %c0_80 = arith.constant 0 : index
    %366 = vector.load %arg13[%c0_79, %c0_80] : memref<8x32xf32, #tpu.memory_space<vmem>>, vector<8x32xf32>
    tpu.vector_store %arg13[%c0_79, %c0_80], %340 {strides = array<i32>} : memref<8x32xf32, #tpu.memory_space<vmem>>, vector<8x32xf32>,
    %c0_81 = arith.constant 0 : index
    %c0_82 = arith.constant 0 : index
    %367 = vector.load %arg14[%c0_81, %c0_82] : memref<8x32xf32, #tpu.memory_space<vmem>>, vector<8x32xf32>
    tpu.vector_store %arg14[%c0_81, %c0_82], %361 {strides = array<i32>} : memref<8x32xf32, #tpu.memory_space<vmem>>, vector<8x32xf32>,
    %c0_83 = arith.constant 0 : index
    %c0_84 = arith.constant 0 : index
    %368 = vector.load %arg15[%c0_83, %c0_84] : memref<8x32xf32, #tpu.memory_space<vmem>>, vector<8x32xf32>
    tpu.vector_store %arg15[%c0_83, %c0_84], %359 {strides = array<i32>} : memref<8x32xf32, #tpu.memory_space<vmem>>, vector<8x32xf32>,
    %c0_85 = arith.constant 0 : index
    %c0_86 = arith.constant 0 : index
    %369 = vector.load %arg17[%c0_85, %c0_86] : memref<64x32xbf16, #tpu.memory_space<vmem>>, vector<64x32xbf16>
    %c0_87 = arith.constant 0 : index
    %c0_88 = arith.constant 0 : index
    %370 = vector.load %arg9[%c0_87, %c0_88] : memref<32x128xbf16, #tpu.memory_space<vmem>>, vector<32x128xbf16>
    %cst_89 = arith.constant dense<0.000000e+00> : vector<64x128xf32>
    %371 = tpu.matmul %369, %370, %cst_89 {dimension_numbers = #tpu.dot_dimension_numbers<[1], [0], [0], [1], [0, 0, 1, 1], [], []>} : vector<64x32xbf16>, vector<32x128xbf16>, vector<64x128xf32> -> vector<64x128xf32>
    %c0_90 = arith.constant 0 : index
    %c0_91 = arith.constant 0 : index
    %372 = vector.load %arg10[%c0_90, %c0_91] : memref<1x128xf32, #tpu.memory_space<vmem>>, vector<1x128xf32>
    %373 = vector.broadcast %372 : vector<1x128xf32> to vector<64x128xf32>
    %374 = arith.addf %371, %373 : vector<64x128xf32>
    %375 = math.tanh %374 : vector<64x128xf32>
    %c0_92 = arith.constant 0 : index
    %c0_93 = arith.constant 0 : index
    %376 = vector.load %arg11[%c0_92, %c0_93] : memref<64x128xf32, #tpu.memory_space<vmem>>, vector<64x128xf32>
    tpu.vector_store %arg11[%c0_92, %c0_93], %375 {strides = array<i32>} : memref<64x128xf32, #tpu.memory_space<vmem>>, vector<64x128xf32>,
    return
  }
  func.func @transform_0(%arg0: i32, %arg1: i32) -> (i32, i32) {
    %c1_i32 = arith.constant 1 : i32
    %0 = arith.muli %arg0, %c1_i32 : i32
    %1 = arith.addi %0, %arg1 : i32
    %c0_i32 = arith.constant 0 : i32
    %c0_i32_0 = arith.constant 0 : i32
    return %1, %c0_i32 : i32, i32
  }
  func.func @transform_1(%arg0: i32, %arg1: i32) -> (i32, i32) {
    %c0_i32 = arith.constant 0 : i32
    %c0_i32_0 = arith.constant 0 : i32
    %c0_i32_1 = arith.constant 0 : i32
    return %c0_i32, %c0_i32_0 : i32, i32
  }
  func.func @transform_2(%arg0: i32, %arg1: i32) -> (i32, i32) {
    %c0_i32 = arith.constant 0 : i32
    %c0_i32_0 = arith.constant 0 : i32
    %c0_i32_1 = arith.constant 0 : i32
    return %c0_i32, %c0_i32_0 : i32, i32
  }
  func.func @transform_3(%arg0: i32, %arg1: i32) -> (i32, i32) {
    %c0_i32 = arith.constant 0 : i32
    %c0_i32_0 = arith.constant 0 : i32
    %c0_i32_1 = arith.constant 0 : i32
    return %c0_i32, %c0_i32_0 : i32, i32
  }
  func.func @transform_4(%arg0: i32, %arg1: i32) -> (i32, i32) {
    %c0_i32 = arith.constant 0 : i32
    %c0_i32_0 = arith.constant 0 : i32
    %c0_i32_1 = arith.constant 0 : i32
    return %c0_i32, %c0_i32_0 : i32, i32
  }
  func.func @transform_5(%arg0: i32, %arg1: i32) -> (i32, i32) {
    %c0_i32 = arith.constant 0 : i32
    %c0_i32_0 = arith.constant 0 : i32
    %c0_i32_1 = arith.constant 0 : i32
    return %c0_i32, %c0_i32_0 : i32, i32
  }
  func.func @transform_6(%arg0: i32, %arg1: i32) -> (i32, i32) {
    %c0_i32 = arith.constant 0 : i32
    %c0_i32_0 = arith.constant 0 : i32
    %c0_i32_1 = arith.constant 0 : i32
    return %c0_i32, %c0_i32_0 : i32, i32
  }
  func.func @transform_7(%arg0: i32, %arg1: i32) -> (i32, i32) {
    %c0_i32 = arith.constant 0 : i32
    %c0_i32_0 = arith.constant 0 : i32
    %c0_i32_1 = arith.constant 0 : i32
    return %c0_i32, %c0_i32_0 : i32, i32
  }
  func.func @transform_8(%arg0: i32, %arg1: i32) -> (i32, i32) {
    %c0_i32 = arith.constant 0 : i32
    %c0_i32_0 = arith.constant 0 : i32
    %c0_i32_1 = arith.constant 0 : i32
    return %c0_i32, %c0_i32_0 : i32, i32
  }
  func.func @transform_9(%arg0: i32, %arg1: i32) -> (i32, i32) {
    %c1_i32 = arith.constant 1 : i32
    %0 = arith.muli %arg0, %c1_i32 : i32
    %1 = arith.addi %0, %arg1 : i32
    %c0_i32 = arith.constant 0 : i32
    %c0_i32_0 = arith.constant 0 : i32
    return %1, %c0_i32 : i32, i32
  }
}

module attributes {stable_mosaic.version = 11 : i64} {
  func.func @lstm_gen_kernel(%arg0: i32, %arg1: i32, %arg2: memref<64x128xbf16, #tpu.memory_space<vmem>>, %arg3: memref<128x128xbf16, #tpu.memory_space<vmem>>, %arg4: memref<32x128xbf16, #tpu.memory_space<vmem>>, %arg5: memref<1x128xf32, #tpu.memory_space<vmem>>, %arg6: memref<32x128xbf16, #tpu.memory_space<vmem>>, %arg7: memref<32x128xbf16, #tpu.memory_space<vmem>>, %arg8: memref<1x128xf32, #tpu.memory_space<vmem>>, %arg9: memref<32x128xbf16, #tpu.memory_space<vmem>>, %arg10: memref<1x128xf32, #tpu.memory_space<vmem>>, %arg11: memref<64x128xf32, #tpu.memory_space<vmem>>, %arg12: memref<8x32xf32, #tpu.memory_space<vmem>>, %arg13: memref<8x32xf32, #tpu.memory_space<vmem>>, %arg14: memref<8x32xf32, #tpu.memory_space<vmem>>, %arg15: memref<8x32xf32, #tpu.memory_space<vmem>>, %arg16: memref<64x128xf32, #tpu.memory_space<vmem>>, %arg17: memref<64x32xbf16, #tpu.memory_space<vmem>>) attributes {dimension_semantics = [#tpu.dimension_semantics<parallel>, #tpu.dimension_semantics<arbitrary>], iteration_bounds = array<i64: 1, 1>, scalar_prefetch = 0 : i64, scratch_operands = 6 : i64, tpu.core_type = #tpu.core_type<tc>, window_params = [{transform_indices = @transform_0, window_bounds = array<i64: 64, 128>}, {pipeline_mode = #tpu.pipeline_mode<synchronous>, transform_indices = @transform_1, window_bounds = array<i64: 128, 128>}, {pipeline_mode = #tpu.pipeline_mode<synchronous>, transform_indices = @transform_2, window_bounds = array<i64: 32, 128>}, {pipeline_mode = #tpu.pipeline_mode<synchronous>, transform_indices = @transform_3, window_bounds = array<i64: 1, 128>}, {pipeline_mode = #tpu.pipeline_mode<synchronous>, transform_indices = @transform_4, window_bounds = array<i64: 32, 128>}, {pipeline_mode = #tpu.pipeline_mode<synchronous>, transform_indices = @transform_5, window_bounds = array<i64: 32, 128>}, {pipeline_mode = #tpu.pipeline_mode<synchronous>, transform_indices = @transform_6, window_bounds = array<i64: 1, 128>}, {pipeline_mode = #tpu.pipeline_mode<synchronous>, transform_indices = @transform_7, window_bounds = array<i64: 32, 128>}, {pipeline_mode = #tpu.pipeline_mode<synchronous>, transform_indices = @transform_8, window_bounds = array<i64: 1, 128>}, {transform_indices = @transform_9, window_bounds = array<i64: 64, 128>}]} {
    %c0_i32 = arith.constant 0 : i32
    %0 = arith.cmpi eq, %arg1, %c0_i32 : i32
    %1 = arith.extui %0 : i1 to i32
    %c0_i32_0 = arith.constant 0 : i32
    %2 = arith.cmpi ne, %1, %c0_i32_0 : i32
    scf.if %2 {
      %cst_94 = arith.constant 0.000000e+00 : f32
      %377 = vector.broadcast %cst_94 : f32 to vector<8x32xf32>
      %c0_95 = arith.constant 0 : index
      %c0_96 = arith.constant 0 : index
      %378 = vector.load %arg12[%c0_95, %c0_96] : memref<8x32xf32, #tpu.memory_space<vmem>>, vector<8x32xf32>
      tpu.vector_store %arg12[%c0_95, %c0_96], %377 {strides = array<i32>} : memref<8x32xf32, #tpu.memory_space<vmem>>, vector<8x32xf32>,
      %cst_97 = arith.constant 0.000000e+00 : f32
      %379 = vector.broadcast %cst_97 : f32 to vector<8x32xf32>
      %c0_98 = arith.constant 0 : index
      %c0_99 = arith.constant 0 : index
      %380 = vector.load %arg13[%c0_98, %c0_99] : memref<8x32xf32, #tpu.memory_space<vmem>>, vector<8x32xf32>
      tpu.vector_store %arg13[%c0_98, %c0_99], %379 {strides = array<i32>} : memref<8x32xf32, #tpu.memory_space<vmem>>, vector<8x32xf32>,
      %cst_100 = arith.constant 0.000000e+00 : f32
      %381 = vector.broadcast %cst_100 : f32 to vector<8x32xf32>
      %c0_101 = arith.constant 0 : index
      %c0_102 = arith.constant 0 : index
      %382 = vector.load %arg14[%c0_101, %c0_102] : memref<8x32xf32, #tpu.memory_space<vmem>>, vector<8x32xf32>
      tpu.vector_store %arg14[%c0_101, %c0_102], %381 {strides = array<i32>} : memref<8x32xf32, #tpu.memory_space<vmem>>, vector<8x32xf32>,
      %cst_103 = arith.constant 0.000000e+00 : f32
      %383 = vector.broadcast %cst_103 : f32 to vector<8x32xf32>
      %c0_104 = arith.constant 0 : index
      %c0_105 = arith.constant 0 : index
      %384 = vector.load %arg15[%c0_104, %c0_105] : memref<8x32xf32, #tpu.memory_space<vmem>>, vector<8x32xf32>
      tpu.vector_store %arg15[%c0_104, %c0_105], %383 {strides = array<i32>} : memref<8x32xf32, #tpu.memory_space<vmem>>, vector<8x32xf32>,
    } else {
    }
    %c0 = arith.constant 0 : index
    %c0_1 = arith.constant 0 : index
    %3 = vector.load %arg4[%c0, %c0_1] : memref<32x128xbf16, #tpu.memory_space<vmem>>, vector<32x128xbf16>
    %c0_2 = arith.constant 0 : index
    %c0_3 = arith.constant 0 : index
    %4 = vector.load %arg6[%c0_2, %c0_3] : memref<32x128xbf16, #tpu.memory_space<vmem>>, vector<32x128xbf16>
    %c0_4 = arith.constant 0 : index
    %c0_5 = arith.constant 0 : index
    %5 = vector.load %arg7[%c0_4, %c0_5] : memref<32x128xbf16, #tpu.memory_space<vmem>>, vector<32x128xbf16>
    %c0_6 = arith.constant 0 : index
    %c0_7 = arith.constant 0 : index
    %6 = vector.load %arg8[%c0_6, %c0_7] : memref<1x128xf32, #tpu.memory_space<vmem>>, vector<1x128xf32>
    %7 = vector.shape_cast %6 : vector<1x128xf32> to vector<1x128xf32>
    %8 = vector.broadcast %7 : vector<1x128xf32> to vector<8x128xf32>
    %9 = tpu.iota {dimensions = array<i32: 1>} : vector<8x128xi32>
    %c96_i32 = arith.constant 96 : i32
    %10 = vector.broadcast %c96_i32 : i32 to vector<8x128xi32>
    %11 = arith.cmpi slt, %9, %10 : vector<8x128xi32>
    %cst = arith.constant 5.000000e-01 : f32
    %cst_8 = arith.constant 1.000000e+00 : f32
    %12 = vector.broadcast %cst : f32 to vector<8x128xf32>
    %13 = vector.broadcast %cst_8 : f32 to vector<8x128xf32>
    %14 = arith.select %11, %12, %13 : vector<8x128xi1>, vector<8x128xf32>
    %cst_9 = arith.constant 5.000000e-01 : f32
    %cst_10 = arith.constant 0.000000e+00 : f32
    %15 = vector.broadcast %cst_9 : f32 to vector<8x128xf32>
    %16 = vector.broadcast %cst_10 : f32 to vector<8x128xf32>
    %17 = arith.select %11, %15, %16 : vector<8x128xi1>, vector<8x128xf32>
    %c0_11 = arith.constant 0 : index
    %c0_12 = arith.constant 0 : index
    %18 = vector.load %arg2[%c0_11, %c0_12] : memref<64x128xbf16, #tpu.memory_space<vmem>>, vector<64x128xbf16>
    %c0_13 = arith.constant 0 : index
    %c0_14 = arith.constant 0 : index
    %19 = vector.load %arg3[%c0_13, %c0_14] : memref<128x128xbf16, #tpu.memory_space<vmem>>, vector<128x128xbf16>
    %cst_15 = arith.constant dense<0.000000e+00> : vector<64x128xf32>
    %20 = tpu.matmul %18, %19, %cst_15 {dimension_numbers = #tpu.dot_dimension_numbers<[1], [0], [0], [1], [0, 0, 1, 1], [], []>} : vector<64x128xbf16>, vector<128x128xbf16>, vector<64x128xf32> -> vector<64x128xf32>
    %c0_16 = arith.constant 0 : index
    %c0_17 = arith.constant 0 : index
    %21 = vector.load %arg5[%c0_16, %c0_17] : memref<1x128xf32, #tpu.memory_space<vmem>>, vector<1x128xf32>
    %22 = vector.broadcast %21 : vector<1x128xf32> to vector<64x128xf32>
    %23 = arith.addf %20, %22 : vector<64x128xf32>
    %c0_18 = arith.constant 0 : index
    %c0_19 = arith.constant 0 : index
    %24 = vector.load %arg16[%c0_18, %c0_19] : memref<64x128xf32, #tpu.memory_space<vmem>>, vector<64x128xf32>
    tpu.vector_store %arg16[%c0_18, %c0_19], %23 {strides = array<i32>} : memref<64x128xf32, #tpu.memory_space<vmem>>, vector<64x128xf32>,
    %c0_20 = arith.constant 0 : index
    %c0_21 = arith.constant 0 : index
    %25 = vector.load %arg12[%c0_20, %c0_21] : memref<8x32xf32, #tpu.memory_space<vmem>>, vector<8x32xf32>
    %c0_22 = arith.constant 0 : index
    %c0_23 = arith.constant 0 : index
    %26 = vector.load %arg13[%c0_22, %c0_23] : memref<8x32xf32, #tpu.memory_space<vmem>>, vector<8x32xf32>
    %c0_24 = arith.constant 0 : index
    %c0_25 = arith.constant 0 : index
    %27 = vector.load %arg14[%c0_24, %c0_25] : memref<8x32xf32, #tpu.memory_space<vmem>>, vector<8x32xf32>
    %c0_26 = arith.constant 0 : index
    %c0_27 = arith.constant 0 : index
    %28 = vector.load %arg15[%c0_26, %c0_27] : memref<8x32xf32, #tpu.memory_space<vmem>>, vector<8x32xf32>
    %c0_i32_28 = arith.constant 0 : i32
    %c8_i32 = arith.constant 8 : i32
    %29 = arith.muli %c0_i32_28, %c8_i32 : i32
    %30 = tpu.assume_multiple %29, 8 : i32
    %31 = arith.index_cast %30 : i32 to index
    %c0_29 = arith.constant 0 : index
    %32 = vector.load %arg16[%31, %c0_29] : memref<64x128xf32, #tpu.memory_space<vmem>>, vector<8x128xf32>
    %33 = arith.truncf %25 : vector<8x32xf32> to vector<8x32xbf16>
    %cst_30 = arith.constant dense<0.000000e+00> : vector<8x128xf32>
    %34 = tpu.matmul %33, %3, %cst_30 {dimension_numbers = #tpu.dot_dimension_numbers<[1], [0], [0], [1], [0, 0, 1, 1], [], []>} : vector<8x32xbf16>, vector<32x128xbf16>, vector<8x128xf32> -> vector<8x128xf32>
    %35 = arith.addf %32, %34 : vector<8x128xf32>
    %36 = arith.mulf %14, %35 : vector<8x128xf32>
    %37 = math.tanh %36 : vector<8x128xf32>
    %38 = arith.mulf %14, %37 : vector<8x128xf32>
    %39 = arith.addf %38, %17 : vector<8x128xf32>
    %40 = vector.extract_strided_slice %39 {offsets = [0, 0], sizes = [8, 32], strides = [1, 1]} : vector<8x128xf32> to vector<8x32xf32>
    %41 = vector.extract_strided_slice %39 {offsets = [0, 32], sizes = [8, 32], strides = [1, 1]} : vector<8x128xf32> to vector<8x32xf32>
    %42 = vector.extract_strided_slice %39 {offsets = [0, 64], sizes = [8, 32], strides = [1, 1]} : vector<8x128xf32> to vector<8x32xf32>
    %43 = vector.extract_strided_slice %39 {offsets = [0, 96], sizes = [8, 32], strides = [1, 1]} : vector<8x128xf32> to vector<8x32xf32>
    %44 = arith.mulf %41, %26 : vector<8x32xf32>
    %45 = arith.mulf %40, %43 : vector<8x32xf32>
    %46 = arith.addf %44, %45 : vector<8x32xf32>
    %47 = math.tanh %46 : vector<8x32xf32>
    %48 = arith.mulf %42, %47 : vector<8x32xf32>
    %49 = arith.truncf %48 : vector<8x32xf32> to vector<8x32xbf16>
    %cst_31 = arith.constant dense<0.000000e+00> : vector<8x128xf32>
    %50 = tpu.matmul %49, %4, %cst_31 {dimension_numbers = #tpu.dot_dimension_numbers<[1], [0], [0], [1], [0, 0, 1, 1], [], []>} : vector<8x32xbf16>, vector<32x128xbf16>, vector<8x128xf32> -> vector<8x128xf32>
    %51 = arith.addf %8, %50 : vector<8x128xf32>
    %52 = arith.truncf %27 : vector<8x32xf32> to vector<8x32xbf16>
    %cst_32 = arith.constant dense<0.000000e+00> : vector<8x128xf32>
    %53 = tpu.matmul %52, %5, %cst_32 {dimension_numbers = #tpu.dot_dimension_numbers<[1], [0], [0], [1], [0, 0, 1, 1], [], []>} : vector<8x32xbf16>, vector<32x128xbf16>, vector<8x128xf32> -> vector<8x128xf32>
    %54 = arith.addf %51, %53 : vector<8x128xf32>
    %55 = arith.mulf %14, %54 : vector<8x128xf32>
    %56 = math.tanh %55 : vector<8x128xf32>
    %57 = arith.mulf %14, %56 : vector<8x128xf32>
    %58 = arith.addf %57, %17 : vector<8x128xf32>
    %59 = vector.extract_strided_slice %58 {offsets = [0, 0], sizes = [8, 32], strides = [1, 1]} : vector<8x128xf32> to vector<8x32xf32>
    %60 = vector.extract_strided_slice %58 {offsets = [0, 32], sizes = [8, 32], strides = [1, 1]} : vector<8x128xf32> to vector<8x32xf32>
    %61 = vector.extract_strided_slice %58 {offsets = [0, 64], sizes = [8, 32], strides = [1, 1]} : vector<8x128xf32> to vector<8x32xf32>
    %62 = vector.extract_strided_slice %58 {offsets = [0, 96], sizes = [8, 32], strides = [1, 1]} : vector<8x128xf32> to vector<8x32xf32>
    %63 = arith.mulf %60, %28 : vector<8x32xf32>
    %64 = arith.mulf %59, %62 : vector<8x32xf32>
    %65 = arith.addf %63, %64 : vector<8x32xf32>
    %66 = math.tanh %65 : vector<8x32xf32>
    %67 = arith.mulf %61, %66 : vector<8x32xf32>
    %68 = arith.truncf %67 : vector<8x32xf32> to vector<8x32xbf16>
    %69 = arith.index_cast %30 : i32 to index
    %c0_33 = arith.constant 0 : index
    %70 = vector.load %arg17[%69, %c0_33] : memref<64x32xbf16, #tpu.memory_space<vmem>>, vector<8x32xbf16>
    tpu.vector_store %arg17[%69, %c0_33], %68 {strides = array<i32>} : memref<64x32xbf16, #tpu.memory_space<vmem>>, vector<8x32xbf16>,
    %c1_i32 = arith.constant 1 : i32
    %c8_i32_34 = arith.constant 8 : i32
    %71 = arith.muli %c1_i32, %c8_i32_34 : i32
    %72 = tpu.assume_multiple %71, 8 : i32
    %73 = arith.index_cast %72 : i32 to index
    %c0_35 = arith.constant 0 : index
    %74 = vector.load %arg16[%73, %c0_35] : memref<64x128xf32, #tpu.memory_space<vmem>>, vector<8x128xf32>
    %75 = arith.truncf %48 : vector<8x32xf32> to vector<8x32xbf16>
    %cst_36 = arith.constant dense<0.000000e+00> : vector<8x128xf32>
    %76 = tpu.matmul %75, %3, %cst_36 {dimension_numbers = #tpu.dot_dimension_numbers<[1], [0], [0], [1], [0, 0, 1, 1], [], []>} : vector<8x32xbf16>, vector<32x128xbf16>, vector<8x128xf32> -> vector<8x128xf32>
    %77 = arith.addf %74, %76 : vector<8x128xf32>
    %78 = arith.mulf %14, %77 : vector<8x128xf32>
    %79 = math.tanh %78 : vector<8x128xf32>
    %80 = arith.mulf %14, %79 : vector<8x128xf32>
    %81 = arith.addf %80, %17 : vector<8x128xf32>
    %82 = vector.extract_strided_slice %81 {offsets = [0, 0], sizes = [8, 32], strides = [1, 1]} : vector<8x128xf32> to vector<8x32xf32>
    %83 = vector.extract_strided_slice %81 {offsets = [0, 32], sizes = [8, 32], strides = [1, 1]} : vector<8x128xf32> to vector<8x32xf32>
    %84 = vector.extract_strided_slice %81 {offsets = [0, 64], sizes = [8, 32], strides = [1, 1]} : vector<8x128xf32> to vector<8x32xf32>
    %85 = vector.extract_strided_slice %81 {offsets = [0, 96], sizes = [8, 32], strides = [1, 1]} : vector<8x128xf32> to vector<8x32xf32>
    %86 = arith.mulf %83, %46 : vector<8x32xf32>
    %87 = arith.mulf %82, %85 : vector<8x32xf32>
    %88 = arith.addf %86, %87 : vector<8x32xf32>
    %89 = math.tanh %88 : vector<8x32xf32>
    %90 = arith.mulf %84, %89 : vector<8x32xf32>
    %91 = arith.truncf %90 : vector<8x32xf32> to vector<8x32xbf16>
    %cst_37 = arith.constant dense<0.000000e+00> : vector<8x128xf32>
    %92 = tpu.matmul %91, %4, %cst_37 {dimension_numbers = #tpu.dot_dimension_numbers<[1], [0], [0], [1], [0, 0, 1, 1], [], []>} : vector<8x32xbf16>, vector<32x128xbf16>, vector<8x128xf32> -> vector<8x128xf32>
    %93 = arith.addf %8, %92 : vector<8x128xf32>
    %94 = arith.truncf %67 : vector<8x32xf32> to vector<8x32xbf16>
    %cst_38 = arith.constant dense<0.000000e+00> : vector<8x128xf32>
    %95 = tpu.matmul %94, %5, %cst_38 {dimension_numbers = #tpu.dot_dimension_numbers<[1], [0], [0], [1], [0, 0, 1, 1], [], []>} : vector<8x32xbf16>, vector<32x128xbf16>, vector<8x128xf32> -> vector<8x128xf32>
    %96 = arith.addf %93, %95 : vector<8x128xf32>
    %97 = arith.mulf %14, %96 : vector<8x128xf32>
    %98 = math.tanh %97 : vector<8x128xf32>
    %99 = arith.mulf %14, %98 : vector<8x128xf32>
    %100 = arith.addf %99, %17 : vector<8x128xf32>
    %101 = vector.extract_strided_slice %100 {offsets = [0, 0], sizes = [8, 32], strides = [1, 1]} : vector<8x128xf32> to vector<8x32xf32>
    %102 = vector.extract_strided_slice %100 {offsets = [0, 32], sizes = [8, 32], strides = [1, 1]} : vector<8x128xf32> to vector<8x32xf32>
    %103 = vector.extract_strided_slice %100 {offsets = [0, 64], sizes = [8, 32], strides = [1, 1]} : vector<8x128xf32> to vector<8x32xf32>
    %104 = vector.extract_strided_slice %100 {offsets = [0, 96], sizes = [8, 32], strides = [1, 1]} : vector<8x128xf32> to vector<8x32xf32>
    %105 = arith.mulf %102, %65 : vector<8x32xf32>
    %106 = arith.mulf %101, %104 : vector<8x32xf32>
    %107 = arith.addf %105, %106 : vector<8x32xf32>
    %108 = math.tanh %107 : vector<8x32xf32>
    %109 = arith.mulf %103, %108 : vector<8x32xf32>
    %110 = arith.truncf %109 : vector<8x32xf32> to vector<8x32xbf16>
    %111 = arith.index_cast %72 : i32 to index
    %c0_39 = arith.constant 0 : index
    %112 = vector.load %arg17[%111, %c0_39] : memref<64x32xbf16, #tpu.memory_space<vmem>>, vector<8x32xbf16>
    tpu.vector_store %arg17[%111, %c0_39], %110 {strides = array<i32>} : memref<64x32xbf16, #tpu.memory_space<vmem>>, vector<8x32xbf16>,
    %c2_i32 = arith.constant 2 : i32
    %c8_i32_40 = arith.constant 8 : i32
    %113 = arith.muli %c2_i32, %c8_i32_40 : i32
    %114 = tpu.assume_multiple %113, 8 : i32
    %115 = arith.index_cast %114 : i32 to index
    %c0_41 = arith.constant 0 : index
    %116 = vector.load %arg16[%115, %c0_41] : memref<64x128xf32, #tpu.memory_space<vmem>>, vector<8x128xf32>
    %117 = arith.truncf %90 : vector<8x32xf32> to vector<8x32xbf16>
    %cst_42 = arith.constant dense<0.000000e+00> : vector<8x128xf32>
    %118 = tpu.matmul %117, %3, %cst_42 {dimension_numbers = #tpu.dot_dimension_numbers<[1], [0], [0], [1], [0, 0, 1, 1], [], []>} : vector<8x32xbf16>, vector<32x128xbf16>, vector<8x128xf32> -> vector<8x128xf32>
    %119 = arith.addf %116, %118 : vector<8x128xf32>
    %120 = arith.mulf %14, %119 : vector<8x128xf32>
    %121 = math.tanh %120 : vector<8x128xf32>
    %122 = arith.mulf %14, %121 : vector<8x128xf32>
    %123 = arith.addf %122, %17 : vector<8x128xf32>
    %124 = vector.extract_strided_slice %123 {offsets = [0, 0], sizes = [8, 32], strides = [1, 1]} : vector<8x128xf32> to vector<8x32xf32>
    %125 = vector.extract_strided_slice %123 {offsets = [0, 32], sizes = [8, 32], strides = [1, 1]} : vector<8x128xf32> to vector<8x32xf32>
    %126 = vector.extract_strided_slice %123 {offsets = [0, 64], sizes = [8, 32], strides = [1, 1]} : vector<8x128xf32> to vector<8x32xf32>
    %127 = vector.extract_strided_slice %123 {offsets = [0, 96], sizes = [8, 32], strides = [1, 1]} : vector<8x128xf32> to vector<8x32xf32>
    %128 = arith.mulf %125, %88 : vector<8x32xf32>
    %129 = arith.mulf %124, %127 : vector<8x32xf32>
    %130 = arith.addf %128, %129 : vector<8x32xf32>
    %131 = math.tanh %130 : vector<8x32xf32>
    %132 = arith.mulf %126, %131 : vector<8x32xf32>
    %133 = arith.truncf %132 : vector<8x32xf32> to vector<8x32xbf16>
    %cst_43 = arith.constant dense<0.000000e+00> : vector<8x128xf32>
    %134 = tpu.matmul %133, %4, %cst_43 {dimension_numbers = #tpu.dot_dimension_numbers<[1], [0], [0], [1], [0, 0, 1, 1], [], []>} : vector<8x32xbf16>, vector<32x128xbf16>, vector<8x128xf32> -> vector<8x128xf32>
    %135 = arith.addf %8, %134 : vector<8x128xf32>
    %136 = arith.truncf %109 : vector<8x32xf32> to vector<8x32xbf16>
    %cst_44 = arith.constant dense<0.000000e+00> : vector<8x128xf32>
    %137 = tpu.matmul %136, %5, %cst_44 {dimension_numbers = #tpu.dot_dimension_numbers<[1], [0], [0], [1], [0, 0, 1, 1], [], []>} : vector<8x32xbf16>, vector<32x128xbf16>, vector<8x128xf32> -> vector<8x128xf32>
    %138 = arith.addf %135, %137 : vector<8x128xf32>
    %139 = arith.mulf %14, %138 : vector<8x128xf32>
    %140 = math.tanh %139 : vector<8x128xf32>
    %141 = arith.mulf %14, %140 : vector<8x128xf32>
    %142 = arith.addf %141, %17 : vector<8x128xf32>
    %143 = vector.extract_strided_slice %142 {offsets = [0, 0], sizes = [8, 32], strides = [1, 1]} : vector<8x128xf32> to vector<8x32xf32>
    %144 = vector.extract_strided_slice %142 {offsets = [0, 32], sizes = [8, 32], strides = [1, 1]} : vector<8x128xf32> to vector<8x32xf32>
    %145 = vector.extract_strided_slice %142 {offsets = [0, 64], sizes = [8, 32], strides = [1, 1]} : vector<8x128xf32> to vector<8x32xf32>
    %146 = vector.extract_strided_slice %142 {offsets = [0, 96], sizes = [8, 32], strides = [1, 1]} : vector<8x128xf32> to vector<8x32xf32>
    %147 = arith.mulf %144, %107 : vector<8x32xf32>
    %148 = arith.mulf %143, %146 : vector<8x32xf32>
    %149 = arith.addf %147, %148 : vector<8x32xf32>
    %150 = math.tanh %149 : vector<8x32xf32>
    %151 = arith.mulf %145, %150 : vector<8x32xf32>
    %152 = arith.truncf %151 : vector<8x32xf32> to vector<8x32xbf16>
    %153 = arith.index_cast %114 : i32 to index
    %c0_45 = arith.constant 0 : index
    %154 = vector.load %arg17[%153, %c0_45] : memref<64x32xbf16, #tpu.memory_space<vmem>>, vector<8x32xbf16>
    tpu.vector_store %arg17[%153, %c0_45], %152 {strides = array<i32>} : memref<64x32xbf16, #tpu.memory_space<vmem>>, vector<8x32xbf16>,
    %c3_i32 = arith.constant 3 : i32
    %c8_i32_46 = arith.constant 8 : i32
    %155 = arith.muli %c3_i32, %c8_i32_46 : i32
    %156 = tpu.assume_multiple %155, 8 : i32
    %157 = arith.index_cast %156 : i32 to index
    %c0_47 = arith.constant 0 : index
    %158 = vector.load %arg16[%157, %c0_47] : memref<64x128xf32, #tpu.memory_space<vmem>>, vector<8x128xf32>
    %159 = arith.truncf %132 : vector<8x32xf32> to vector<8x32xbf16>
    %cst_48 = arith.constant dense<0.000000e+00> : vector<8x128xf32>
    %160 = tpu.matmul %159, %3, %cst_48 {dimension_numbers = #tpu.dot_dimension_numbers<[1], [0], [0], [1], [0, 0, 1, 1], [], []>} : vector<8x32xbf16>, vector<32x128xbf16>, vector<8x128xf32> -> vector<8x128xf32>
    %161 = arith.addf %158, %160 : vector<8x128xf32>
    %162 = arith.mulf %14, %161 : vector<8x128xf32>
    %163 = math.tanh %162 : vector<8x128xf32>
    %164 = arith.mulf %14, %163 : vector<8x128xf32>
    %165 = arith.addf %164, %17 : vector<8x128xf32>
    %166 = vector.extract_strided_slice %165 {offsets = [0, 0], sizes = [8, 32], strides = [1, 1]} : vector<8x128xf32> to vector<8x32xf32>
    %167 = vector.extract_strided_slice %165 {offsets = [0, 32], sizes = [8, 32], strides = [1, 1]} : vector<8x128xf32> to vector<8x32xf32>
    %168 = vector.extract_strided_slice %165 {offsets = [0, 64], sizes = [8, 32], strides = [1, 1]} : vector<8x128xf32> to vector<8x32xf32>
    %169 = vector.extract_strided_slice %165 {offsets = [0, 96], sizes = [8, 32], strides = [1, 1]} : vector<8x128xf32> to vector<8x32xf32>
    %170 = arith.mulf %167, %130 : vector<8x32xf32>
    %171 = arith.mulf %166, %169 : vector<8x32xf32>
    %172 = arith.addf %170, %171 : vector<8x32xf32>
    %173 = math.tanh %172 : vector<8x32xf32>
    %174 = arith.mulf %168, %173 : vector<8x32xf32>
    %175 = arith.truncf %174 : vector<8x32xf32> to vector<8x32xbf16>
    %cst_49 = arith.constant dense<0.000000e+00> : vector<8x128xf32>
    %176 = tpu.matmul %175, %4, %cst_49 {dimension_numbers = #tpu.dot_dimension_numbers<[1], [0], [0], [1], [0, 0, 1, 1], [], []>} : vector<8x32xbf16>, vector<32x128xbf16>, vector<8x128xf32> -> vector<8x128xf32>
    %177 = arith.addf %8, %176 : vector<8x128xf32>
    %178 = arith.truncf %151 : vector<8x32xf32> to vector<8x32xbf16>
    %cst_50 = arith.constant dense<0.000000e+00> : vector<8x128xf32>
    %179 = tpu.matmul %178, %5, %cst_50 {dimension_numbers = #tpu.dot_dimension_numbers<[1], [0], [0], [1], [0, 0, 1, 1], [], []>} : vector<8x32xbf16>, vector<32x128xbf16>, vector<8x128xf32> -> vector<8x128xf32>
    %180 = arith.addf %177, %179 : vector<8x128xf32>
    %181 = arith.mulf %14, %180 : vector<8x128xf32>
    %182 = math.tanh %181 : vector<8x128xf32>
    %183 = arith.mulf %14, %182 : vector<8x128xf32>
    %184 = arith.addf %183, %17 : vector<8x128xf32>
    %185 = vector.extract_strided_slice %184 {offsets = [0, 0], sizes = [8, 32], strides = [1, 1]} : vector<8x128xf32> to vector<8x32xf32>
    %186 = vector.extract_strided_slice %184 {offsets = [0, 32], sizes = [8, 32], strides = [1, 1]} : vector<8x128xf32> to vector<8x32xf32>
    %187 = vector.extract_strided_slice %184 {offsets = [0, 64], sizes = [8, 32], strides = [1, 1]} : vector<8x128xf32> to vector<8x32xf32>
    %188 = vector.extract_strided_slice %184 {offsets = [0, 96], sizes = [8, 32], strides = [1, 1]} : vector<8x128xf32> to vector<8x32xf32>
    %189 = arith.mulf %186, %149 : vector<8x32xf32>
    %190 = arith.mulf %185, %188 : vector<8x32xf32>
    %191 = arith.addf %189, %190 : vector<8x32xf32>
    %192 = math.tanh %191 : vector<8x32xf32>
    %193 = arith.mulf %187, %192 : vector<8x32xf32>
    %194 = arith.truncf %193 : vector<8x32xf32> to vector<8x32xbf16>
    %195 = arith.index_cast %156 : i32 to index
    %c0_51 = arith.constant 0 : index
    %196 = vector.load %arg17[%195, %c0_51] : memref<64x32xbf16, #tpu.memory_space<vmem>>, vector<8x32xbf16>
    tpu.vector_store %arg17[%195, %c0_51], %194 {strides = array<i32>} : memref<64x32xbf16, #tpu.memory_space<vmem>>, vector<8x32xbf16>,
    %c4_i32 = arith.constant 4 : i32
    %c8_i32_52 = arith.constant 8 : i32
    %197 = arith.muli %c4_i32, %c8_i32_52 : i32
    %198 = tpu.assume_multiple %197, 8 : i32
    %199 = arith.index_cast %198 : i32 to index
    %c0_53 = arith.constant 0 : index
    %200 = vector.load %arg16[%199, %c0_53] : memref<64x128xf32, #tpu.memory_space<vmem>>, vector<8x128xf32>
    %201 = arith.truncf %174 : vector<8x32xf32> to vector<8x32xbf16>
    %cst_54 = arith.constant dense<0.000000e+00> : vector<8x128xf32>
    %202 = tpu.matmul %201, %3, %cst_54 {dimension_numbers = #tpu.dot_dimension_numbers<[1], [0], [0], [1], [0, 0, 1, 1], [], []>} : vector<8x32xbf16>, vector<32x128xbf16>, vector<8x128xf32> -> vector<8x128xf32>
    %203 = arith.addf %200, %202 : vector<8x128xf32>
    %204 = arith.mulf %14, %203 : vector<8x128xf32>
    %205 = math.tanh %204 : vector<8x128xf32>
    %206 = arith.mulf %14, %205 : vector<8x128xf32>
    %207 = arith.addf %206, %17 : vector<8x128xf32>
    %208 = vector.extract_strided_slice %207 {offsets = [0, 0], sizes = [8, 32], strides = [1, 1]} : vector<8x128xf32> to vector<8x32xf32>
    %209 = vector.extract_strided_slice %207 {offsets = [0, 32], sizes = [8, 32], strides = [1, 1]} : vector<8x128xf32> to vector<8x32xf32>
    %210 = vector.extract_strided_slice %207 {offsets = [0, 64], sizes = [8, 32], strides = [1, 1]} : vector<8x128xf32> to vector<8x32xf32>
    %211 = vector.extract_strided_slice %207 {offsets = [0, 96], sizes = [8, 32], strides = [1, 1]} : vector<8x128xf32> to vector<8x32xf32>
    %212 = arith.mulf %209, %172 : vector<8x32xf32>
    %213 = arith.mulf %208, %211 : vector<8x32xf32>
    %214 = arith.addf %212, %213 : vector<8x32xf32>
    %215 = math.tanh %214 : vector<8x32xf32>
    %216 = arith.mulf %210, %215 : vector<8x32xf32>
    %217 = arith.truncf %216 : vector<8x32xf32> to vector<8x32xbf16>
    %cst_55 = arith.constant dense<0.000000e+00> : vector<8x128xf32>
    %218 = tpu.matmul %217, %4, %cst_55 {dimension_numbers = #tpu.dot_dimension_numbers<[1], [0], [0], [1], [0, 0, 1, 1], [], []>} : vector<8x32xbf16>, vector<32x128xbf16>, vector<8x128xf32> -> vector<8x128xf32>
    %219 = arith.addf %8, %218 : vector<8x128xf32>
    %220 = arith.truncf %193 : vector<8x32xf32> to vector<8x32xbf16>
    %cst_56 = arith.constant dense<0.000000e+00> : vector<8x128xf32>
    %221 = tpu.matmul %220, %5, %cst_56 {dimension_numbers = #tpu.dot_dimension_numbers<[1], [0], [0], [1], [0, 0, 1, 1], [], []>} : vector<8x32xbf16>, vector<32x128xbf16>, vector<8x128xf32> -> vector<8x128xf32>
    %222 = arith.addf %219, %221 : vector<8x128xf32>
    %223 = arith.mulf %14, %222 : vector<8x128xf32>
    %224 = math.tanh %223 : vector<8x128xf32>
    %225 = arith.mulf %14, %224 : vector<8x128xf32>
    %226 = arith.addf %225, %17 : vector<8x128xf32>
    %227 = vector.extract_strided_slice %226 {offsets = [0, 0], sizes = [8, 32], strides = [1, 1]} : vector<8x128xf32> to vector<8x32xf32>
    %228 = vector.extract_strided_slice %226 {offsets = [0, 32], sizes = [8, 32], strides = [1, 1]} : vector<8x128xf32> to vector<8x32xf32>
    %229 = vector.extract_strided_slice %226 {offsets = [0, 64], sizes = [8, 32], strides = [1, 1]} : vector<8x128xf32> to vector<8x32xf32>
    %230 = vector.extract_strided_slice %226 {offsets = [0, 96], sizes = [8, 32], strides = [1, 1]} : vector<8x128xf32> to vector<8x32xf32>
    %231 = arith.mulf %228, %191 : vector<8x32xf32>
    %232 = arith.mulf %227, %230 : vector<8x32xf32>
    %233 = arith.addf %231, %232 : vector<8x32xf32>
    %234 = math.tanh %233 : vector<8x32xf32>
    %235 = arith.mulf %229, %234 : vector<8x32xf32>
    %236 = arith.truncf %235 : vector<8x32xf32> to vector<8x32xbf16>
    %237 = arith.index_cast %198 : i32 to index
    %c0_57 = arith.constant 0 : index
    %238 = vector.load %arg17[%237, %c0_57] : memref<64x32xbf16, #tpu.memory_space<vmem>>, vector<8x32xbf16>
    tpu.vector_store %arg17[%237, %c0_57], %236 {strides = array<i32>} : memref<64x32xbf16, #tpu.memory_space<vmem>>, vector<8x32xbf16>,
    %c5_i32 = arith.constant 5 : i32
    %c8_i32_58 = arith.constant 8 : i32
    %239 = arith.muli %c5_i32, %c8_i32_58 : i32
    %240 = tpu.assume_multiple %239, 8 : i32
    %241 = arith.index_cast %240 : i32 to index
    %c0_59 = arith.constant 0 : index
    %242 = vector.load %arg16[%241, %c0_59] : memref<64x128xf32, #tpu.memory_space<vmem>>, vector<8x128xf32>
    %243 = arith.truncf %216 : vector<8x32xf32> to vector<8x32xbf16>
    %cst_60 = arith.constant dense<0.000000e+00> : vector<8x128xf32>
    %244 = tpu.matmul %243, %3, %cst_60 {dimension_numbers = #tpu.dot_dimension_numbers<[1], [0], [0], [1], [0, 0, 1, 1], [], []>} : vector<8x32xbf16>, vector<32x128xbf16>, vector<8x128xf32> -> vector<8x128xf32>
    %245 = arith.addf %242, %244 : vector<8x128xf32>
    %246 = arith.mulf %14, %245 : vector<8x128xf32>
    %247 = math.tanh %246 : vector<8x128xf32>
    %248 = arith.mulf %14, %247 : vector<8x128xf32>
    %249 = arith.addf %248, %17 : vector<8x128xf32>
    %250 = vector.extract_strided_slice %249 {offsets = [0, 0], sizes = [8, 32], strides = [1, 1]} : vector<8x128xf32> to vector<8x32xf32>
    %251 = vector.extract_strided_slice %249 {offsets = [0, 32], sizes = [8, 32], strides = [1, 1]} : vector<8x128xf32> to vector<8x32xf32>
    %252 = vector.extract_strided_slice %249 {offsets = [0, 64], sizes = [8, 32], strides = [1, 1]} : vector<8x128xf32> to vector<8x32xf32>
    %253 = vector.extract_strided_slice %249 {offsets = [0, 96], sizes = [8, 32], strides = [1, 1]} : vector<8x128xf32> to vector<8x32xf32>
    %254 = arith.mulf %251, %214 : vector<8x32xf32>
    %255 = arith.mulf %250, %253 : vector<8x32xf32>
    %256 = arith.addf %254, %255 : vector<8x32xf32>
    %257 = math.tanh %256 : vector<8x32xf32>
    %258 = arith.mulf %252, %257 : vector<8x32xf32>
    %259 = arith.truncf %258 : vector<8x32xf32> to vector<8x32xbf16>
    %cst_61 = arith.constant dense<0.000000e+00> : vector<8x128xf32>
    %260 = tpu.matmul %259, %4, %cst_61 {dimension_numbers = #tpu.dot_dimension_numbers<[1], [0], [0], [1], [0, 0, 1, 1], [], []>} : vector<8x32xbf16>, vector<32x128xbf16>, vector<8x128xf32> -> vector<8x128xf32>
    %261 = arith.addf %8, %260 : vector<8x128xf32>
    %262 = arith.truncf %235 : vector<8x32xf32> to vector<8x32xbf16>
    %cst_62 = arith.constant dense<0.000000e+00> : vector<8x128xf32>
    %263 = tpu.matmul %262, %5, %cst_62 {dimension_numbers = #tpu.dot_dimension_numbers<[1], [0], [0], [1], [0, 0, 1, 1], [], []>} : vector<8x32xbf16>, vector<32x128xbf16>, vector<8x128xf32> -> vector<8x128xf32>
    %264 = arith.addf %261, %263 : vector<8x128xf32>
    %265 = arith.mulf %14, %264 : vector<8x128xf32>
    %266 = math.tanh %265 : vector<8x128xf32>
    %267 = arith.mulf %14, %266 : vector<8x128xf32>
    %268 = arith.addf %267, %17 : vector<8x128xf32>
    %269 = vector.extract_strided_slice %268 {offsets = [0, 0], sizes = [8, 32], strides = [1, 1]} : vector<8x128xf32> to vector<8x32xf32>
    %270 = vector.extract_strided_slice %268 {offsets = [0, 32], sizes = [8, 32], strides = [1, 1]} : vector<8x128xf32> to vector<8x32xf32>
    %271 = vector.extract_strided_slice %268 {offsets = [0, 64], sizes = [8, 32], strides = [1, 1]} : vector<8x128xf32> to vector<8x32xf32>
    %272 = vector.extract_strided_slice %268 {offsets = [0, 96], sizes = [8, 32], strides = [1, 1]} : vector<8x128xf32> to vector<8x32xf32>
    %273 = arith.mulf %270, %233 : vector<8x32xf32>
    %274 = arith.mulf %269, %272 : vector<8x32xf32>
    %275 = arith.addf %273, %274 : vector<8x32xf32>
    %276 = math.tanh %275 : vector<8x32xf32>
    %277 = arith.mulf %271, %276 : vector<8x32xf32>
    %278 = arith.truncf %277 : vector<8x32xf32> to vector<8x32xbf16>
    %279 = arith.index_cast %240 : i32 to index
    %c0_63 = arith.constant 0 : index
    %280 = vector.load %arg17[%279, %c0_63] : memref<64x32xbf16, #tpu.memory_space<vmem>>, vector<8x32xbf16>
    tpu.vector_store %arg17[%279, %c0_63], %278 {strides = array<i32>} : memref<64x32xbf16, #tpu.memory_space<vmem>>, vector<8x32xbf16>,
    %c6_i32 = arith.constant 6 : i32
    %c8_i32_64 = arith.constant 8 : i32
    %281 = arith.muli %c6_i32, %c8_i32_64 : i32
    %282 = tpu.assume_multiple %281, 8 : i32
    %283 = arith.index_cast %282 : i32 to index
    %c0_65 = arith.constant 0 : index
    %284 = vector.load %arg16[%283, %c0_65] : memref<64x128xf32, #tpu.memory_space<vmem>>, vector<8x128xf32>
    %285 = arith.truncf %258 : vector<8x32xf32> to vector<8x32xbf16>
    %cst_66 = arith.constant dense<0.000000e+00> : vector<8x128xf32>
    %286 = tpu.matmul %285, %3, %cst_66 {dimension_numbers = #tpu.dot_dimension_numbers<[1], [0], [0], [1], [0, 0, 1, 1], [], []>} : vector<8x32xbf16>, vector<32x128xbf16>, vector<8x128xf32> -> vector<8x128xf32>
    %287 = arith.addf %284, %286 : vector<8x128xf32>
    %288 = arith.mulf %14, %287 : vector<8x128xf32>
    %289 = math.tanh %288 : vector<8x128xf32>
    %290 = arith.mulf %14, %289 : vector<8x128xf32>
    %291 = arith.addf %290, %17 : vector<8x128xf32>
    %292 = vector.extract_strided_slice %291 {offsets = [0, 0], sizes = [8, 32], strides = [1, 1]} : vector<8x128xf32> to vector<8x32xf32>
    %293 = vector.extract_strided_slice %291 {offsets = [0, 32], sizes = [8, 32], strides = [1, 1]} : vector<8x128xf32> to vector<8x32xf32>
    %294 = vector.extract_strided_slice %291 {offsets = [0, 64], sizes = [8, 32], strides = [1, 1]} : vector<8x128xf32> to vector<8x32xf32>
    %295 = vector.extract_strided_slice %291 {offsets = [0, 96], sizes = [8, 32], strides = [1, 1]} : vector<8x128xf32> to vector<8x32xf32>
    %296 = arith.mulf %293, %256 : vector<8x32xf32>
    %297 = arith.mulf %292, %295 : vector<8x32xf32>
    %298 = arith.addf %296, %297 : vector<8x32xf32>
    %299 = math.tanh %298 : vector<8x32xf32>
    %300 = arith.mulf %294, %299 : vector<8x32xf32>
    %301 = arith.truncf %300 : vector<8x32xf32> to vector<8x32xbf16>
    %cst_67 = arith.constant dense<0.000000e+00> : vector<8x128xf32>
    %302 = tpu.matmul %301, %4, %cst_67 {dimension_numbers = #tpu.dot_dimension_numbers<[1], [0], [0], [1], [0, 0, 1, 1], [], []>} : vector<8x32xbf16>, vector<32x128xbf16>, vector<8x128xf32> -> vector<8x128xf32>
    %303 = arith.addf %8, %302 : vector<8x128xf32>
    %304 = arith.truncf %277 : vector<8x32xf32> to vector<8x32xbf16>
    %cst_68 = arith.constant dense<0.000000e+00> : vector<8x128xf32>
    %305 = tpu.matmul %304, %5, %cst_68 {dimension_numbers = #tpu.dot_dimension_numbers<[1], [0], [0], [1], [0, 0, 1, 1], [], []>} : vector<8x32xbf16>, vector<32x128xbf16>, vector<8x128xf32> -> vector<8x128xf32>
    %306 = arith.addf %303, %305 : vector<8x128xf32>
    %307 = arith.mulf %14, %306 : vector<8x128xf32>
    %308 = math.tanh %307 : vector<8x128xf32>
    %309 = arith.mulf %14, %308 : vector<8x128xf32>
    %310 = arith.addf %309, %17 : vector<8x128xf32>
    %311 = vector.extract_strided_slice %310 {offsets = [0, 0], sizes = [8, 32], strides = [1, 1]} : vector<8x128xf32> to vector<8x32xf32>
    %312 = vector.extract_strided_slice %310 {offsets = [0, 32], sizes = [8, 32], strides = [1, 1]} : vector<8x128xf32> to vector<8x32xf32>
    %313 = vector.extract_strided_slice %310 {offsets = [0, 64], sizes = [8, 32], strides = [1, 1]} : vector<8x128xf32> to vector<8x32xf32>
    %314 = vector.extract_strided_slice %310 {offsets = [0, 96], sizes = [8, 32], strides = [1, 1]} : vector<8x128xf32> to vector<8x32xf32>
    %315 = arith.mulf %312, %275 : vector<8x32xf32>
    %316 = arith.mulf %311, %314 : vector<8x32xf32>
    %317 = arith.addf %315, %316 : vector<8x32xf32>
    %318 = math.tanh %317 : vector<8x32xf32>
    %319 = arith.mulf %313, %318 : vector<8x32xf32>
    %320 = arith.truncf %319 : vector<8x32xf32> to vector<8x32xbf16>
    %321 = arith.index_cast %282 : i32 to index
    %c0_69 = arith.constant 0 : index
    %322 = vector.load %arg17[%321, %c0_69] : memref<64x32xbf16, #tpu.memory_space<vmem>>, vector<8x32xbf16>
    tpu.vector_store %arg17[%321, %c0_69], %320 {strides = array<i32>} : memref<64x32xbf16, #tpu.memory_space<vmem>>, vector<8x32xbf16>,
    %c7_i32 = arith.constant 7 : i32
    %c8_i32_70 = arith.constant 8 : i32
    %323 = arith.muli %c7_i32, %c8_i32_70 : i32
    %324 = tpu.assume_multiple %323, 8 : i32
    %325 = arith.index_cast %324 : i32 to index
    %c0_71 = arith.constant 0 : index
    %326 = vector.load %arg16[%325, %c0_71] : memref<64x128xf32, #tpu.memory_space<vmem>>, vector<8x128xf32>
    %327 = arith.truncf %300 : vector<8x32xf32> to vector<8x32xbf16>
    %cst_72 = arith.constant dense<0.000000e+00> : vector<8x128xf32>
    %328 = tpu.matmul %327, %3, %cst_72 {dimension_numbers = #tpu.dot_dimension_numbers<[1], [0], [0], [1], [0, 0, 1, 1], [], []>} : vector<8x32xbf16>, vector<32x128xbf16>, vector<8x128xf32> -> vector<8x128xf32>
    %329 = arith.addf %326, %328 : vector<8x128xf32>
    %330 = arith.mulf %14, %329 : vector<8x128xf32>
    %331 = math.tanh %330 : vector<8x128xf32>
    %332 = arith.mulf %14, %331 : vector<8x128xf32>
    %333 = arith.addf %332, %17 : vector<8x128xf32>
    %334 = vector.extract_strided_slice %333 {offsets = [0, 0], sizes = [8, 32], strides = [1, 1]} : vector<8x128xf32> to vector<8x32xf32>
    %335 = vector.extract_strided_slice %333 {offsets = [0, 32], sizes = [8, 32], strides = [1, 1]} : vector<8x128xf32> to vector<8x32xf32>
    %336 = vector.extract_strided_slice %333 {offsets = [0, 64], sizes = [8, 32], strides = [1, 1]} : vector<8x128xf32> to vector<8x32xf32>
    %337 = vector.extract_strided_slice %333 {offsets = [0, 96], sizes = [8, 32], strides = [1, 1]} : vector<8x128xf32> to vector<8x32xf32>
    %338 = arith.mulf %335, %298 : vector<8x32xf32>
    %339 = arith.mulf %334, %337 : vector<8x32xf32>
    %340 = arith.addf %338, %339 : vector<8x32xf32>
    %341 = math.tanh %340 : vector<8x32xf32>
    %342 = arith.mulf %336, %341 : vector<8x32xf32>
    %343 = arith.truncf %342 : vector<8x32xf32> to vector<8x32xbf16>
    %cst_73 = arith.constant dense<0.000000e+00> : vector<8x128xf32>
    %344 = tpu.matmul %343, %4, %cst_73 {dimension_numbers = #tpu.dot_dimension_numbers<[1], [0], [0], [1], [0, 0, 1, 1], [], []>} : vector<8x32xbf16>, vector<32x128xbf16>, vector<8x128xf32> -> vector<8x128xf32>
    %345 = arith.addf %8, %344 : vector<8x128xf32>
    %346 = arith.truncf %319 : vector<8x32xf32> to vector<8x32xbf16>
    %cst_74 = arith.constant dense<0.000000e+00> : vector<8x128xf32>
    %347 = tpu.matmul %346, %5, %cst_74 {dimension_numbers = #tpu.dot_dimension_numbers<[1], [0], [0], [1], [0, 0, 1, 1], [], []>} : vector<8x32xbf16>, vector<32x128xbf16>, vector<8x128xf32> -> vector<8x128xf32>
    %348 = arith.addf %345, %347 : vector<8x128xf32>
    %349 = arith.mulf %14, %348 : vector<8x128xf32>
    %350 = math.tanh %349 : vector<8x128xf32>
    %351 = arith.mulf %14, %350 : vector<8x128xf32>
    %352 = arith.addf %351, %17 : vector<8x128xf32>
    %353 = vector.extract_strided_slice %352 {offsets = [0, 0], sizes = [8, 32], strides = [1, 1]} : vector<8x128xf32> to vector<8x32xf32>
    %354 = vector.extract_strided_slice %352 {offsets = [0, 32], sizes = [8, 32], strides = [1, 1]} : vector<8x128xf32> to vector<8x32xf32>
    %355 = vector.extract_strided_slice %352 {offsets = [0, 64], sizes = [8, 32], strides = [1, 1]} : vector<8x128xf32> to vector<8x32xf32>
    %356 = vector.extract_strided_slice %352 {offsets = [0, 96], sizes = [8, 32], strides = [1, 1]} : vector<8x128xf32> to vector<8x32xf32>
    %357 = arith.mulf %354, %317 : vector<8x32xf32>
    %358 = arith.mulf %353, %356 : vector<8x32xf32>
    %359 = arith.addf %357, %358 : vector<8x32xf32>
    %360 = math.tanh %359 : vector<8x32xf32>
    %361 = arith.mulf %355, %360 : vector<8x32xf32>
    %362 = arith.truncf %361 : vector<8x32xf32> to vector<8x32xbf16>
    %363 = arith.index_cast %324 : i32 to index
    %c0_75 = arith.constant 0 : index
    %364 = vector.load %arg17[%363, %c0_75] : memref<64x32xbf16, #tpu.memory_space<vmem>>, vector<8x32xbf16>
    tpu.vector_store %arg17[%363, %c0_75], %362 {strides = array<i32>} : memref<64x32xbf16, #tpu.memory_space<vmem>>, vector<8x32xbf16>,
    %c8_i32_76 = arith.constant 8 : i32
    %c0_77 = arith.constant 0 : index
    %c0_78 = arith.constant 0 : index
    %365 = vector.load %arg12[%c0_77, %c0_78] : memref<8x32xf32, #tpu.memory_space<vmem>>, vector<8x32xf32>
    tpu.vector_store %arg12[%c0_77, %c0_78], %342 {strides = array<i32>} : memref<8x32xf32, #tpu.memory_space<vmem>>, vector<8x32xf32>,
    %c0_79 = arith.constant 0 : index
    %c0_80 = arith.constant 0 : index
    %366 = vector.load %arg13[%c0_79, %c0_80] : memref<8x32xf32, #tpu.memory_space<vmem>>, vector<8x32xf32>
    tpu.vector_store %arg13[%c0_79, %c0_80], %340 {strides = array<i32>} : memref<8x32xf32, #tpu.memory_space<vmem>>, vector<8x32xf32>,
    %c0_81 = arith.constant 0 : index
    %c0_82 = arith.constant 0 : index
    %367 = vector.load %arg14[%c0_81, %c0_82] : memref<8x32xf32, #tpu.memory_space<vmem>>, vector<8x32xf32>
    tpu.vector_store %arg14[%c0_81, %c0_82], %361 {strides = array<i32>} : memref<8x32xf32, #tpu.memory_space<vmem>>, vector<8x32xf32>,
    %c0_83 = arith.constant 0 : index
    %c0_84 = arith.constant 0 : index
    %368 = vector.load %arg15[%c0_83, %c0_84] : memref<8x32xf32, #tpu.memory_space<vmem>>, vector<8x32xf32>
    tpu.vector_store %arg15[%c0_83, %c0_84], %359 {strides = array<i32>} : memref<8x32xf32, #tpu.memory_space<vmem>>, vector<8x32xf32>,
    %c0_85 = arith.constant 0 : index
    %c0_86 = arith.constant 0 : index
    %369 = vector.load %arg17[%c0_85, %c0_86] : memref<64x32xbf16, #tpu.memory_space<vmem>>, vector<64x32xbf16>
    %c0_87 = arith.constant 0 : index
    %c0_88 = arith.constant 0 : index
    %370 = vector.load %arg9[%c0_87, %c0_88] : memref<32x128xbf16, #tpu.memory_space<vmem>>, vector<32x128xbf16>
    %cst_89 = arith.constant dense<0.000000e+00> : vector<64x128xf32>
    %371 = tpu.matmul %369, %370, %cst_89 {dimension_numbers = #tpu.dot_dimension_numbers<[1], [0], [0], [1], [0, 0, 1, 1], [], []>} : vector<64x32xbf16>, vector<32x128xbf16>, vector<64x128xf32> -> vector<64x128xf32>
    %c0_90 = arith.constant 0 : index
    %c0_91 = arith.constant 0 : index
    %372 = vector.load %arg10[%c0_90, %c0_91] : memref<1x128xf32, #tpu.memory_space<vmem>>, vector<1x128xf32>
    %373 = vector.broadcast %372 : vector<1x128xf32> to vector<64x128xf32>
    %374 = arith.addf %371, %373 : vector<64x128xf32>
    %375 = math.tanh %374 : vector<64x128xf32>
    %c0_92 = arith.constant 0 : index
    %c0_93 = arith.constant 0 : index
    %376 = vector.load %arg11[%c0_92, %c0_93] : memref<64x128xf32, #tpu.memory_space<vmem>>, vector<64x128xf32>
    tpu.vector_store %arg11[%c0_92, %c0_93], %375 {strides = array<i32>} : memref<64x128xf32, #tpu.memory_space<vmem>>, vector<64x128xf32>,
    return
  }
  func.func @transform_0(%arg0: i32, %arg1: i32) -> (i32, i32) {
    %c1_i32 = arith.constant 1 : i32
    %0 = arith.muli %arg0, %c1_i32 : i32
    %1 = arith.addi %0, %arg1 : i32
    %c0_i32 = arith.constant 0 : i32
    %c0_i32_0 = arith.constant 0 : i32
    return %1, %c0_i32 : i32, i32
  }
  func.func @transform_1(%arg0: i32, %arg1: i32) -> (i32, i32) {
    %c0_i32 = arith.constant 0 : i32
    %c0_i32_0 = arith.constant 0 : i32
    %c0_i32_1 = arith.constant 0 : i32
    return %c0_i32, %c0_i32_0 : i32, i32
  }
  func.func @transform_2(%arg0: i32, %arg1: i32) -> (i32, i32) {
    %c0_i32 = arith.constant 0 : i32
    %c0_i32_0 = arith.constant 0 : i32
    %c0_i32_1 = arith.constant 0 : i32
    return %c0_i32, %c0_i32_0 : i32, i32
  }
  func.func @transform_3(%arg0: i32, %arg1: i32) -> (i32, i32) {
    %c0_i32 = arith.constant 0 : i32
    %c0_i32_0 = arith.constant 0 : i32
    %c0_i32_1 = arith.constant 0 : i32
    return %c0_i32, %c0_i32_0 : i32, i32
  }
  func.func @transform_4(%arg0: i32, %arg1: i32) -> (i32, i32) {
    %c0_i32 = arith.constant 0 : i32
    %c0_i32_0 = arith.constant 0 : i32
    %c0_i32_1 = arith.constant 0 : i32
    return %c0_i32, %c0_i32_0 : i32, i32
  }
  func.func @transform_5(%arg0: i32, %arg1: i32) -> (i32, i32) {
    %c0_i32 = arith.constant 0 : i32
    %c0_i32_0 = arith.constant 0 : i32
    %c0_i32_1 = arith.constant 0 : i32
    return %c0_i32, %c0_i32_0 : i32, i32
  }
  func.func @transform_6(%arg0: i32, %arg1: i32) -> (i32, i32) {
    %c0_i32 = arith.constant 0 : i32
    %c0_i32_0 = arith.constant 0 : i32
    %c0_i32_1 = arith.constant 0 : i32
    return %c0_i32, %c0_i32_0 : i32, i32
  }
  func.func @transform_7(%arg0: i32, %arg1: i32) -> (i32, i32) {
    %c0_i32 = arith.constant 0 : i32
    %c0_i32_0 = arith.constant 0 : i32
    %c0_i32_1 = arith.constant 0 : i32
    return %c0_i32, %c0_i32_0 : i32, i32
  }
  func.func @transform_8(%arg0: i32, %arg1: i32) -> (i32, i32) {
    %c0_i32 = arith.constant 0 : i32
    %c0_i32_0 = arith.constant 0 : i32
    %c0_i32_1 = arith.constant 0 : i32
    return %c0_i32, %c0_i32_0 : i32, i32
  }
  func.func @transform_9(%arg0: i32, %arg1: i32) -> (i32, i32) {
    %c1_i32 = arith.constant 1 : i32
    %0 = arith.muli %arg0, %c1_i32 : i32
    %1 = arith.addi %0, %arg1 : i32
    %c0_i32 = arith.constant 0 : i32
    %c0_i32_0 = arith.constant 0 : i32
    return %1, %c0_i32 : i32, i32
  }
}

</mosaic_0001>

<llo_original>
// kernel: tpu_custom_call.1
$region0: #{tpu_custom_call.1}
  #allocation0 [shape = 'u32[]', space=smem, size = 0x4, offset = 0x4, fixed_abs, tag = 'smem constant byte address 0x4 - core index']
  #allocation1 [shape = 'u32[72,128]{1,0:T(1,128)}', space=vmem, size = 0x9000, scoped, tag = 'internal scratch']
  #allocation2 [shape = 'f32[8,32]{1,0:T(8,128)}', space=vmem, size = 0x1000, scoped, tag = 'scratch operand']
  #allocation3 [shape = 'f32[8,32]{1,0:T(8,128)}', space=vmem, size = 0x1000, scoped, tag = 'scratch operand']
  #allocation4 [shape = 'f32[8,32]{1,0:T(8,128)}', space=vmem, size = 0x1000, scoped, tag = 'scratch operand']
  #allocation5 [shape = 'f32[8,32]{1,0:T(8,128)}', space=vmem, size = 0x1000, scoped, tag = 'scratch operand']
  #allocation6 [shape = 'f32[64,128]{1,0:T(8,128)}', space=vmem, size = 0x8000, scoped, tag = 'scratch operand']
  #allocation7 [shape = 'bf16[64,32]{1,0:T(8,128)(2,1)}', space=vmem, size = 0x4000, scoped, tag = 'scratch operand']
  %s0 = inlined_call_operand.hbm [shape: bf16[64,128], index: 0, kind: input, shape index: {}]
  %s1 = inlined_call_operand.hbm [shape: bf16[128,128], index: 1, kind: input, shape index: {}]
  %s2 = inlined_call_operand.hbm [shape: bf16[32,128], index: 2, kind: input, shape index: {}]
  %s3 = inlined_call_operand.vmem [shape: f32[1,128], index: 3, kind: input, shape index: {}]
  %s4 = inlined_call_operand.hbm [shape: bf16[32,128], index: 4, kind: input, shape index: {}]
  %s5 = inlined_call_operand.hbm [shape: bf16[32,128], index: 5, kind: input, shape index: {}]
  %s6 = inlined_call_operand.vmem [shape: f32[1,128], index: 6, kind: input, shape index: {}]
  %s7 = inlined_call_operand.hbm [shape: bf16[32,128], index: 7, kind: input, shape index: {}]
  %s8 = inlined_call_operand.vmem [shape: f32[1,128], index: 8, kind: input, shape index: {}]
  %s9 = inlined_call_operand.hbm [shape: f32[64,128], index: 9, kind: output, shape index: {}]
  %s10 = sld [smem:[#allocation0]]
  $region74: #{tpu_custom_call.1} parent=0
    _
  %s12 = ssub.s32 1, %s10
  %s13 = scalar_select 0, %s12, %s10
  $region1: #{tpu_custom_call.1} parent=0
    #allocation8 [shape = 'u8[16384]{0}', space=vmem, size = 0x4000, scoped, tag = 'input window, operand 0, single buffered']
    #allocation9 [shape = 's32[1]{0}', space=sflag, size = 0x4, scoped, tag = 'scoped memory for tpu_custom_call.1']
    #allocation10 [shape = 's32[1]{0}', space=sflag, size = 0x4, scoped, tag = 'scoped memory for tpu_custom_call.1']
    #allocation11 [shape = 'u8[32768]{0}', space=vmem, size = 0x8000, scoped, tag = 'input window, operand 1, single buffered']
    #allocation12 [shape = 's32[1]{0}', space=sflag, size = 0x4, scoped, tag = 'scoped memory for tpu_custom_call.1']
    #allocation13 [shape = 'u8[8192]{0}', space=vmem, size = 0x2000, scoped, tag = 'input window, operand 2, single buffered']
    #allocation14 [shape = 'u8[8192]{0}', space=vmem, size = 0x2000, scoped, tag = 'input window, operand 4, single buffered']
    #allocation15 [shape = 's32[1]{0}', space=sflag, size = 0x4, scoped, tag = 'scoped memory for tpu_custom_call.1']
    #allocation16 [shape = 'u8[8192]{0}', space=vmem, size = 0x2000, scoped, tag = 'input window, operand 5, single buffered']
    #allocation17 [shape = 'u8[8192]{0}', space=vmem, size = 0x2000, scoped, tag = 'input window, operand 7, single buffered']
    #allocation18 [shape = 's32[1]{0}', space=sflag, size = 0x4, scoped, tag = 'scoped memory for tpu_custom_call.1']
    #allocation19 [shape = 'u8[32768]{0}', space=vmem, size = 0x8000, scoped, tag = 'output window, operand 0, single buffered']
    %14 = vsyncpa [#allocation9], 0
    %15 = vsyncpa [#allocation12], 0
    %16 = vsyncpa [#allocation15], 0
    %17 = vsyncpa [#allocation18], 0
    %18 = vsyncpa [#allocation10], 0
    // Predicated region
    $region2: #{tpu_custom_call.1} parent=1 // pred_check
      _
    $region3: #{tpu_custom_call.1} parent=1 // pred_check_branch
      %20 = sbr.rel (0) target = $region5
    $region4: #{tpu_custom_call.1} parent=1 // pred_region
      %s21 = sadd.s32 0, 0
      %s22 = smul.u32 8, %s21
      %24 = vsyncadd [#allocation9], 0
      %s25 = smul.addr %s22, 4
      %s26 = scalar_lea.hbm %s0, %s25
      %s27 = sshll.u32 %s26, 4
      %s28 = int_to_ptr.hbm [resolvable:$true] %s27
      %s29 = sshll.u32 [#allocation8], 4
      %s30 = int_to_ptr.vmem [resolvable:$true] %s29
      %35 = dma.hbm_to_vmem [thread:$0]  %s28, 512, %s30, [#allocation9], 64, 64, 4
    $region5: #{tpu_custom_call.1} parent=1 // pred_fallthru
      _
    // Predicated region
    $region6: #{tpu_custom_call.1} parent=1 // pred_check
      _
    $region7: #{tpu_custom_call.1} parent=1 // pred_check_branch
      %37 = sbr.rel (0) target = $region9
    $region8: #{tpu_custom_call.1} parent=1 // pred_region
      %39 = vsyncadd [#allocation12], 0
      %s40 = sshll.u32 %s1, 4
      %s41 = int_to_ptr.hbm [resolvable:$true] %s40
      %s42 = sshll.u32 [#allocation11], 4
      %s43 = int_to_ptr.vmem [resolvable:$true] %s42
      %48 = dma.hbm_to_vmem [thread:$0]  %s41, 1024, %s43, [#allocation12], 64, 64, 4
    $region9: #{tpu_custom_call.1} parent=1 // pred_fallthru
      _
    // Predicated region
    $region10: #{tpu_custom_call.1} parent=1 // pred_check
      _
    $region11: #{tpu_custom_call.1} parent=1 // pred_check_branch
      %50 = sbr.rel (0) target = $region13
    $region12: #{tpu_custom_call.1} parent=1 // pred_region
      %52 = vsyncadd [#allocation12], 0
      %s53 = sshll.u32 %s2, 4
      %s54 = int_to_ptr.hbm [resolvable:$true] %s53
      %s55 = sshll.u32 [#allocation13], 4
      %s56 = int_to_ptr.vmem [resolvable:$true] %s55
      %61 = dma.hbm_to_vmem [thread:$0]  %s54, 256, %s56, [#allocation12], 64, 64, 4
    $region13: #{tpu_custom_call.1} parent=1 // pred_fallthru
      _
    // Predicated region
    $region14: #{tpu_custom_call.1} parent=1 // pred_check
      _
    $region15: #{tpu_custom_call.1} parent=1 // pred_check_branch
      %63 = sbr.rel (0) target = $region17
    $region16: #{tpu_custom_call.1} parent=1 // pred_region
      _
    $region17: #{tpu_custom_call.1} parent=1 // pred_fallthru
      _
    // Predicated region
    $region18: #{tpu_custom_call.1} parent=1 // pred_check
      _
    $region19: #{tpu_custom_call.1} parent=1 // pred_check_branch
      %65 = sbr.rel (0) target = $region21
    $region20: #{tpu_custom_call.1} parent=1 // pred_region
      %67 = vsyncadd [#allocation15], 0
      %s68 = sshll.u32 %s4, 4
      %s69 = int_to_ptr.hbm [resolvable:$true] %s68
      %s70 = sshll.u32 [#allocation14], 4
      %s71 = int_to_ptr.vmem [resolvable:$true] %s70
      %76 = dma.hbm_to_vmem [thread:$0]  %s69, 256, %s71, [#allocation15], 64, 64, 4
    $region21: #{tpu_custom_call.1} parent=1 // pred_fallthru
      _
    // Predicated region
    $region22: #{tpu_custom_call.1} parent=1 // pred_check
      _
    $region23: #{tpu_custom_call.1} parent=1 // pred_check_branch
      %78 = sbr.rel (0) target = $region25
    $region24: #{tpu_custom_call.1} parent=1 // pred_region
      %80 = vsyncadd [#allocation15], 0
      %s81 = sshll.u32 %s5, 4
      %s82 = int_to_ptr.hbm [resolvable:$true] %s81
      %s83 = sshll.u32 [#allocation16], 4
      %s84 = int_to_ptr.vmem [resolvable:$true] %s83
      %89 = dma.hbm_to_vmem [thread:$0]  %s82, 256, %s84, [#allocation15], 64, 64, 4
    $region25: #{tpu_custom_call.1} parent=1 // pred_fallthru
      _
    // Predicated region
    $region26: #{tpu_custom_call.1} parent=1 // pred_check
      _
    $region27: #{tpu_custom_call.1} parent=1 // pred_check_branch
      %91 = sbr.rel (0) target = $region29
    $region28: #{tpu_custom_call.1} parent=1 // pred_region
      _
    $region29: #{tpu_custom_call.1} parent=1 // pred_fallthru
      _
    // Predicated region
    $region30: #{tpu_custom_call.1} parent=1 // pred_check
      _
    $region31: #{tpu_custom_call.1} parent=1 // pred_check_branch
      %93 = sbr.rel (0) target = $region33
    $region32: #{tpu_custom_call.1} parent=1 // pred_region
      %95 = vsyncadd [#allocation18], 0
      %s96 = sshll.u32 %s7, 4
      %s97 = int_to_ptr.hbm [resolvable:$true] %s96
      %s98 = sshll.u32 [#allocation17], 4
      %s99 = int_to_ptr.vmem [resolvable:$true] %s98
      %104 = dma.hbm_to_vmem [thread:$0]  %s97, 256, %s99, [#allocation18], 64, 64, 4
    $region33: #{tpu_custom_call.1} parent=1 // pred_fallthru
      _
    // Predicated region
    $region34: #{tpu_custom_call.1} parent=1 // pred_check
      _
    $region35: #{tpu_custom_call.1} parent=1 // pred_check_branch
      %106 = sbr.rel (0) target = $region37
    $region36: #{tpu_custom_call.1} parent=1 // pred_region
      _
    $region37: #{tpu_custom_call.1} parent=1 // pred_fallthru
      _
    // Predicated region
    $region38: #{tpu_custom_call.1} parent=1 // pred_check
      _
    $region39: #{tpu_custom_call.1} parent=1 // pred_check_branch
      %108 = sbr.rel (0) target = $region41
    $region40: #{tpu_custom_call.1} parent=1 // pred_region
      %110 = dma.done [#allocation9], 512
    $region41: #{tpu_custom_call.1} parent=1 // pred_fallthru
      _
    // Predicated region
    $region42: #{tpu_custom_call.1} parent=1 // pred_check
      _
    $region43: #{tpu_custom_call.1} parent=1 // pred_check_branch
      %112 = sbr.rel (0) target = $region45
    $region44: #{tpu_custom_call.1} parent=1 // pred_region
      %114 = dma.done [#allocation12], 1024
    $region45: #{tpu_custom_call.1} parent=1 // pred_fallthru
      _
    // Predicated region
    $region46: #{tpu_custom_call.1} parent=1 // pred_check
      _
    $region47: #{tpu_custom_call.1} parent=1 // pred_check_branch
      %116 = sbr.rel (0) target = $region49
    $region48: #{tpu_custom_call.1} parent=1 // pred_region
      %118 = dma.done [#allocation12], 256
    $region49: #{tpu_custom_call.1} parent=1 // pred_fallthru
      _
    // Predicated region
    $region50: #{tpu_custom_call.1} parent=1 // pred_check
      _
    $region51: #{tpu_custom_call.1} parent=1 // pred_check_branch
      %120 = sbr.rel (0) target = $region53
    $region52: #{tpu_custom_call.1} parent=1 // pred_region
      %122 = dma.done [#allocation15], 256
    $region53: #{tpu_custom_call.1} parent=1 // pred_fallthru
      _
    // Predicated region
    $region54: #{tpu_custom_call.1} parent=1 // pred_check
      _
    $region55: #{tpu_custom_call.1} parent=1 // pred_check_branch
      %124 = sbr.rel (0) target = $region57
    $region56: #{tpu_custom_call.1} parent=1 // pred_region
      %126 = dma.done [#allocation15], 256
    $region57: #{tpu_custom_call.1} parent=1 // pred_fallthru
      _
    // Predicated region
    $region58: #{tpu_custom_call.1} parent=1 // pred_check
      _
    $region59: #{tpu_custom_call.1} parent=1 // pred_check_branch
      %128 = sbr.rel (0) target = $region61
    $region60: #{tpu_custom_call.1} parent=1 // pred_region
      %130 = dma.done [#allocation18], 256
    $region61: #{tpu_custom_call.1} parent=1 // pred_fallthru
      _
    %s131 = sadd.s32 0, 0
    %s132 = smul.u32 8, %s131
    %s133 = sadd.s32 0, 0
    %s134 = smul.u32 8, %s133
    %p136 = scmp.eq.s32.totalorder 0, 0
    // Predicated region
    $region62: #{tpu_custom_call.1} parent=1 // pred_check
      %p137 = pneg %p136
    $region63: #{tpu_custom_call.1} parent=1 // pred_check_branch
      %139 = sbr.rel (%p137) target = $region65
    $region64: #{tpu_custom_call.1} parent=1 // pred_region
      %vm140 = vcmask 261120
      %141 = vst.msk [vmem:[#allocation2] sm:$0xff] %vm140, 0.0
      %142 = vst.msk [vmem:[#allocation3] sm:$0xff] %vm140, 0.0
      %143 = vst.msk [vmem:[#allocation4] sm:$0xff] %vm140, 0.0
      %144 = vst.msk [vmem:[#allocation5] sm:$0xff] %vm140, 0.0
    $region65: #{tpu_custom_call.1} parent=1 // pred_fallthru
      _
    %v145 = vld [vmem:[#allocation13] sm:$0xf]
    %v146 = vld [vmem:[#allocation13 + $0x4] sm:$0xf]
    %v147 = vld [vmem:[#allocation13 + $0x8] sm:$0xf]
    %v148 = vld [vmem:[#allocation13 + $0xc] sm:$0xf]
    %v149 = vld [vmem:[#allocation14] sm:$0xf]
    %v150 = vld [vmem:[#allocation14 + $0x4] sm:$0xf]
    %v151 = vld [vmem:[#allocation14 + $0x8] sm:$0xf]
    %v152 = vld [vmem:[#allocation14 + $0xc] sm:$0xf]
    %v153 = vld [vmem:[#allocation16] sm:$0xf]
    %v154 = vld [vmem:[#allocation16 + $0x4] sm:$0xf]
    %v155 = vld [vmem:[#allocation16 + $0x8] sm:$0xf]
    %v156 = vld [vmem:[#allocation16 + $0xc] sm:$0xf]
    %v157 = vld [vmem:[%s6] sm:$0x1]
    %v159 = vperm.slane %v157, 0
    %v161 = vlaneseq
    %v162 = vand.u32 %v161, 127
    %vm163 = vcmp.lt.s32.totalorder %v162, 96
    %v164 = vsel %vm163, 0.5, 1.0
    %v165 = vsel %vm163, 0.5, 0.0
    %v166 = vld [vmem:[#allocation8] sm:$0xf]
    %v167 = vld [vmem:[#allocation8 + $0x4] sm:$0xf]
    %v168 = vld [vmem:[#allocation8 + $0x8] sm:$0xf]
    %v169 = vld [vmem:[#allocation8 + $0xc] sm:$0xf]
    %v170 = vld [vmem:[#allocation8 + $0x10] sm:$0xf]
    %v171 = vld [vmem:[#allocation8 + $0x14] sm:$0xf]
    %v172 = vld [vmem:[#allocation8 + $0x18] sm:$0xf]
    %v173 = vld [vmem:[#allocation8 + $0x1c] sm:$0xf]
    %v174 = vld [vmem:[#allocation11] sm:$0xf]
    %v175 = vld [vmem:[#allocation11 + $0x4] sm:$0xf]
    %v176 = vld [vmem:[#allocation11 + $0x8] sm:$0xf]
    %v177 = vld [vmem:[#allocation11 + $0xc] sm:$0xf]
    %v178 = vld [vmem:[#allocation11 + $0x10] sm:$0xf]
    %v179 = vld [vmem:[#allocation11 + $0x14] sm:$0xf]
    %v180 = vld [vmem:[#allocation11 + $0x18] sm:$0xf]
    %v181 = vld [vmem:[#allocation11 + $0x1c] sm:$0xf]
    %v182 = vld [vmem:[#allocation11 + $0x20] sm:$0xf]
    %v183 = vld [vmem:[#allocation11 + $0x24] sm:$0xf]
    %v184 = vld [vmem:[#allocation11 + $0x28] sm:$0xf]
    %v185 = vld [vmem:[#allocation11 + $0x2c] sm:$0xf]
    %v186 = vld [vmem:[#allocation11 + $0x30] sm:$0xf]
    %v187 = vld [vmem:[#allocation11 + $0x34] sm:$0xf]
    %v188 = vld [vmem:[#allocation11 + $0x38] sm:$0xf]
    %v189 = vld [vmem:[#allocation11 + $0x3c] sm:$0xf]
    %v190 = vld [vmem:[%s3] sm:$0x1]
    %v192 = vperm.slane %v190, 0
    %v202 = vunpack.c.l.b16 %v166
    %v203 = vunpack.c.l.b16 %v167
    %v204 = vunpack.c.l.b16 %v168
    %v205 = vunpack.c.l.b16 %v169
    %v206 = vunpack.c.l.b16 %v170
    %v207 = vunpack.c.l.b16 %v171
    %v208 = vunpack.c.l.b16 %v172
    %v209 = vunpack.c.l.b16 %v173
    %v210 = vpack.c.b16 %v203, %v202
    %v211 = vpack.c.b16 %v205, %v204
    %v212 = vpack.c.b16 %v207, %v206
    %v213 = vpack.c.b16 %v209, %v208
    %v234 = vunpack.c.l.b16 %v174
    %v235 = vunpack.c.l.b16 %v175
    %v236 = vunpack.c.l.b16 %v176
    %v237 = vunpack.c.l.b16 %v177
    %v238 = vunpack.c.l.b16 %v178
    %v239 = vunpack.c.l.b16 %v179
    %v240 = vunpack.c.l.b16 %v180
    %v241 = vunpack.c.l.b16 %v181
    %v242 = vunpack.c.l.b16 %v182
    %v243 = vunpack.c.l.b16 %v183
    %v244 = vunpack.c.l.b16 %v184
    %v245 = vunpack.c.l.b16 %v185
    %v246 = vunpack.c.l.b16 %v186
    %v247 = vunpack.c.l.b16 %v187
    %v248 = vunpack.c.l.b16 %v188
    %v249 = vunpack.c.l.b16 %v189
    %v250 = vpack.c.b16 %v235, %v234
    %v251 = vpack.c.b16 %v237, %v236
    %v252 = vpack.c.b16 %v239, %v238
    %v253 = vpack.c.b16 %v241, %v240
    %v254 = vpack.c.b16 %v243, %v242
    %v255 = vpack.c.b16 %v245, %v244
    %v256 = vpack.c.b16 %v247, %v246
    %v257 = vpack.c.b16 %v249, %v248
    %266 = vmatpush.bf16.msra.mxu0 %v257
    %267 = vmatpush.bf16.msra.mxu0 %v256
    %268 = vmatpush.bf16.msra.mxu0 %v255
    %269 = vmatpush.bf16.msra.mxu0 %v254
    %270 = vmatpush.bf16.msra.mxu0 %v253
    %271 = vmatpush.bf16.msra.mxu0 %v252
    %272 = vmatpush.bf16.msra.mxu0 %v251
    %273 = vmatpush.bf16.msra.mxu0 %v250
    %274 = vmatmul.bf16.gmra.mxu0 %v210
    %v275 = vpop.f32.mrf.mxu0
    %v276 = vadd.f32 %v192, %v275
    %v277 = vpop.f32.mrf.mxu0
    %v278 = vadd.f32 %v192, %v277
    %279 = vmatmul.bf16.gmra.mxu0 %v211
    %v280 = vpop.f32.mrf.mxu0
    %v281 = vadd.f32 %v192, %v280
    %v282 = vpop.f32.mrf.mxu0
    %v283 = vadd.f32 %v192, %v282
    %284 = vmatmul.bf16.gmra.mxu0 %v212
    %v285 = vpop.f32.mrf.mxu0
    %v286 = vadd.f32 %v192, %v285
    %v287 = vpop.f32.mrf.mxu0
    %v288 = vadd.f32 %v192, %v287
    %289 = vmatmul.bf16.gmra.mxu0 %v213
    %v290 = vpop.f32.mrf.mxu0
    %v291 = vadd.f32 %v192, %v290
    %v292 = vpop.f32.mrf.mxu0
    %v293 = vadd.f32 %v192, %v292
    %294 = vdwg.mxu0
    %295 = vst [vmem:[#allocation6] sm:$0xff] %v276
    %296 = vst [vmem:[#allocation6 + $0x8] sm:$0xff] %v278
    %297 = vst [vmem:[#allocation6 + $0x10] sm:$0xff] %v281
    %298 = vst [vmem:[#allocation6 + $0x18] sm:$0xff] %v283
    %299 = vst [vmem:[#allocation6 + $0x20] sm:$0xff] %v286
    %300 = vst [vmem:[#allocation6 + $0x28] sm:$0xff] %v288
    %301 = vst [vmem:[#allocation6 + $0x30] sm:$0xff] %v291
    %302 = vst [vmem:[#allocation6 + $0x38] sm:$0xff] %v293
    %v303 = vld [vmem:[#allocation2] sm:$0xff]
    %v304 = vld [vmem:[#allocation3] sm:$0xff]
    %v305 = vld [vmem:[#allocation4] sm:$0xff]
    %v306 = vld [vmem:[#allocation5] sm:$0xff]
    %v307 = vld [vmem:[#allocation6] sm:$0xff]
    %v308 = vpack.c.bf16 %v303, %v303
    %v313 = vunpack.c.l.b16 %v145
    %v314 = vunpack.c.l.b16 %v146
    %v315 = vunpack.c.l.b16 %v147
    %v316 = vunpack.c.l.b16 %v148
    %v317 = vpack.c.b16 %v314, %v313
    %v318 = vpack.c.b16 %v316, %v315
    %vm321 = vcmask 261120
    %v323 = vsel %vm321, %v308, 0
    %325 = vmatpush.bf16.msra.mxu0 0
    %326 = vmatpush.bf16.msra.mxu0 0
    %327 = vmatpush.bf16.msra.mxu0 0
    %328 = vmatpush.bf16.msra.mxu0 0
    %329 = vmatpush.bf16.msra.mxu0 0
    %330 = vmatpush.bf16.msra.mxu0 0
    %331 = vmatpush.bf16.msra.mxu0 %v318
    %332 = vmatpush.bf16.msra.mxu0 %v317
    %333 = vmatmul.bf16.gmra.mxu0 %v323
    %v334 = vpop.f32.mrf.mxu0
    %v335 = vadd.f32 0.0, %v334
    %v336 = vpop.f32.mrf.mxu0
    %337 = vdwg.mxu0
    %v338 = vadd.f32 %v307, %v335
    %v339 = vmul.f32 %v164, %v338
    %v340 = vtanh.pop %v339
    %v341 = vmul.f32 %v164, %v340
    %v342 = vadd.f32 %v341, %v165
    %344 = vrot.lane.b32.xlu0 %v304, 32
    %v345 = vpop.permute.xlu0 %344
    %v347 = vmul.f32 %v342, %v345
    %349 = vrot.lane.b32.xlu0 %v342, 32
    %v350 = vpop.permute.xlu0 %349
    %v352 = vmul.f32 %v342, %v350
    %354 = vrot.lane.b32.xlu0 %v352, 32
    %v355 = vpop.permute.xlu0 %354
    %v357 = vadd.f32 %v347, %v355
    %v358 = vtanh.pop %v357
    %360 = vrot.lane.b32.xlu0 %v358, 32
    %v361 = vpop.permute.xlu0 %360
    %v363 = vmul.f32 %v342, %v361
    %v364 = vpack.c.bf16 %v363, %v363
    %366 = vrot.lane.b32.xlu0 %v364, 64
    %v367 = vpop.permute.xlu0 %366
    %v372 = vunpack.c.l.b16 %v149
    %v373 = vunpack.c.l.b16 %v150
    %v374 = vunpack.c.l.b16 %v151
    %v375 = vunpack.c.l.b16 %v152
    %v376 = vpack.c.b16 %v373, %v372
    %v377 = vpack.c.b16 %v375, %v374
    %v381 = vsel %vm321, %v367, 0
    %383 = vmatpush.bf16.msra.mxu0 0
    %384 = vmatpush.bf16.msra.mxu0 0
    %385 = vmatpush.bf16.msra.mxu0 0
    %386 = vmatpush.bf16.msra.mxu0 0
    %387 = vmatpush.bf16.msra.mxu0 0
    %388 = vmatpush.bf16.msra.mxu0 0
    %389 = vmatpush.bf16.msra.mxu0 %v377
    %390 = vmatpush.bf16.msra.mxu0 %v376
    %391 = vmatmul.bf16.gmra.mxu0 %v381
    %v392 = vpop.f32.mrf.mxu0
    %v393 = vadd.f32 0.0, %v392
    %v394 = vpop.f32.mrf.mxu0
    %395 = vdwg.mxu0
    %v396 = vadd.f32 %v159, %v393
    %v397 = vpack.c.bf16 %v305, %v305
    %v402 = vunpack.c.l.b16 %v153
    %v403 = vunpack.c.l.b16 %v154
    %v404 = vunpack.c.l.b16 %v155
    %v405 = vunpack.c.l.b16 %v156
    %v406 = vpack.c.b16 %v403, %v402
    %v407 = vpack.c.b16 %v405, %v404
    %v411 = vsel %vm321, %v397, 0
    %413 = vmatpush.bf16.msra.mxu0 0
    %414 = vmatpush.bf16.msra.mxu0 0
    %415 = vmatpush.bf16.msra.mxu0 0
    %416 = vmatpush.bf16.msra.mxu0 0
    %417 = vmatpush.bf16.msra.mxu0 0
    %418 = vmatpush.bf16.msra.mxu0 0
    %419 = vmatpush.bf16.msra.mxu0 %v407
    %420 = vmatpush.bf16.msra.mxu0 %v406
    %421 = vmatmul.bf16.gmra.mxu0 %v411
    %v422 = vpop.f32.mrf.mxu0
    %v423 = vadd.f32 0.0, %v422
    %v424 = vpop.f32.mrf.mxu0
    %425 = vdwg.mxu0
    %v426 = vadd.f32 %v396, %v423
    %v427 = vmul.f32 %v164, %v426
    %v428 = vtanh.pop %v427
    %v429 = vmul.f32 %v164, %v428
    %v430 = vadd.f32 %v429, %v165
    %432 = vrot.lane.b32.xlu0 %v306, 32
    %v433 = vpop.permute.xlu0 %432
    %v435 = vmul.f32 %v430, %v433
    %437 = vrot.lane.b32.xlu0 %v430, 32
    %v438 = vpop.permute.xlu0 %437
    %v440 = vmul.f32 %v430, %v438
    %442 = vrot.lane.b32.xlu0 %v440, 32
    %v443 = vpop.permute.xlu0 %442
    %v445 = vadd.f32 %v435, %v443
    %v446 = vtanh.pop %v445
    %448 = vrot.lane.b32.xlu0 %v446, 32
    %v449 = vpop.permute.xlu0 %448
    %v451 = vmul.f32 %v430, %v449
    %v452 = vpack.c.bf16 %v451, %v451
    %454 = vrot.lane.b32.xlu0 %v452, 64
    %v455 = vpop.permute.xlu0 %454
    %vm457 = vcmask 257024
    %458 = vst.msk [vmem:[#allocation7] sm:$0xf] %vm457, %v455
    %s459 = scalar_lea.vmem [#allocation6], 8
    %v460 = vld [vmem:[%s459] sm:$0xff]
    %461 = vmatpush.bf16.msra.mxu0 0
    %462 = vmatpush.bf16.msra.mxu0 0
    %463 = vmatpush.bf16.msra.mxu0 0
    %464 = vmatpush.bf16.msra.mxu0 0
    %465 = vmatpush.bf16.msra.mxu0 0
    %466 = vmatpush.bf16.msra.mxu0 0
    %467 = vmatpush.bf16.msra.mxu0 %v318
    %468 = vmatpush.bf16.msra.mxu0 %v317
    %469 = vmatmul.bf16.gmra.mxu0 %v381
    %v470 = vpop.f32.mrf.mxu0
    %v471 = vadd.f32 0.0, %v470
    %v472 = vpop.f32.mrf.mxu0
    %473 = vdwg.mxu0
    %v474 = vadd.f32 %v460, %v471
    %v475 = vmul.f32 %v164, %v474
    %v476 = vtanh.pop %v475
    %v477 = vmul.f32 %v164, %v476
    %v478 = vadd.f32 %v477, %v165
    %v479 = vmul.f32 %v478, %v357
    %481 = vrot.lane.b32.xlu0 %v478, 32
    %v482 = vpop.permute.xlu0 %481
    %v484 = vmul.f32 %v478, %v482
    %486 = vrot.lane.b32.xlu0 %v484, 32
    %v487 = vpop.permute.xlu0 %486
    %v489 = vadd.f32 %v479, %v487
    %v490 = vtanh.pop %v489
    %492 = vrot.lane.b32.xlu0 %v490, 32
    %v493 = vpop.permute.xlu0 %492
    %v495 = vmul.f32 %v478, %v493
    %v496 = vpack.c.bf16 %v495, %v495
    %498 = vrot.lane.b32.xlu0 %v496, 64
    %v499 = vpop.permute.xlu0 %498
    %v501 = vsel %vm321, %v499, 0
    %503 = vmatpush.bf16.msra.mxu0 0
    %504 = vmatpush.bf16.msra.mxu0 0
    %505 = vmatpush.bf16.msra.mxu0 0
    %506 = vmatpush.bf16.msra.mxu0 0
    %507 = vmatpush.bf16.msra.mxu0 0
    %508 = vmatpush.bf16.msra.mxu0 0
    %509 = vmatpush.bf16.msra.mxu0 %v377
    %510 = vmatpush.bf16.msra.mxu0 %v376
    %511 = vmatmul.bf16.gmra.mxu0 %v501
    %v512 = vpop.f32.mrf.mxu0
    %v513 = vadd.f32 0.0, %v512
    %v514 = vpop.f32.mrf.mxu0
    %515 = vdwg.mxu0
    %v516 = vadd.f32 %v159, %v513
    %v517 = vunpack.c.l.b16 %v452
    %v518 = vpack.c.b16 %v517, %v517
    %519 = vrot.lane.b32.xlu0 %v518, 64
    %v520 = vpop.permute.xlu0 %519
    %v522 = vsel %vm321, %v520, 0
    %524 = vmatpush.bf16.msra.mxu0 0
    %525 = vmatpush.bf16.msra.mxu0 0
    %526 = vmatpush.bf16.msra.mxu0 0
    %527 = vmatpush.bf16.msra.mxu0 0
    %528 = vmatpush.bf16.msra.mxu0 0
    %529 = vmatpush.bf16.msra.mxu0 0
    %530 = vmatpush.bf16.msra.mxu0 %v407
    %531 = vmatpush.bf16.msra.mxu0 %v406
    %532 = vmatmul.bf16.gmra.mxu0 %v522
    %v533 = vpop.f32.mrf.mxu0
    %v534 = vadd.f32 0.0, %v533
    %v535 = vpop.f32.mrf.mxu0
    %536 = vdwg.mxu0
    %v537 = vadd.f32 %v516, %v534
    %v538 = vmul.f32 %v164, %v537
    %v539 = vtanh.pop %v538
    %v540 = vmul.f32 %v164, %v539
    %v541 = vadd.f32 %v540, %v165
    %v542 = vmul.f32 %v541, %v445
    %544 = vrot.lane.b32.xlu0 %v541, 32
    %v545 = vpop.permute.xlu0 %544
    %v547 = vmul.f32 %v541, %v545
    %549 = vrot.lane.b32.xlu0 %v547, 32
    %v550 = vpop.permute.xlu0 %549
    %v552 = vadd.f32 %v542, %v550
    %v553 = vtanh.pop %v552
    %555 = vrot.lane.b32.xlu0 %v553, 32
    %v556 = vpop.permute.xlu0 %555
    %v558 = vmul.f32 %v541, %v556
    %v559 = vpack.c.bf16 %v558, %v558
    %561 = vrot.lane.b32.xlu0 %v559, 64
    %v562 = vpop.permute.xlu0 %561
    %s564 = scalar_lea.vmem [#allocation7], 4
    %565 = vst.msk [vmem:[%s564] sm:$0xf] %vm457, %v562
    %s566 = scalar_lea.vmem [#allocation6], 16
    %v567 = vld [vmem:[%s566] sm:$0xff]
    %568 = vmatpush.bf16.msra.mxu0 0
    %569 = vmatpush.bf16.msra.mxu0 0
    %570 = vmatpush.bf16.msra.mxu0 0
    %571 = vmatpush.bf16.msra.mxu0 0
    %572 = vmatpush.bf16.msra.mxu0 0
    %573 = vmatpush.bf16.msra.mxu0 0
    %574 = vmatpush.bf16.msra.mxu0 %v318
    %575 = vmatpush.bf16.msra.mxu0 %v317
    %576 = vmatmul.bf16.gmra.mxu0 %v501
    %v577 = vpop.f32.mrf.mxu0
    %v578 = vadd.f32 0.0, %v577
    %v579 = vpop.f32.mrf.mxu0
    %580 = vdwg.mxu0
    %v581 = vadd.f32 %v567, %v578
    %v582 = vmul.f32 %v164, %v581
    %v583 = vtanh.pop %v582
    %v584 = vmul.f32 %v164, %v583
    %v585 = vadd.f32 %v584, %v165
    %v586 = vmul.f32 %v585, %v489
    %588 = vrot.lane.b32.xlu0 %v585, 32
    %v589 = vpop.permute.xlu0 %588
    %v591 = vmul.f32 %v585, %v589
    %593 = vrot.lane.b32.xlu0 %v591, 32
    %v594 = vpop.permute.xlu0 %593
    %v596 = vadd.f32 %v586, %v594
    %v597 = vtanh.pop %v596
    %599 = vrot.lane.b32.xlu0 %v597, 32
    %v600 = vpop.permute.xlu0 %599
    %v602 = vmul.f32 %v585, %v600
    %v603 = vpack.c.bf16 %v602, %v602
    %605 = vrot.lane.b32.xlu0 %v603, 64
    %v606 = vpop.permute.xlu0 %605
    %v608 = vsel %vm321, %v606, 0
    %610 = vmatpush.bf16.msra.mxu0 0
    %611 = vmatpush.bf16.msra.mxu0 0
    %612 = vmatpush.bf16.msra.mxu0 0
    %613 = vmatpush.bf16.msra.mxu0 0
    %614 = vmatpush.bf16.msra.mxu0 0
    %615 = vmatpush.bf16.msra.mxu0 0
    %616 = vmatpush.bf16.msra.mxu0 %v377
    %617 = vmatpush.bf16.msra.mxu0 %v376
    %618 = vmatmul.bf16.gmra.mxu0 %v608
    %v619 = vpop.f32.mrf.mxu0
    %v620 = vadd.f32 0.0, %v619
    %v621 = vpop.f32.mrf.mxu0
    %622 = vdwg.mxu0
    %v623 = vadd.f32 %v159, %v620
    %v624 = vunpack.c.l.b16 %v559
    %v625 = vpack.c.b16 %v624, %v624
    %626 = vrot.lane.b32.xlu0 %v625, 64
    %v627 = vpop.permute.xlu0 %626
    %v629 = vsel %vm321, %v627, 0
    %631 = vmatpush.bf16.msra.mxu0 0
    %632 = vmatpush.bf16.msra.mxu0 0
    %633 = vmatpush.bf16.msra.mxu0 0
    %634 = vmatpush.bf16.msra.mxu0 0
    %635 = vmatpush.bf16.msra.mxu0 0
    %636 = vmatpush.bf16.msra.mxu0 0
    %637 = vmatpush.bf16.msra.mxu0 %v407
    %638 = vmatpush.bf16.msra.mxu0 %v406
    %639 = vmatmul.bf16.gmra.mxu0 %v629
    %v640 = vpop.f32.mrf.mxu0
    %v641 = vadd.f32 0.0, %v640
    %v642 = vpop.f32.mrf.mxu0
    %643 = vdwg.mxu0
    %v644 = vadd.f32 %v623, %v641
    %v645 = vmul.f32 %v164, %v644
    %v646 = vtanh.pop %v645
    %v647 = vmul.f32 %v164, %v646
    %v648 = vadd.f32 %v647, %v165
    %v649 = vmul.f32 %v648, %v552
    %651 = vrot.lane.b32.xlu0 %v648, 32
    %v652 = vpop.permute.xlu0 %651
    %v654 = vmul.f32 %v648, %v652
    %656 = vrot.lane.b32.xlu0 %v654, 32
    %v657 = vpop.permute.xlu0 %656
    %v659 = vadd.f32 %v649, %v657
    %v660 = vtanh.pop %v659
    %662 = vrot.lane.b32.xlu0 %v660, 32
    %v663 = vpop.permute.xlu0 %662
    %v665 = vmul.f32 %v648, %v663
    %v666 = vpack.c.bf16 %v665, %v665
    %668 = vrot.lane.b32.xlu0 %v666, 64
    %v669 = vpop.permute.xlu0 %668
    %s671 = scalar_lea.vmem [#allocation7], 8
    %672 = vst.msk [vmem:[%s671] sm:$0xf] %vm457, %v669
    %s673 = scalar_lea.vmem [#allocation6], 24
    %v674 = vld [vmem:[%s673] sm:$0xff]
    %675 = vmatpush.bf16.msra.mxu0 0
    %676 = vmatpush.bf16.msra.mxu0 0
    %677 = vmatpush.bf16.msra.mxu0 0
    %678 = vmatpush.bf16.msra.mxu0 0
    %679 = vmatpush.bf16.msra.mxu0 0
    %680 = vmatpush.bf16.msra.mxu0 0
    %681 = vmatpush.bf16.msra.mxu0 %v318
    %682 = vmatpush.bf16.msra.mxu0 %v317
    %683 = vmatmul.bf16.gmra.mxu0 %v608
    %v684 = vpop.f32.mrf.mxu0
    %v685 = vadd.f32 0.0, %v684
    %v686 = vpop.f32.mrf.mxu0
    %687 = vdwg.mxu0
    %v688 = vadd.f32 %v674, %v685
    %v689 = vmul.f32 %v164, %v688
    %v690 = vtanh.pop %v689
    %v691 = vmul.f32 %v164, %v690
    %v692 = vadd.f32 %v691, %v165
    %v693 = vmul.f32 %v692, %v596
    %695 = vrot.lane.b32.xlu0 %v692, 32
    %v696 = vpop.permute.xlu0 %695
    %v698 = vmul.f32 %v692, %v696
    %700 = vrot.lane.b32.xlu0 %v698, 32
    %v701 = vpop.permute.xlu0 %700
    %v703 = vadd.f32 %v693, %v701
    %v704 = vtanh.pop %v703
    %706 = vrot.lane.b32.xlu0 %v704, 32
    %v707 = vpop.permute.xlu0 %706
    %v709 = vmul.f32 %v692, %v707
    %v710 = vpack.c.bf16 %v709, %v709
    %712 = vrot.lane.b32.xlu0 %v710, 64
    %v713 = vpop.permute.xlu0 %712
    %v715 = vsel %vm321, %v713, 0
    %717 = vmatpush.bf16.msra.mxu0 0
    %718 = vmatpush.bf16.msra.mxu0 0
    %719 = vmatpush.bf16.msra.mxu0 0
    %720 = vmatpush.bf16.msra.mxu0 0
    %721 = vmatpush.bf16.msra.mxu0 0
    %722 = vmatpush.bf16.msra.mxu0 0
    %723 = vmatpush.bf16.msra.mxu0 %v377
    %724 = vmatpush.bf16.msra.mxu0 %v376
    %725 = vmatmul.bf16.gmra.mxu0 %v715
    %v726 = vpop.f32.mrf.mxu0
    %v727 = vadd.f32 0.0, %v726
    %v728 = vpop.f32.mrf.mxu0
    %729 = vdwg.mxu0
    %v730 = vadd.f32 %v159, %v727
    %v731 = vunpack.c.l.b16 %v666
    %v732 = vpack.c.b16 %v731, %v731
    %733 = vrot.lane.b32.xlu0 %v732, 64
    %v734 = vpop.permute.xlu0 %733
    %v736 = vsel %vm321, %v734, 0
    %738 = vmatpush.bf16.msra.mxu0 0
    %739 = vmatpush.bf16.msra.mxu0 0
    %740 = vmatpush.bf16.msra.mxu0 0
    %741 = vmatpush.bf16.msra.mxu0 0
    %742 = vmatpush.bf16.msra.mxu0 0
    %743 = vmatpush.bf16.msra.mxu0 0
    %744 = vmatpush.bf16.msra.mxu0 %v407
    %745 = vmatpush.bf16.msra.mxu0 %v406
    %746 = vmatmul.bf16.gmra.mxu0 %v736
    %v747 = vpop.f32.mrf.mxu0
    %v748 = vadd.f32 0.0, %v747
    %v749 = vpop.f32.mrf.mxu0
    %750 = vdwg.mxu0
    %v751 = vadd.f32 %v730, %v748
    %v752 = vmul.f32 %v164, %v751
    %v753 = vtanh.pop %v752
    %v754 = vmul.f32 %v164, %v753
    %v755 = vadd.f32 %v754, %v165
    %v756 = vmul.f32 %v755, %v659
    %758 = vrot.lane.b32.xlu0 %v755, 32
    %v759 = vpop.permute.xlu0 %758
    %v761 = vmul.f32 %v755, %v759
    %763 = vrot.lane.b32.xlu0 %v761, 32
    %v764 = vpop.permute.xlu0 %763
    %v766 = vadd.f32 %v756, %v764
    %v767 = vtanh.pop %v766
    %769 = vrot.lane.b32.xlu0 %v767, 32
    %v770 = vpop.permute.xlu0 %769
    %v772 = vmul.f32 %v755, %v770
    %v773 = vpack.c.bf16 %v772, %v772
    %775 = vrot.lane.b32.xlu0 %v773, 64
    %v776 = vpop.permute.xlu0 %775
    %s778 = scalar_lea.vmem [#allocation7], 12
    %779 = vst.msk [vmem:[%s778] sm:$0xf] %vm457, %v776
    %s780 = scalar_lea.vmem [#allocation6], 32
    %v781 = vld [vmem:[%s780] sm:$0xff]
    %782 = vmatpush.bf16.msra.mxu0 0
    %783 = vmatpush.bf16.msra.mxu0 0
    %784 = vmatpush.bf16.msra.mxu0 0
    %785 = vmatpush.bf16.msra.mxu0 0
    %786 = vmatpush.bf16.msra.mxu0 0
    %787 = vmatpush.bf16.msra.mxu0 0
    %788 = vmatpush.bf16.msra.mxu0 %v318
    %789 = vmatpush.bf16.msra.mxu0 %v317
    %790 = vmatmul.bf16.gmra.mxu0 %v715
    %v791 = vpop.f32.mrf.mxu0
    %v792 = vadd.f32 0.0, %v791
    %v793 = vpop.f32.mrf.mxu0
    %794 = vdwg.mxu0
    %v795 = vadd.f32 %v781, %v792
    %v796 = vmul.f32 %v164, %v795
    %v797 = vtanh.pop %v796
    %v798 = vmul.f32 %v164, %v797
    %v799 = vadd.f32 %v798, %v165
    %v800 = vmul.f32 %v799, %v703
    %802 = vrot.lane.b32.xlu0 %v799, 32
    %v803 = vpop.permute.xlu0 %802
    %v805 = vmul.f32 %v799, %v803
    %807 = vrot.lane.b32.xlu0 %v805, 32
    %v808 = vpop.permute.xlu0 %807
    %v810 = vadd.f32 %v800, %v808
    %v811 = vtanh.pop %v810
    %813 = vrot.lane.b32.xlu0 %v811, 32
    %v814 = vpop.permute.xlu0 %813
    %v816 = vmul.f32 %v799, %v814
    %v817 = vpack.c.bf16 %v816, %v816
    %819 = vrot.lane.b32.xlu0 %v817, 64
    %v820 = vpop.permute.xlu0 %819
    %v822 = vsel %vm321, %v820, 0
    %824 = vmatpush.bf16.msra.mxu0 0
    %825 = vmatpush.bf16.msra.mxu0 0
    %826 = vmatpush.bf16.msra.mxu0 0
    %827 = vmatpush.bf16.msra.mxu0 0
    %828 = vmatpush.bf16.msra.mxu0 0
    %829 = vmatpush.bf16.msra.mxu0 0
    %830 = vmatpush.bf16.msra.mxu0 %v377
    %831 = vmatpush.bf16.msra.mxu0 %v376
    %832 = vmatmul.bf16.gmra.mxu0 %v822
    %v833 = vpop.f32.mrf.mxu0
    %v834 = vadd.f32 0.0, %v833
    %v835 = vpop.f32.mrf.mxu0
    %836 = vdwg.mxu0
    %v837 = vadd.f32 %v159, %v834
    %v838 = vunpack.c.l.b16 %v773
    %v839 = vpack.c.b16 %v838, %v838
    %840 = vrot.lane.b32.xlu0 %v839, 64
    %v841 = vpop.permute.xlu0 %840
    %v843 = vsel %vm321, %v841, 0
    %845 = vmatpush.bf16.msra.mxu0 0
    %846 = vmatpush.bf16.msra.mxu0 0
    %847 = vmatpush.bf16.msra.mxu0 0
    %848 = vmatpush.bf16.msra.mxu0 0
    %849 = vmatpush.bf16.msra.mxu0 0
    %850 = vmatpush.bf16.msra.mxu0 0
    %851 = vmatpush.bf16.msra.mxu0 %v407
    %852 = vmatpush.bf16.msra.mxu0 %v406
    %853 = vmatmul.bf16.gmra.mxu0 %v843
    %v854 = vpop.f32.mrf.mxu0
    %v855 = vadd.f32 0.0, %v854
    %v856 = vpop.f32.mrf.mxu0
    %857 = vdwg.mxu0
    %v858 = vadd.f32 %v837, %v855
    %v859 = vmul.f32 %v164, %v858
    %v860 = vtanh.pop %v859
    %v861 = vmul.f32 %v164, %v860
    %v862 = vadd.f32 %v861, %v165
    %v863 = vmul.f32 %v862, %v766
    %865 = vrot.lane.b32.xlu0 %v862, 32
    %v866 = vpop.permute.xlu0 %865
    %v868 = vmul.f32 %v862, %v866
    %870 = vrot.lane.b32.xlu0 %v868, 32
    %v871 = vpop.permute.xlu0 %870
    %v873 = vadd.f32 %v863, %v871
    %v874 = vtanh.pop %v873
    %876 = vrot.lane.b32.xlu0 %v874, 32
    %v877 = vpop.permute.xlu0 %876
    %v879 = vmul.f32 %v862, %v877
    %v880 = vpack.c.bf16 %v879, %v879
    %882 = vrot.lane.b32.xlu0 %v880, 64
    %v883 = vpop.permute.xlu0 %882
    %s885 = scalar_lea.vmem [#allocation7], 16
    %886 = vst.msk [vmem:[%s885] sm:$0xf] %vm457, %v883
    %s887 = scalar_lea.vmem [#allocation6], 40
    %v888 = vld [vmem:[%s887] sm:$0xff]
    %889 = vmatpush.bf16.msra.mxu0 0
    %890 = vmatpush.bf16.msra.mxu0 0
    %891 = vmatpush.bf16.msra.mxu0 0
    %892 = vmatpush.bf16.msra.mxu0 0
    %893 = vmatpush.bf16.msra.mxu0 0
    %894 = vmatpush.bf16.msra.mxu0 0
    %895 = vmatpush.bf16.msra.mxu0 %v318
    %896 = vmatpush.bf16.msra.mxu0 %v317
    %897 = vmatmul.bf16.gmra.mxu0 %v822
    %v898 = vpop.f32.mrf.mxu0
    %v899 = vadd.f32 0.0, %v898
    %v900 = vpop.f32.mrf.mxu0
    %901 = vdwg.mxu0
    %v902 = vadd.f32 %v888, %v899
    %v903 = vmul.f32 %v164, %v902
    %v904 = vtanh.pop %v903
    %v905 = vmul.f32 %v164, %v904
    %v906 = vadd.f32 %v905, %v165
    %v907 = vmul.f32 %v906, %v810
    %909 = vrot.lane.b32.xlu0 %v906, 32
    %v910 = vpop.permute.xlu0 %909
    %v912 = vmul.f32 %v906, %v910
    %914 = vrot.lane.b32.xlu0 %v912, 32
    %v915 = vpop.permute.xlu0 %914
    %v917 = vadd.f32 %v907, %v915
    %v918 = vtanh.pop %v917
    %920 = vrot.lane.b32.xlu0 %v918, 32
    %v921 = vpop.permute.xlu0 %920
    %v923 = vmul.f32 %v906, %v921
    %v924 = vpack.c.bf16 %v923, %v923
    %926 = vrot.lane.b32.xlu0 %v924, 64
    %v927 = vpop.permute.xlu0 %926
    %v929 = vsel %vm321, %v927, 0
    %931 = vmatpush.bf16.msra.mxu0 0
    %932 = vmatpush.bf16.msra.mxu0 0
    %933 = vmatpush.bf16.msra.mxu0 0
    %934 = vmatpush.bf16.msra.mxu0 0
    %935 = vmatpush.bf16.msra.mxu0 0
    %936 = vmatpush.bf16.msra.mxu0 0
    %937 = vmatpush.bf16.msra.mxu0 %v377
    %938 = vmatpush.bf16.msra.mxu0 %v376
    %939 = vmatmul.bf16.gmra.mxu0 %v929
    %v940 = vpop.f32.mrf.mxu0
    %v941 = vadd.f32 0.0, %v940
    %v942 = vpop.f32.mrf.mxu0
    %943 = vdwg.mxu0
    %v944 = vadd.f32 %v159, %v941
    %v945 = vunpack.c.l.b16 %v880
    %v946 = vpack.c.b16 %v945, %v945
    %947 = vrot.lane.b32.xlu0 %v946, 64
    %v948 = vpop.permute.xlu0 %947
    %v950 = vsel %vm321, %v948, 0
    %952 = vmatpush.bf16.msra.mxu0 0
    %953 = vmatpush.bf16.msra.mxu0 0
    %954 = vmatpush.bf16.msra.mxu0 0
    %955 = vmatpush.bf16.msra.mxu0 0
    %956 = vmatpush.bf16.msra.mxu0 0
    %957 = vmatpush.bf16.msra.mxu0 0
    %958 = vmatpush.bf16.msra.mxu0 %v407
    %959 = vmatpush.bf16.msra.mxu0 %v406
    %960 = vmatmul.bf16.gmra.mxu0 %v950
    %v961 = vpop.f32.mrf.mxu0
    %v962 = vadd.f32 0.0, %v961
    %v963 = vpop.f32.mrf.mxu0
    %964 = vdwg.mxu0
    %v965 = vadd.f32 %v944, %v962
    %v966 = vmul.f32 %v164, %v965
    %v967 = vtanh.pop %v966
    %v968 = vmul.f32 %v164, %v967
    %v969 = vadd.f32 %v968, %v165
    %v970 = vmul.f32 %v969, %v873
    %972 = vrot.lane.b32.xlu0 %v969, 32
    %v973 = vpop.permute.xlu0 %972
    %v975 = vmul.f32 %v969, %v973
    %977 = vrot.lane.b32.xlu0 %v975, 32
    %v978 = vpop.permute.xlu0 %977
    %v980 = vadd.f32 %v970, %v978
    %v981 = vtanh.pop %v980
    %983 = vrot.lane.b32.xlu0 %v981, 32
    %v984 = vpop.permute.xlu0 %983
    %v986 = vmul.f32 %v969, %v984
    %v987 = vpack.c.bf16 %v986, %v986
    %989 = vrot.lane.b32.xlu0 %v987, 64
    %v990 = vpop.permute.xlu0 %989
    %s992 = scalar_lea.vmem [#allocation7], 20
    %993 = vst.msk [vmem:[%s992] sm:$0xf] %vm457, %v990
    %s994 = scalar_lea.vmem [#allocation6], 48
    %v995 = vld [vmem:[%s994] sm:$0xff]
    %996 = vmatpush.bf16.msra.mxu0 0
    %997 = vmatpush.bf16.msra.mxu0 0
    %998 = vmatpush.bf16.msra.mxu0 0
    %999 = vmatpush.bf16.msra.mxu0 0
    %1000 = vmatpush.bf16.msra.mxu0 0
    %1001 = vmatpush.bf16.msra.mxu0 0
    %1002 = vmatpush.bf16.msra.mxu0 %v318
    %1003 = vmatpush.bf16.msra.mxu0 %v317
    %1004 = vmatmul.bf16.gmra.mxu0 %v929
    %v1005 = vpop.f32.mrf.mxu0
    %v1006 = vadd.f32 0.0, %v1005
    %v1007 = vpop.f32.mrf.mxu0
    %1008 = vdwg.mxu0
    %v1009 = vadd.f32 %v995, %v1006
    %v1010 = vmul.f32 %v164, %v1009
    %v1011 = vtanh.pop %v1010
    %v1012 = vmul.f32 %v164, %v1011
    %v1013 = vadd.f32 %v1012, %v165
    %v1014 = vmul.f32 %v1013, %v917
    %1016 = vrot.lane.b32.xlu0 %v1013, 32
    %v1017 = vpop.permute.xlu0 %1016
    %v1019 = vmul.f32 %v1013, %v1017
    %1021 = vrot.lane.b32.xlu0 %v1019, 32
    %v1022 = vpop.permute.xlu0 %1021
    %v1024 = vadd.f32 %v1014, %v1022
    %v1025 = vtanh.pop %v1024
    %1027 = vrot.lane.b32.xlu0 %v1025, 32
    %v1028 = vpop.permute.xlu0 %1027
    %v1030 = vmul.f32 %v1013, %v1028
    %v1031 = vpack.c.bf16 %v1030, %v1030
    %1033 = vrot.lane.b32.xlu0 %v1031, 64
    %v1034 = vpop.permute.xlu0 %1033
    %v1036 = vsel %vm321, %v1034, 0
    %1038 = vmatpush.bf16.msra.mxu0 0
    %1039 = vmatpush.bf16.msra.mxu0 0
    %1040 = vmatpush.bf16.msra.mxu0 0
    %1041 = vmatpush.bf16.msra.mxu0 0
    %1042 = vmatpush.bf16.msra.mxu0 0
    %1043 = vmatpush.bf16.msra.mxu0 0
    %1044 = vmatpush.bf16.msra.mxu0 %v377
    %1045 = vmatpush.bf16.msra.mxu0 %v376
    %1046 = vmatmul.bf16.gmra.mxu0 %v1036
    %v1047 = vpop.f32.mrf.mxu0
    %v1048 = vadd.f32 0.0, %v1047
    %v1049 = vpop.f32.mrf.mxu0
    %1050 = vdwg.mxu0
    %v1051 = vadd.f32 %v159, %v1048
    %v1052 = vunpack.c.l.b16 %v987
    %v1053 = vpack.c.b16 %v1052, %v1052
    %1054 = vrot.lane.b32.xlu0 %v1053, 64
    %v1055 = vpop.permute.xlu0 %1054
    %v1057 = vsel %vm321, %v1055, 0
    %1059 = vmatpush.bf16.msra.mxu0 0
    %1060 = vmatpush.bf16.msra.mxu0 0
    %1061 = vmatpush.bf16.msra.mxu0 0
    %1062 = vmatpush.bf16.msra.mxu0 0
    %1063 = vmatpush.bf16.msra.mxu0 0
    %1064 = vmatpush.bf16.msra.mxu0 0
    %1065 = vmatpush.bf16.msra.mxu0 %v407
    %1066 = vmatpush.bf16.msra.mxu0 %v406
    %1067 = vmatmul.bf16.gmra.mxu0 %v1057
    %v1068 = vpop.f32.mrf.mxu0
    %v1069 = vadd.f32 0.0, %v1068
    %v1070 = vpop.f32.mrf.mxu0
    %1071 = vdwg.mxu0
    %v1072 = vadd.f32 %v1051, %v1069
    %v1073 = vmul.f32 %v164, %v1072
    %v1074 = vtanh.pop %v1073
    %v1075 = vmul.f32 %v164, %v1074
    %v1076 = vadd.f32 %v1075, %v165
    %v1077 = vmul.f32 %v1076, %v980
    %1079 = vrot.lane.b32.xlu0 %v1076, 32
    %v1080 = vpop.permute.xlu0 %1079
    %v1082 = vmul.f32 %v1076, %v1080
    %1084 = vrot.lane.b32.xlu0 %v1082, 32
    %v1085 = vpop.permute.xlu0 %1084
    %v1087 = vadd.f32 %v1077, %v1085
    %v1088 = vtanh.pop %v1087
    %1090 = vrot.lane.b32.xlu0 %v1088, 32
    %v1091 = vpop.permute.xlu0 %1090
    %v1093 = vmul.f32 %v1076, %v1091
    %v1094 = vpack.c.bf16 %v1093, %v1093
    %1096 = vrot.lane.b32.xlu0 %v1094, 64
    %v1097 = vpop.permute.xlu0 %1096
    %s1099 = scalar_lea.vmem [#allocation7], 24
    %1100 = vst.msk [vmem:[%s1099] sm:$0xf] %vm457, %v1097
    %s1101 = scalar_lea.vmem [#allocation6], 56
    %v1102 = vld [vmem:[%s1101] sm:$0xff]
    %1103 = vmatpush.bf16.msra.mxu0 0
    %1104 = vmatpush.bf16.msra.mxu0 0
    %1105 = vmatpush.bf16.msra.mxu0 0
    %1106 = vmatpush.bf16.msra.mxu0 0
    %1107 = vmatpush.bf16.msra.mxu0 0
    %1108 = vmatpush.bf16.msra.mxu0 0
    %1109 = vmatpush.bf16.msra.mxu0 %v318
    %1110 = vmatpush.bf16.msra.mxu0 %v317
    %1111 = vmatmul.bf16.gmra.mxu0 %v1036
    %v1112 = vpop.f32.mrf.mxu0
    %v1113 = vadd.f32 0.0, %v1112
    %v1114 = vpop.f32.mrf.mxu0
    %1115 = vdwg.mxu0
    %v1116 = vadd.f32 %v1102, %v1113
    %v1117 = vmul.f32 %v164, %v1116
    %v1118 = vtanh.pop %v1117
    %v1119 = vmul.f32 %v164, %v1118
    %v1120 = vadd.f32 %v1119, %v165
    %v1121 = vmul.f32 %v1120, %v1024
    %1123 = vrot.lane.b32.xlu0 %v1120, 32
    %v1124 = vpop.permute.xlu0 %1123
    %v1126 = vmul.f32 %v1120, %v1124
    %1128 = vrot.lane.b32.xlu0 %v1126, 32
    %v1129 = vpop.permute.xlu0 %1128
    %v1131 = vadd.f32 %v1121, %v1129
    %v1132 = vtanh.pop %v1131
    %1134 = vrot.lane.b32.xlu0 %v1132, 32
    %v1135 = vpop.permute.xlu0 %1134
    %v1137 = vmul.f32 %v1120, %v1135
    %v1138 = vpack.c.bf16 %v1137, %v1137
    %1140 = vrot.lane.b32.xlu0 %v1138, 64
    %v1141 = vpop.permute.xlu0 %1140
    %v1143 = vsel %vm321, %v1141, 0
    %1145 = vmatpush.bf16.msra.mxu0 0
    %1146 = vmatpush.bf16.msra.mxu0 0
    %1147 = vmatpush.bf16.msra.mxu0 0
    %1148 = vmatpush.bf16.msra.mxu0 0
    %1149 = vmatpush.bf16.msra.mxu0 0
    %1150 = vmatpush.bf16.msra.mxu0 0
    %1151 = vmatpush.bf16.msra.mxu0 %v377
    %1152 = vmatpush.bf16.msra.mxu0 %v376
    %1153 = vmatmul.bf16.gmra.mxu0 %v1143
    %v1154 = vpop.f32.mrf.mxu0
    %v1155 = vadd.f32 0.0, %v1154
    %v1156 = vpop.f32.mrf.mxu0
    %1157 = vdwg.mxu0
    %v1158 = vadd.f32 %v159, %v1155
    %v1159 = vunpack.c.l.b16 %v1094
    %v1160 = vpack.c.b16 %v1159, %v1159
    %1161 = vrot.lane.b32.xlu0 %v1160, 64
    %v1162 = vpop.permute.xlu0 %1161
    %v1164 = vsel %vm321, %v1162, 0
    %1166 = vmatpush.bf16.msra.mxu0 0
    %1167 = vmatpush.bf16.msra.mxu0 0
    %1168 = vmatpush.bf16.msra.mxu0 0
    %1169 = vmatpush.bf16.msra.mxu0 0
    %1170 = vmatpush.bf16.msra.mxu0 0
    %1171 = vmatpush.bf16.msra.mxu0 0
    %1172 = vmatpush.bf16.msra.mxu0 %v407
    %1173 = vmatpush.bf16.msra.mxu0 %v406
    %1174 = vmatmul.bf16.gmra.mxu0 %v1164
    %v1175 = vpop.f32.mrf.mxu0
    %v1176 = vadd.f32 0.0, %v1175
    %v1177 = vpop.f32.mrf.mxu0
    %1178 = vdwg.mxu0
    %v1179 = vadd.f32 %v1158, %v1176
    %v1180 = vmul.f32 %v164, %v1179
    %v1181 = vtanh.pop %v1180
    %v1182 = vmul.f32 %v164, %v1181
    %v1183 = vadd.f32 %v1182, %v165
    %v1184 = vmul.f32 %v1183, %v1087
    %1186 = vrot.lane.b32.xlu0 %v1183, 32
    %v1187 = vpop.permute.xlu0 %1186
    %v1189 = vmul.f32 %v1183, %v1187
    %1191 = vrot.lane.b32.xlu0 %v1189, 32
    %v1192 = vpop.permute.xlu0 %1191
    %v1194 = vadd.f32 %v1184, %v1192
    %v1195 = vtanh.pop %v1194
    %1197 = vrot.lane.b32.xlu0 %v1195, 32
    %v1198 = vpop.permute.xlu0 %1197
    %v1200 = vmul.f32 %v1183, %v1198
    %v1201 = vpack.c.bf16 %v1200, %v1200
    %1203 = vrot.lane.b32.xlu0 %v1201, 64
    %v1204 = vpop.permute.xlu0 %1203
    %s1206 = scalar_lea.vmem [#allocation7], 28
    %1207 = vst.msk [vmem:[%s1206] sm:$0xf] %vm457, %v1204
    %1209 = vrot.lane.b32.xlu0 %v1137, 64
    %v1210 = vpop.permute.xlu0 %1209
    %1212 = vst.msk [vmem:[#allocation2] sm:$0xff] %vm321, %v1210
    %1214 = vrot.lane.b32.xlu0 %v1131, 96
    %v1215 = vpop.permute.xlu0 %1214
    %1217 = vst.msk [vmem:[#allocation3] sm:$0xff] %vm321, %v1215
    %1219 = vrot.lane.b32.xlu0 %v1200, 64
    %v1220 = vpop.permute.xlu0 %1219
    %1222 = vst.msk [vmem:[#allocation4] sm:$0xff] %vm321, %v1220
    %1224 = vrot.lane.b32.xlu0 %v1194, 96
    %v1225 = vpop.permute.xlu0 %1224
    %1227 = vst.msk [vmem:[#allocation5] sm:$0xff] %vm321, %v1225
    %v1228 = vld [vmem:[#allocation7] sm:$0xf]
    %v1229 = vld [vmem:[#allocation7 + $0x4] sm:$0xf]
    %v1230 = vld [vmem:[#allocation7 + $0x8] sm:$0xf]
    %v1231 = vld [vmem:[#allocation7 + $0xc] sm:$0xf]
    %v1232 = vld [vmem:[#allocation7 + $0x10] sm:$0xf]
    %v1233 = vld [vmem:[#allocation7 + $0x14] sm:$0xf]
    %v1234 = vld [vmem:[#allocation7 + $0x18] sm:$0xf]
    %v1235 = vld [vmem:[#allocation7 + $0x1c] sm:$0xf]
    %v1236 = vld [vmem:[#allocation17] sm:$0xf]
    %v1237 = vld [vmem:[#allocation17 + $0x4] sm:$0xf]
    %v1238 = vld [vmem:[#allocation17 + $0x8] sm:$0xf]
    %v1239 = vld [vmem:[#allocation17 + $0xc] sm:$0xf]
    %v1240 = vld [vmem:[%s8] sm:$0x1]
    %v1242 = vperm.slane %v1240, 0
    %v1252 = vunpack.c.l.b16 %v1228
    %v1253 = vunpack.c.l.b16 %v1229
    %v1254 = vunpack.c.l.b16 %v1230
    %v1255 = vunpack.c.l.b16 %v1231
    %v1256 = vunpack.c.l.b16 %v1232
    %v1257 = vunpack.c.l.b16 %v1233
    %v1258 = vunpack.c.l.b16 %v1234
    %v1259 = vunpack.c.l.b16 %v1235
    %v1260 = vpack.c.b16 %v1253, %v1252
    %v1261 = vpack.c.b16 %v1255, %v1254
    %v1262 = vpack.c.b16 %v1257, %v1256
    %v1263 = vpack.c.b16 %v1259, %v1258
    %v1268 = vunpack.c.l.b16 %v1236
    %v1269 = vunpack.c.l.b16 %v1237
    %v1270 = vunpack.c.l.b16 %v1238
    %v1271 = vunpack.c.l.b16 %v1239
    %v1272 = vpack.c.b16 %v1269, %v1268
    %v1273 = vpack.c.b16 %v1271, %v1270
    %v1277 = vsel %vm321, %v1260, 0
    %v1280 = vsel %vm321, %v1261, 0
    %v1283 = vsel %vm321, %v1262, 0
    %v1286 = vsel %vm321, %v1263, 0
    %1288 = vmatpush.bf16.msra.mxu0 0
    %1289 = vmatpush.bf16.msra.mxu0 0
    %1290 = vmatpush.bf16.msra.mxu0 0
    %1291 = vmatpush.bf16.msra.mxu0 0
    %1292 = vmatpush.bf16.msra.mxu0 0
    %1293 = vmatpush.bf16.msra.mxu0 0
    %1294 = vmatpush.bf16.msra.mxu0 %v1273
    %1295 = vmatpush.bf16.msra.mxu0 %v1272
    %1296 = vmatmul.bf16.gmra.mxu0 %v1277
    %v1297 = vpop.f32.mrf.mxu0
    %v1298 = vadd.f32 %v1242, %v1297
    %v1299 = vpop.f32.mrf.mxu0
    %v1300 = vadd.f32 %v1242, %v1299
    %1301 = vmatmul.bf16.gmra.mxu0 %v1280
    %v1302 = vpop.f32.mrf.mxu0
    %v1303 = vadd.f32 %v1242, %v1302
    %v1304 = vpop.f32.mrf.mxu0
    %v1305 = vadd.f32 %v1242, %v1304
    %1306 = vmatmul.bf16.gmra.mxu0 %v1283
    %v1307 = vpop.f32.mrf.mxu0
    %v1308 = vadd.f32 %v1242, %v1307
    %v1309 = vpop.f32.mrf.mxu0
    %v1310 = vadd.f32 %v1242, %v1309
    %1311 = vmatmul.bf16.gmra.mxu0 %v1286
    %v1312 = vpop.f32.mrf.mxu0
    %v1313 = vadd.f32 %v1242, %v1312
    %v1314 = vpop.f32.mrf.mxu0
    %v1315 = vadd.f32 %v1242, %v1314
    %1316 = vdwg.mxu0
    %v1317 = vtanh.pop %v1298
    %v1318 = vtanh.pop %v1300
    %v1319 = vtanh.pop %v1303
    %v1320 = vtanh.pop %v1305
    %v1321 = vtanh.pop %v1308
    %v1322 = vtanh.pop %v1310
    %v1323 = vtanh.pop %v1313
    %v1324 = vtanh.pop %v1315
    %1325 = vst [vmem:[#allocation19] sm:$0xff] %v1317
    %1326 = vst [vmem:[#allocation19 + $0x8] sm:$0xff] %v1318
    %1327 = vst [vmem:[#allocation19 + $0x10] sm:$0xff] %v1319
    %1328 = vst [vmem:[#allocation19 + $0x18] sm:$0xff] %v1320
    %1329 = vst [vmem:[#allocation19 + $0x20] sm:$0xff] %v1321
    %1330 = vst [vmem:[#allocation19 + $0x28] sm:$0xff] %v1322
    %1331 = vst [vmem:[#allocation19 + $0x30] sm:$0xff] %v1323
    %1332 = vst [vmem:[#allocation19 + $0x38] sm:$0xff] %v1324
    // Predicated region
    $region66: #{tpu_custom_call.1} parent=1 // pred_check
      _
    $region67: #{tpu_custom_call.1} parent=1 // pred_check_branch
      %1334 = sbr.rel (0) target = $region69
    $region68: #{tpu_custom_call.1} parent=1 // pred_region
      %s1335 = sadd.s32 0, 0
      %s1336 = smul.u32 8, %s1335
      %1338 = vsyncadd [#allocation10], 0
      %s1339 = smul.addr %s1336, 8
      %s1340 = scalar_lea.hbm %s9, %s1339
      %s1341 = sshll.u32 [#allocation19], 4
      %s1342 = int_to_ptr.vmem [resolvable:$true] %s1341
      %s1343 = sshll.u32 %s1340, 4
      %s1344 = int_to_ptr.hbm [resolvable:$true] %s1343
      %1349 = dma.vmem_to_hbm [thread:$0]  %s1342, 1024, %s1344, [#allocation10], 128, 128, 8
    $region69: #{tpu_custom_call.1} parent=1 // pred_fallthru
      _
    // Predicated region
    $region70: #{tpu_custom_call.1} parent=1 // pred_check
      _
    $region71: #{tpu_custom_call.1} parent=1 // pred_check_branch
      %1351 = sbr.rel (0) target = $region73
    $region72: #{tpu_custom_call.1} parent=1 // pred_region
      %1353 = dma.done [#allocation10], 1024
    $region73: #{tpu_custom_call.1} parent=1 // pred_fallthru
      _
    %1354 = vsyncpa [#allocation9], 1
    %1355 = vsyncpa [#allocation12], 1
    %1356 = vsyncpa [#allocation15], 1
    %1357 = vsyncpa [#allocation18], 1
    %1358 = vsyncpa [#allocation10], 1

// kernel: tpu_custom_call.1
$region0: #{tpu_custom_call.1}
  #allocation0 [shape = 'u32[]', space=smem, size = 0x4, offset = 0x4, fixed_abs, tag = 'smem constant byte address 0x4 - core index']
  #allocation1 [shape = 'u32[72,128]{1,0:T(1,128)}', space=vmem, size = 0x9000, scoped, tag = 'internal scratch']
  #allocation2 [shape = 'f32[8,32]{1,0:T(8,128)}', space=vmem, size = 0x1000, scoped, tag = 'scratch operand']
  #allocation3 [shape = 'f32[8,32]{1,0:T(8,128)}', space=vmem, size = 0x1000, scoped, tag = 'scratch operand']
  #allocation4 [shape = 'f32[8,32]{1,0:T(8,128)}', space=vmem, size = 0x1000, scoped, tag = 'scratch operand']
  #allocation5 [shape = 'f32[8,32]{1,0:T(8,128)}', space=vmem, size = 0x1000, scoped, tag = 'scratch operand']
  #allocation6 [shape = 'f32[64,128]{1,0:T(8,128)}', space=vmem, size = 0x8000, scoped, tag = 'scratch operand']
  #allocation7 [shape = 'bf16[64,32]{1,0:T(8,128)(2,1)}', space=vmem, size = 0x4000, scoped, tag = 'scratch operand']
  %s0 = inlined_call_operand.hbm [shape: bf16[64,128], index: 0, kind: input, shape index: {}]
  %s1 = inlined_call_operand.hbm [shape: bf16[128,128], index: 1, kind: input, shape index: {}]
  %s2 = inlined_call_operand.hbm [shape: bf16[32,128], index: 2, kind: input, shape index: {}]
  %s3 = inlined_call_operand.vmem [shape: f32[1,128], index: 3, kind: input, shape index: {}]
  %s4 = inlined_call_operand.hbm [shape: bf16[32,128], index: 4, kind: input, shape index: {}]
  %s5 = inlined_call_operand.hbm [shape: bf16[32,128], index: 5, kind: input, shape index: {}]
  %s6 = inlined_call_operand.vmem [shape: f32[1,128], index: 6, kind: input, shape index: {}]
  %s7 = inlined_call_operand.hbm [shape: bf16[32,128], index: 7, kind: input, shape index: {}]
  %s8 = inlined_call_operand.vmem [shape: f32[1,128], index: 8, kind: input, shape index: {}]
  %s9 = inlined_call_operand.hbm [shape: f32[64,128], index: 9, kind: output, shape index: {}]
  %s10 = sld [smem:[#allocation0]]
  $region74: #{tpu_custom_call.1} parent=0
    _
  %s12 = ssub.s32 1, %s10
  %s13 = scalar_select 0, %s12, %s10
  $region1: #{tpu_custom_call.1} parent=0
    #allocation8 [shape = 'u8[16384]{0}', space=vmem, size = 0x4000, scoped, tag = 'input window, operand 0, single buffered']
    #allocation9 [shape = 's32[1]{0}', space=sflag, size = 0x4, scoped, tag = 'scoped memory for tpu_custom_call.1']
    #allocation10 [shape = 's32[1]{0}', space=sflag, size = 0x4, scoped, tag = 'scoped memory for tpu_custom_call.1']
    #allocation11 [shape = 'u8[32768]{0}', space=vmem, size = 0x8000, scoped, tag = 'input window, operand 1, single buffered']
    #allocation12 [shape = 's32[1]{0}', space=sflag, size = 0x4, scoped, tag = 'scoped memory for tpu_custom_call.1']
    #allocation13 [shape = 'u8[8192]{0}', space=vmem, size = 0x2000, scoped, tag = 'input window, operand 2, single buffered']
    #allocation14 [shape = 'u8[8192]{0}', space=vmem, size = 0x2000, scoped, tag = 'input window, operand 4, single buffered']
    #allocation15 [shape = 's32[1]{0}', space=sflag, size = 0x4, scoped, tag = 'scoped memory for tpu_custom_call.1']
    #allocation16 [shape = 'u8[8192]{0}', space=vmem, size = 0x2000, scoped, tag = 'input window, operand 5, single buffered']
    #allocation17 [shape = 'u8[8192]{0}', space=vmem, size = 0x2000, scoped, tag = 'input window, operand 7, single buffered']
    #allocation18 [shape = 's32[1]{0}', space=sflag, size = 0x4, scoped, tag = 'scoped memory for tpu_custom_call.1']
    #allocation19 [shape = 'u8[32768]{0}', space=vmem, size = 0x8000, scoped, tag = 'output window, operand 0, single buffered']
    %14 = vsyncpa [#allocation9], 0
    %15 = vsyncpa [#allocation12], 0
    %16 = vsyncpa [#allocation15], 0
    %17 = vsyncpa [#allocation18], 0
    %18 = vsyncpa [#allocation10], 0
    // Predicated region
    $region2: #{tpu_custom_call.1} parent=1 // pred_check
      _
    $region3: #{tpu_custom_call.1} parent=1 // pred_check_branch
      %20 = sbr.rel (0) target = $region5
    $region4: #{tpu_custom_call.1} parent=1 // pred_region
      %s21 = sadd.s32 0, 0
      %s22 = smul.u32 8, %s21
      %24 = vsyncadd [#allocation9], 0
      %s25 = smul.addr %s22, 4
      %s26 = scalar_lea.hbm %s0, %s25
      %s27 = sshll.u32 %s26, 4
      %s28 = int_to_ptr.hbm [resolvable:$true] %s27
      %s29 = sshll.u32 [#allocation8], 4
      %s30 = int_to_ptr.vmem [resolvable:$true] %s29
      %35 = dma.hbm_to_vmem [thread:$0]  %s28, 512, %s30, [#allocation9], 64, 64, 4
    $region5: #{tpu_custom_call.1} parent=1 // pred_fallthru
      _
    // Predicated region
    $region6: #{tpu_custom_call.1} parent=1 // pred_check
      _
    $region7: #{tpu_custom_call.1} parent=1 // pred_check_branch
      %37 = sbr.rel (0) target = $region9
    $region8: #{tpu_custom_call.1} parent=1 // pred_region
      %39 = vsyncadd [#allocation12], 0
      %s40 = sshll.u32 %s1, 4
      %s41 = int_to_ptr.hbm [resolvable:$true] %s40
      %s42 = sshll.u32 [#allocation11], 4
      %s43 = int_to_ptr.vmem [resolvable:$true] %s42
      %48 = dma.hbm_to_vmem [thread:$0]  %s41, 1024, %s43, [#allocation12], 64, 64, 4
    $region9: #{tpu_custom_call.1} parent=1 // pred_fallthru
      _
    // Predicated region
    $region10: #{tpu_custom_call.1} parent=1 // pred_check
      _
    $region11: #{tpu_custom_call.1} parent=1 // pred_check_branch
      %50 = sbr.rel (0) target = $region13
    $region12: #{tpu_custom_call.1} parent=1 // pred_region
      %52 = vsyncadd [#allocation12], 0
      %s53 = sshll.u32 %s2, 4
      %s54 = int_to_ptr.hbm [resolvable:$true] %s53
      %s55 = sshll.u32 [#allocation13], 4
      %s56 = int_to_ptr.vmem [resolvable:$true] %s55
      %61 = dma.hbm_to_vmem [thread:$0]  %s54, 256, %s56, [#allocation12], 64, 64, 4
    $region13: #{tpu_custom_call.1} parent=1 // pred_fallthru
      _
    // Predicated region
    $region14: #{tpu_custom_call.1} parent=1 // pred_check
      _
    $region15: #{tpu_custom_call.1} parent=1 // pred_check_branch
      %63 = sbr.rel (0) target = $region17
    $region16: #{tpu_custom_call.1} parent=1 // pred_region
      _
    $region17: #{tpu_custom_call.1} parent=1 // pred_fallthru
      _
    // Predicated region
    $region18: #{tpu_custom_call.1} parent=1 // pred_check
      _
    $region19: #{tpu_custom_call.1} parent=1 // pred_check_branch
      %65 = sbr.rel (0) target = $region21
    $region20: #{tpu_custom_call.1} parent=1 // pred_region
      %67 = vsyncadd [#allocation15], 0
      %s68 = sshll.u32 %s4, 4
      %s69 = int_to_ptr.hbm [resolvable:$true] %s68
      %s70 = sshll.u32 [#allocation14], 4
      %s71 = int_to_ptr.vmem [resolvable:$true] %s70
      %76 = dma.hbm_to_vmem [thread:$0]  %s69, 256, %s71, [#allocation15], 64, 64, 4
    $region21: #{tpu_custom_call.1} parent=1 // pred_fallthru
      _
    // Predicated region
    $region22: #{tpu_custom_call.1} parent=1 // pred_check
      _
    $region23: #{tpu_custom_call.1} parent=1 // pred_check_branch
      %78 = sbr.rel (0) target = $region25
    $region24: #{tpu_custom_call.1} parent=1 // pred_region
      %80 = vsyncadd [#allocation15], 0
      %s81 = sshll.u32 %s5, 4
      %s82 = int_to_ptr.hbm [resolvable:$true] %s81
      %s83 = sshll.u32 [#allocation16], 4
      %s84 = int_to_ptr.vmem [resolvable:$true] %s83
      %89 = dma.hbm_to_vmem [thread:$0]  %s82, 256, %s84, [#allocation15], 64, 64, 4
    $region25: #{tpu_custom_call.1} parent=1 // pred_fallthru
      _
    // Predicated region
    $region26: #{tpu_custom_call.1} parent=1 // pred_check
      _
    $region27: #{tpu_custom_call.1} parent=1 // pred_check_branch
      %91 = sbr.rel (0) target = $region29
    $region28: #{tpu_custom_call.1} parent=1 // pred_region
      _
    $region29: #{tpu_custom_call.1} parent=1 // pred_fallthru
      _
    // Predicated region
    $region30: #{tpu_custom_call.1} parent=1 // pred_check
      _
    $region31: #{tpu_custom_call.1} parent=1 // pred_check_branch
      %93 = sbr.rel (0) target = $region33
    $region32: #{tpu_custom_call.1} parent=1 // pred_region
      %95 = vsyncadd [#allocation18], 0
      %s96 = sshll.u32 %s7, 4
      %s97 = int_to_ptr.hbm [resolvable:$true] %s96
      %s98 = sshll.u32 [#allocation17], 4
      %s99 = int_to_ptr.vmem [resolvable:$true] %s98
      %104 = dma.hbm_to_vmem [thread:$0]  %s97, 256, %s99, [#allocation18], 64, 64, 4
    $region33: #{tpu_custom_call.1} parent=1 // pred_fallthru
      _
    // Predicated region
    $region34: #{tpu_custom_call.1} parent=1 // pred_check
      _
    $region35: #{tpu_custom_call.1} parent=1 // pred_check_branch
      %106 = sbr.rel (0) target = $region37
    $region36: #{tpu_custom_call.1} parent=1 // pred_region
      _
    $region37: #{tpu_custom_call.1} parent=1 // pred_fallthru
      _
    // Predicated region
    $region38: #{tpu_custom_call.1} parent=1 // pred_check
      _
    $region39: #{tpu_custom_call.1} parent=1 // pred_check_branch
      %108 = sbr.rel (0) target = $region41
    $region40: #{tpu_custom_call.1} parent=1 // pred_region
      %110 = dma.done [#allocation9], 512
    $region41: #{tpu_custom_call.1} parent=1 // pred_fallthru
      _
    // Predicated region
    $region42: #{tpu_custom_call.1} parent=1 // pred_check
      _
    $region43: #{tpu_custom_call.1} parent=1 // pred_check_branch
      %112 = sbr.rel (0) target = $region45
    $region44: #{tpu_custom_call.1} parent=1 // pred_region
      %114 = dma.done [#allocation12], 1024
    $region45: #{tpu_custom_call.1} parent=1 // pred_fallthru
      _
    // Predicated region
    $region46: #{tpu_custom_call.1} parent=1 // pred_check
      _
    $region47: #{tpu_custom_call.1} parent=1 // pred_check_branch
      %116 = sbr.rel (0) target = $region49
    $region48: #{tpu_custom_call.1} parent=1 // pred_region
      %118 = dma.done [#allocation12], 256
    $region49: #{tpu_custom_call.1} parent=1 // pred_fallthru
      _
    // Predicated region
    $region50: #{tpu_custom_call.1} parent=1 // pred_check
      _
    $region51: #{tpu_custom_call.1} parent=1 // pred_check_branch
      %120 = sbr.rel (0) target = $region53
    $region52: #{tpu_custom_call.1} parent=1 // pred_region
      %122 = dma.done [#allocation15], 256
    $region53: #{tpu_custom_call.1} parent=1 // pred_fallthru
      _
    // Predicated region
    $region54: #{tpu_custom_call.1} parent=1 // pred_check
      _
    $region55: #{tpu_custom_call.1} parent=1 // pred_check_branch
      %124 = sbr.rel (0) target = $region57
    $region56: #{tpu_custom_call.1} parent=1 // pred_region
      %126 = dma.done [#allocation15], 256
    $region57: #{tpu_custom_call.1} parent=1 // pred_fallthru
      _
    // Predicated region
    $region58: #{tpu_custom_call.1} parent=1 // pred_check
      _
    $region59: #{tpu_custom_call.1} parent=1 // pred_check_branch
      %128 = sbr.rel (0) target = $region61
    $region60: #{tpu_custom_call.1} parent=1 // pred_region
      %130 = dma.done [#allocation18], 256
    $region61: #{tpu_custom_call.1} parent=1 // pred_fallthru
      _
    %s131 = sadd.s32 0, 0
    %s132 = smul.u32 8, %s131
    %s133 = sadd.s32 0, 0
    %s134 = smul.u32 8, %s133
    %p136 = scmp.eq.s32.totalorder 0, 0
    // Predicated region
    $region62: #{tpu_custom_call.1} parent=1 // pred_check
      %p137 = pneg %p136
    $region63: #{tpu_custom_call.1} parent=1 // pred_check_branch
      %139 = sbr.rel (%p137) target = $region65
    $region64: #{tpu_custom_call.1} parent=1 // pred_region
      %vm140 = vcmask 261120
      %141 = vst.msk [vmem:[#allocation2] sm:$0xff] %vm140, 0.0
      %142 = vst.msk [vmem:[#allocation3] sm:$0xff] %vm140, 0.0
      %143 = vst.msk [vmem:[#allocation4] sm:$0xff] %vm140, 0.0
      %144 = vst.msk [vmem:[#allocation5] sm:$0xff] %vm140, 0.0
    $region65: #{tpu_custom_call.1} parent=1 // pred_fallthru
      _
    %v145 = vld [vmem:[#allocation13] sm:$0xf]
    %v146 = vld [vmem:[#allocation13 + $0x4] sm:$0xf]
    %v147 = vld [vmem:[#allocation13 + $0x8] sm:$0xf]
    %v148 = vld [vmem:[#allocation13 + $0xc] sm:$0xf]
    %v149 = vld [vmem:[#allocation14] sm:$0xf]
    %v150 = vld [vmem:[#allocation14 + $0x4] sm:$0xf]
    %v151 = vld [vmem:[#allocation14 + $0x8] sm:$0xf]
    %v152 = vld [vmem:[#allocation14 + $0xc] sm:$0xf]
    %v153 = vld [vmem:[#allocation16] sm:$0xf]
    %v154 = vld [vmem:[#allocation16 + $0x4] sm:$0xf]
    %v155 = vld [vmem:[#allocation16 + $0x8] sm:$0xf]
    %v156 = vld [vmem:[#allocation16 + $0xc] sm:$0xf]
    %v157 = vld [vmem:[%s6] sm:$0x1]
    %v159 = vperm.slane %v157, 0
    %v161 = vlaneseq
    %v162 = vand.u32 %v161, 127
    %vm163 = vcmp.lt.s32.totalorder %v162, 96
    %v164 = vsel %vm163, 0.5, 1.0
    %v165 = vsel %vm163, 0.5, 0.0
    %v166 = vld [vmem:[#allocation8] sm:$0xf]
    %v167 = vld [vmem:[#allocation8 + $0x4] sm:$0xf]
    %v168 = vld [vmem:[#allocation8 + $0x8] sm:$0xf]
    %v169 = vld [vmem:[#allocation8 + $0xc] sm:$0xf]
    %v170 = vld [vmem:[#allocation8 + $0x10] sm:$0xf]
    %v171 = vld [vmem:[#allocation8 + $0x14] sm:$0xf]
    %v172 = vld [vmem:[#allocation8 + $0x18] sm:$0xf]
    %v173 = vld [vmem:[#allocation8 + $0x1c] sm:$0xf]
    %v174 = vld [vmem:[#allocation11] sm:$0xf]
    %v175 = vld [vmem:[#allocation11 + $0x4] sm:$0xf]
    %v176 = vld [vmem:[#allocation11 + $0x8] sm:$0xf]
    %v177 = vld [vmem:[#allocation11 + $0xc] sm:$0xf]
    %v178 = vld [vmem:[#allocation11 + $0x10] sm:$0xf]
    %v179 = vld [vmem:[#allocation11 + $0x14] sm:$0xf]
    %v180 = vld [vmem:[#allocation11 + $0x18] sm:$0xf]
    %v181 = vld [vmem:[#allocation11 + $0x1c] sm:$0xf]
    %v182 = vld [vmem:[#allocation11 + $0x20] sm:$0xf]
    %v183 = vld [vmem:[#allocation11 + $0x24] sm:$0xf]
    %v184 = vld [vmem:[#allocation11 + $0x28] sm:$0xf]
    %v185 = vld [vmem:[#allocation11 + $0x2c] sm:$0xf]
    %v186 = vld [vmem:[#allocation11 + $0x30] sm:$0xf]
    %v187 = vld [vmem:[#allocation11 + $0x34] sm:$0xf]
    %v188 = vld [vmem:[#allocation11 + $0x38] sm:$0xf]
    %v189 = vld [vmem:[#allocation11 + $0x3c] sm:$0xf]
    %v190 = vld [vmem:[%s3] sm:$0x1]
    %v192 = vperm.slane %v190, 0
    %v202 = vunpack.c.l.b16 %v166
    %v203 = vunpack.c.l.b16 %v167
    %v204 = vunpack.c.l.b16 %v168
    %v205 = vunpack.c.l.b16 %v169
    %v206 = vunpack.c.l.b16 %v170
    %v207 = vunpack.c.l.b16 %v171
    %v208 = vunpack.c.l.b16 %v172
    %v209 = vunpack.c.l.b16 %v173
    %v210 = vpack.c.b16 %v203, %v202
    %v211 = vpack.c.b16 %v205, %v204
    %v212 = vpack.c.b16 %v207, %v206
    %v213 = vpack.c.b16 %v209, %v208
    %v234 = vunpack.c.l.b16 %v174
    %v235 = vunpack.c.l.b16 %v175
    %v236 = vunpack.c.l.b16 %v176
    %v237 = vunpack.c.l.b16 %v177
    %v238 = vunpack.c.l.b16 %v178
    %v239 = vunpack.c.l.b16 %v179
    %v240 = vunpack.c.l.b16 %v180
    %v241 = vunpack.c.l.b16 %v181
    %v242 = vunpack.c.l.b16 %v182
    %v243 = vunpack.c.l.b16 %v183
    %v244 = vunpack.c.l.b16 %v184
    %v245 = vunpack.c.l.b16 %v185
    %v246 = vunpack.c.l.b16 %v186
    %v247 = vunpack.c.l.b16 %v187
    %v248 = vunpack.c.l.b16 %v188
    %v249 = vunpack.c.l.b16 %v189
    %v250 = vpack.c.b16 %v235, %v234
    %v251 = vpack.c.b16 %v237, %v236
    %v252 = vpack.c.b16 %v239, %v238
    %v253 = vpack.c.b16 %v241, %v240
    %v254 = vpack.c.b16 %v243, %v242
    %v255 = vpack.c.b16 %v245, %v244
    %v256 = vpack.c.b16 %v247, %v246
    %v257 = vpack.c.b16 %v249, %v248
    %266 = vmatpush.bf16.msra.mxu0 %v257
    %267 = vmatpush.bf16.msra.mxu0 %v256
    %268 = vmatpush.bf16.msra.mxu0 %v255
    %269 = vmatpush.bf16.msra.mxu0 %v254
    %270 = vmatpush.bf16.msra.mxu0 %v253
    %271 = vmatpush.bf16.msra.mxu0 %v252
    %272 = vmatpush.bf16.msra.mxu0 %v251
    %273 = vmatpush.bf16.msra.mxu0 %v250
    %274 = vmatmul.bf16.gmra.mxu0 %v210
    %v275 = vpop.f32.mrf.mxu0
    %v276 = vadd.f32 %v192, %v275
    %v277 = vpop.f32.mrf.mxu0
    %v278 = vadd.f32 %v192, %v277
    %279 = vmatmul.bf16.gmra.mxu0 %v211
    %v280 = vpop.f32.mrf.mxu0
    %v281 = vadd.f32 %v192, %v280
    %v282 = vpop.f32.mrf.mxu0
    %v283 = vadd.f32 %v192, %v282
    %284 = vmatmul.bf16.gmra.mxu0 %v212
    %v285 = vpop.f32.mrf.mxu0
    %v286 = vadd.f32 %v192, %v285
    %v287 = vpop.f32.mrf.mxu0
    %v288 = vadd.f32 %v192, %v287
    %289 = vmatmul.bf16.gmra.mxu0 %v213
    %v290 = vpop.f32.mrf.mxu0
    %v291 = vadd.f32 %v192, %v290
    %v292 = vpop.f32.mrf.mxu0
    %v293 = vadd.f32 %v192, %v292
    %294 = vdwg.mxu0
    %295 = vst [vmem:[#allocation6] sm:$0xff] %v276
    %296 = vst [vmem:[#allocation6 + $0x8] sm:$0xff] %v278
    %297 = vst [vmem:[#allocation6 + $0x10] sm:$0xff] %v281
    %298 = vst [vmem:[#allocation6 + $0x18] sm:$0xff] %v283
    %299 = vst [vmem:[#allocation6 + $0x20] sm:$0xff] %v286
    %300 = vst [vmem:[#allocation6 + $0x28] sm:$0xff] %v288
    %301 = vst [vmem:[#allocation6 + $0x30] sm:$0xff] %v291
    %302 = vst [vmem:[#allocation6 + $0x38] sm:$0xff] %v293
    %v303 = vld [vmem:[#allocation2] sm:$0xff]
    %v304 = vld [vmem:[#allocation3] sm:$0xff]
    %v305 = vld [vmem:[#allocation4] sm:$0xff]
    %v306 = vld [vmem:[#allocation5] sm:$0xff]
    %v307 = vld [vmem:[#allocation6] sm:$0xff]
    %v308 = vpack.c.bf16 %v303, %v303
    %v313 = vunpack.c.l.b16 %v145
    %v314 = vunpack.c.l.b16 %v146
    %v315 = vunpack.c.l.b16 %v147
    %v316 = vunpack.c.l.b16 %v148
    %v317 = vpack.c.b16 %v314, %v313
    %v318 = vpack.c.b16 %v316, %v315
    %vm321 = vcmask 261120
    %v323 = vsel %vm321, %v308, 0
    %325 = vmatpush.bf16.msra.mxu0 0
    %326 = vmatpush.bf16.msra.mxu0 0
    %327 = vmatpush.bf16.msra.mxu0 0
    %328 = vmatpush.bf16.msra.mxu0 0
    %329 = vmatpush.bf16.msra.mxu0 0
    %330 = vmatpush.bf16.msra.mxu0 0
    %331 = vmatpush.bf16.msra.mxu0 %v318
    %332 = vmatpush.bf16.msra.mxu0 %v317
    %333 = vmatmul.bf16.gmra.mxu0 %v323
    %v334 = vpop.f32.mrf.mxu0
    %v335 = vadd.f32 0.0, %v334
    %v336 = vpop.f32.mrf.mxu0
    %337 = vdwg.mxu0
    %v338 = vadd.f32 %v307, %v335
    %v339 = vmul.f32 %v164, %v338
    %v340 = vtanh.pop %v339
    %v341 = vmul.f32 %v164, %v340
    %v342 = vadd.f32 %v341, %v165
    %344 = vrot.lane.b32.xlu0 %v304, 32
    %v345 = vpop.permute.xlu0 %344
    %v347 = vmul.f32 %v342, %v345
    %349 = vrot.lane.b32.xlu0 %v342, 32
    %v350 = vpop.permute.xlu0 %349
    %v352 = vmul.f32 %v342, %v350
    %354 = vrot.lane.b32.xlu0 %v352, 32
    %v355 = vpop.permute.xlu0 %354
    %v357 = vadd.f32 %v347, %v355
    %v358 = vtanh.pop %v357
    %360 = vrot.lane.b32.xlu0 %v358, 32
    %v361 = vpop.permute.xlu0 %360
    %v363 = vmul.f32 %v342, %v361
    %v364 = vpack.c.bf16 %v363, %v363
    %366 = vrot.lane.b32.xlu0 %v364, 64
    %v367 = vpop.permute.xlu0 %366
    %v372 = vunpack.c.l.b16 %v149
    %v373 = vunpack.c.l.b16 %v150
    %v374 = vunpack.c.l.b16 %v151
    %v375 = vunpack.c.l.b16 %v152
    %v376 = vpack.c.b16 %v373, %v372
    %v377 = vpack.c.b16 %v375, %v374
    %v381 = vsel %vm321, %v367, 0
    %383 = vmatpush.bf16.msra.mxu0 0
    %384 = vmatpush.bf16.msra.mxu0 0
    %385 = vmatpush.bf16.msra.mxu0 0
    %386 = vmatpush.bf16.msra.mxu0 0
    %387 = vmatpush.bf16.msra.mxu0 0
    %388 = vmatpush.bf16.msra.mxu0 0
    %389 = vmatpush.bf16.msra.mxu0 %v377
    %390 = vmatpush.bf16.msra.mxu0 %v376
    %391 = vmatmul.bf16.gmra.mxu0 %v381
    %v392 = vpop.f32.mrf.mxu0
    %v393 = vadd.f32 0.0, %v392
    %v394 = vpop.f32.mrf.mxu0
    %395 = vdwg.mxu0
    %v396 = vadd.f32 %v159, %v393
    %v397 = vpack.c.bf16 %v305, %v305
    %v402 = vunpack.c.l.b16 %v153
    %v403 = vunpack.c.l.b16 %v154
    %v404 = vunpack.c.l.b16 %v155
    %v405 = vunpack.c.l.b16 %v156
    %v406 = vpack.c.b16 %v403, %v402
    %v407 = vpack.c.b16 %v405, %v404
    %v411 = vsel %vm321, %v397, 0
    %413 = vmatpush.bf16.msra.mxu0 0
    %414 = vmatpush.bf16.msra.mxu0 0
    %415 = vmatpush.bf16.msra.mxu0 0
    %416 = vmatpush.bf16.msra.mxu0 0
    %417 = vmatpush.bf16.msra.mxu0 0
    %418 = vmatpush.bf16.msra.mxu0 0
    %419 = vmatpush.bf16.msra.mxu0 %v407
    %420 = vmatpush.bf16.msra.mxu0 %v406
    %421 = vmatmul.bf16.gmra.mxu0 %v411
    %v422 = vpop.f32.mrf.mxu0
    %v423 = vadd.f32 0.0, %v422
    %v424 = vpop.f32.mrf.mxu0
    %425 = vdwg.mxu0
    %v426 = vadd.f32 %v396, %v423
    %v427 = vmul.f32 %v164, %v426
    %v428 = vtanh.pop %v427
    %v429 = vmul.f32 %v164, %v428
    %v430 = vadd.f32 %v429, %v165
    %432 = vrot.lane.b32.xlu0 %v306, 32
    %v433 = vpop.permute.xlu0 %432
    %v435 = vmul.f32 %v430, %v433
    %437 = vrot.lane.b32.xlu0 %v430, 32
    %v438 = vpop.permute.xlu0 %437
    %v440 = vmul.f32 %v430, %v438
    %442 = vrot.lane.b32.xlu0 %v440, 32
    %v443 = vpop.permute.xlu0 %442
    %v445 = vadd.f32 %v435, %v443
    %v446 = vtanh.pop %v445
    %448 = vrot.lane.b32.xlu0 %v446, 32
    %v449 = vpop.permute.xlu0 %448
    %v451 = vmul.f32 %v430, %v449
    %v452 = vpack.c.bf16 %v451, %v451
    %454 = vrot.lane.b32.xlu0 %v452, 64
    %v455 = vpop.permute.xlu0 %454
    %vm457 = vcmask 257024
    %458 = vst.msk [vmem:[#allocation7] sm:$0xf] %vm457, %v455
    %s459 = scalar_lea.vmem [#allocation6], 8
    %v460 = vld [vmem:[%s459] sm:$0xff]
    %461 = vmatpush.bf16.msra.mxu0 0
    %462 = vmatpush.bf16.msra.mxu0 0
    %463 = vmatpush.bf16.msra.mxu0 0
    %464 = vmatpush.bf16.msra.mxu0 0
    %465 = vmatpush.bf16.msra.mxu0 0
    %466 = vmatpush.bf16.msra.mxu0 0
    %467 = vmatpush.bf16.msra.mxu0 %v318
    %468 = vmatpush.bf16.msra.mxu0 %v317
    %469 = vmatmul.bf16.gmra.mxu0 %v381
    %v470 = vpop.f32.mrf.mxu0
    %v471 = vadd.f32 0.0, %v470
    %v472 = vpop.f32.mrf.mxu0
    %473 = vdwg.mxu0
    %v474 = vadd.f32 %v460, %v471
    %v475 = vmul.f32 %v164, %v474
    %v476 = vtanh.pop %v475
    %v477 = vmul.f32 %v164, %v476
    %v478 = vadd.f32 %v477, %v165
    %v479 = vmul.f32 %v478, %v357
    %481 = vrot.lane.b32.xlu0 %v478, 32
    %v482 = vpop.permute.xlu0 %481
    %v484 = vmul.f32 %v478, %v482
    %486 = vrot.lane.b32.xlu0 %v484, 32
    %v487 = vpop.permute.xlu0 %486
    %v489 = vadd.f32 %v479, %v487
    %v490 = vtanh.pop %v489
    %492 = vrot.lane.b32.xlu0 %v490, 32
    %v493 = vpop.permute.xlu0 %492
    %v495 = vmul.f32 %v478, %v493
    %v496 = vpack.c.bf16 %v495, %v495
    %498 = vrot.lane.b32.xlu0 %v496, 64
    %v499 = vpop.permute.xlu0 %498
    %v501 = vsel %vm321, %v499, 0
    %503 = vmatpush.bf16.msra.mxu0 0
    %504 = vmatpush.bf16.msra.mxu0 0
    %505 = vmatpush.bf16.msra.mxu0 0
    %506 = vmatpush.bf16.msra.mxu0 0
    %507 = vmatpush.bf16.msra.mxu0 0
    %508 = vmatpush.bf16.msra.mxu0 0
    %509 = vmatpush.bf16.msra.mxu0 %v377
    %510 = vmatpush.bf16.msra.mxu0 %v376
    %511 = vmatmul.bf16.gmra.mxu0 %v501
    %v512 = vpop.f32.mrf.mxu0
    %v513 = vadd.f32 0.0, %v512
    %v514 = vpop.f32.mrf.mxu0
    %515 = vdwg.mxu0
    %v516 = vadd.f32 %v159, %v513
    %v517 = vunpack.c.l.b16 %v452
    %v518 = vpack.c.b16 %v517, %v517
    %519 = vrot.lane.b32.xlu0 %v518, 64
    %v520 = vpop.permute.xlu0 %519
    %v522 = vsel %vm321, %v520, 0
    %524 = vmatpush.bf16.msra.mxu0 0
    %525 = vmatpush.bf16.msra.mxu0 0
    %526 = vmatpush.bf16.msra.mxu0 0
    %527 = vmatpush.bf16.msra.mxu0 0
    %528 = vmatpush.bf16.msra.mxu0 0
    %529 = vmatpush.bf16.msra.mxu0 0
    %530 = vmatpush.bf16.msra.mxu0 %v407
    %531 = vmatpush.bf16.msra.mxu0 %v406
    %532 = vmatmul.bf16.gmra.mxu0 %v522
    %v533 = vpop.f32.mrf.mxu0
    %v534 = vadd.f32 0.0, %v533
    %v535 = vpop.f32.mrf.mxu0
    %536 = vdwg.mxu0
    %v537 = vadd.f32 %v516, %v534
    %v538 = vmul.f32 %v164, %v537
    %v539 = vtanh.pop %v538
    %v540 = vmul.f32 %v164, %v539
    %v541 = vadd.f32 %v540, %v165
    %v542 = vmul.f32 %v541, %v445
    %544 = vrot.lane.b32.xlu0 %v541, 32
    %v545 = vpop.permute.xlu0 %544
    %v547 = vmul.f32 %v541, %v545
    %549 = vrot.lane.b32.xlu0 %v547, 32
    %v550 = vpop.permute.xlu0 %549
    %v552 = vadd.f32 %v542, %v550
    %v553 = vtanh.pop %v552
    %555 = vrot.lane.b32.xlu0 %v553, 32
    %v556 = vpop.permute.xlu0 %555
    %v558 = vmul.f32 %v541, %v556
    %v559 = vpack.c.bf16 %v558, %v558
    %561 = vrot.lane.b32.xlu0 %v559, 64
    %v562 = vpop.permute.xlu0 %561
    %s564 = scalar_lea.vmem [#allocation7], 4
    %565 = vst.msk [vmem:[%s564] sm:$0xf] %vm457, %v562
    %s566 = scalar_lea.vmem [#allocation6], 16
    %v567 = vld [vmem:[%s566] sm:$0xff]
    %568 = vmatpush.bf16.msra.mxu0 0
    %569 = vmatpush.bf16.msra.mxu0 0
    %570 = vmatpush.bf16.msra.mxu0 0
    %571 = vmatpush.bf16.msra.mxu0 0
    %572 = vmatpush.bf16.msra.mxu0 0
    %573 = vmatpush.bf16.msra.mxu0 0
    %574 = vmatpush.bf16.msra.mxu0 %v318
    %575 = vmatpush.bf16.msra.mxu0 %v317
    %576 = vmatmul.bf16.gmra.mxu0 %v501
    %v577 = vpop.f32.mrf.mxu0
    %v578 = vadd.f32 0.0, %v577
    %v579 = vpop.f32.mrf.mxu0
    %580 = vdwg.mxu0
    %v581 = vadd.f32 %v567, %v578
    %v582 = vmul.f32 %v164, %v581
    %v583 = vtanh.pop %v582
    %v584 = vmul.f32 %v164, %v583
    %v585 = vadd.f32 %v584, %v165
    %v586 = vmul.f32 %v585, %v489
    %588 = vrot.lane.b32.xlu0 %v585, 32
    %v589 = vpop.permute.xlu0 %588
    %v591 = vmul.f32 %v585, %v589
    %593 = vrot.lane.b32.xlu0 %v591, 32
    %v594 = vpop.permute.xlu0 %593
    %v596 = vadd.f32 %v586, %v594
    %v597 = vtanh.pop %v596
    %599 = vrot.lane.b32.xlu0 %v597, 32
    %v600 = vpop.permute.xlu0 %599
    %v602 = vmul.f32 %v585, %v600
    %v603 = vpack.c.bf16 %v602, %v602
    %605 = vrot.lane.b32.xlu0 %v603, 64
    %v606 = vpop.permute.xlu0 %605
    %v608 = vsel %vm321, %v606, 0
    %610 = vmatpush.bf16.msra.mxu0 0
    %611 = vmatpush.bf16.msra.mxu0 0
    %612 = vmatpush.bf16.msra.mxu0 0
    %613 = vmatpush.bf16.msra.mxu0 0
    %614 = vmatpush.bf16.msra.mxu0 0
    %615 = vmatpush.bf16.msra.mxu0 0
    %616 = vmatpush.bf16.msra.mxu0 %v377
    %617 = vmatpush.bf16.msra.mxu0 %v376
    %618 = vmatmul.bf16.gmra.mxu0 %v608
    %v619 = vpop.f32.mrf.mxu0
    %v620 = vadd.f32 0.0, %v619
    %v621 = vpop.f32.mrf.mxu0
    %622 = vdwg.mxu0
    %v623 = vadd.f32 %v159, %v620
    %v624 = vunpack.c.l.b16 %v559
    %v625 = vpack.c.b16 %v624, %v624
    %626 = vrot.lane.b32.xlu0 %v625, 64
    %v627 = vpop.permute.xlu0 %626
    %v629 = vsel %vm321, %v627, 0
    %631 = vmatpush.bf16.msra.mxu0 0
    %632 = vmatpush.bf16.msra.mxu0 0
    %633 = vmatpush.bf16.msra.mxu0 0
    %634 = vmatpush.bf16.msra.mxu0 0
    %635 = vmatpush.bf16.msra.mxu0 0
    %636 = vmatpush.bf16.msra.mxu0 0
    %637 = vmatpush.bf16.msra.mxu0 %v407
    %638 = vmatpush.bf16.msra.mxu0 %v406
    %639 = vmatmul.bf16.gmra.mxu0 %v629
    %v640 = vpop.f32.mrf.mxu0
    %v641 = vadd.f32 0.0, %v640
    %v642 = vpop.f32.mrf.mxu0
    %643 = vdwg.mxu0
    %v644 = vadd.f32 %v623, %v641
    %v645 = vmul.f32 %v164, %v644
    %v646 = vtanh.pop %v645
    %v647 = vmul.f32 %v164, %v646
    %v648 = vadd.f32 %v647, %v165
    %v649 = vmul.f32 %v648, %v552
    %651 = vrot.lane.b32.xlu0 %v648, 32
    %v652 = vpop.permute.xlu0 %651
    %v654 = vmul.f32 %v648, %v652
    %656 = vrot.lane.b32.xlu0 %v654, 32
    %v657 = vpop.permute.xlu0 %656
    %v659 = vadd.f32 %v649, %v657
    %v660 = vtanh.pop %v659
    %662 = vrot.lane.b32.xlu0 %v660, 32
    %v663 = vpop.permute.xlu0 %662
    %v665 = vmul.f32 %v648, %v663
    %v666 = vpack.c.bf16 %v665, %v665
    %668 = vrot.lane.b32.xlu0 %v666, 64
    %v669 = vpop.permute.xlu0 %668
    %s671 = scalar_lea.vmem [#allocation7], 8
    %672 = vst.msk [vmem:[%s671] sm:$0xf] %vm457, %v669
    %s673 = scalar_lea.vmem [#allocation6], 24
    %v674 = vld [vmem:[%s673] sm:$0xff]
    %675 = vmatpush.bf16.msra.mxu0 0
    %676 = vmatpush.bf16.msra.mxu0 0
    %677 = vmatpush.bf16.msra.mxu0 0
    %678 = vmatpush.bf16.msra.mxu0 0
    %679 = vmatpush.bf16.msra.mxu0 0
    %680 = vmatpush.bf16.msra.mxu0 0
    %681 = vmatpush.bf16.msra.mxu0 %v318
    %682 = vmatpush.bf16.msra.mxu0 %v317
    %683 = vmatmul.bf16.gmra.mxu0 %v608
    %v684 = vpop.f32.mrf.mxu0
    %v685 = vadd.f32 0.0, %v684
    %v686 = vpop.f32.mrf.mxu0
    %687 = vdwg.mxu0
    %v688 = vadd.f32 %v674, %v685
    %v689 = vmul.f32 %v164, %v688
    %v690 = vtanh.pop %v689
    %v691 = vmul.f32 %v164, %v690
    %v692 = vadd.f32 %v691, %v165
    %v693 = vmul.f32 %v692, %v596
    %695 = vrot.lane.b32.xlu0 %v692, 32
    %v696 = vpop.permute.xlu0 %695
    %v698 = vmul.f32 %v692, %v696
    %700 = vrot.lane.b32.xlu0 %v698, 32
    %v701 = vpop.permute.xlu0 %700
    %v703 = vadd.f32 %v693, %v701
    %v704 = vtanh.pop %v703
    %706 = vrot.lane.b32.xlu0 %v704, 32
    %v707 = vpop.permute.xlu0 %706
    %v709 = vmul.f32 %v692, %v707
    %v710 = vpack.c.bf16 %v709, %v709
    %712 = vrot.lane.b32.xlu0 %v710, 64
    %v713 = vpop.permute.xlu0 %712
    %v715 = vsel %vm321, %v713, 0
    %717 = vmatpush.bf16.msra.mxu0 0
    %718 = vmatpush.bf16.msra.mxu0 0
    %719 = vmatpush.bf16.msra.mxu0 0
    %720 = vmatpush.bf16.msra.mxu0 0
    %721 = vmatpush.bf16.msra.mxu0 0
    %722 = vmatpush.bf16.msra.mxu0 0
    %723 = vmatpush.bf16.msra.mxu0 %v377
    %724 = vmatpush.bf16.msra.mxu0 %v376
    %725 = vmatmul.bf16.gmra.mxu0 %v715
    %v726 = vpop.f32.mrf.mxu0
    %v727 = vadd.f32 0.0, %v726
    %v728 = vpop.f32.mrf.mxu0
    %729 = vdwg.mxu0
    %v730 = vadd.f32 %v159, %v727
    %v731 = vunpack.c.l.b16 %v666
    %v732 = vpack.c.b16 %v731, %v731
    %733 = vrot.lane.b32.xlu0 %v732, 64
    %v734 = vpop.permute.xlu0 %733
    %v736 = vsel %vm321, %v734, 0
    %738 = vmatpush.bf16.msra.mxu0 0
    %739 = vmatpush.bf16.msra.mxu0 0
    %740 = vmatpush.bf16.msra.mxu0 0
    %741 = vmatpush.bf16.msra.mxu0 0
    %742 = vmatpush.bf16.msra.mxu0 0
    %743 = vmatpush.bf16.msra.mxu0 0
    %744 = vmatpush.bf16.msra.mxu0 %v407
    %745 = vmatpush.bf16.msra.mxu0 %v406
    %746 = vmatmul.bf16.gmra.mxu0 %v736
    %v747 = vpop.f32.mrf.mxu0
    %v748 = vadd.f32 0.0, %v747
    %v749 = vpop.f32.mrf.mxu0
    %750 = vdwg.mxu0
    %v751 = vadd.f32 %v730, %v748
    %v752 = vmul.f32 %v164, %v751
    %v753 = vtanh.pop %v752
    %v754 = vmul.f32 %v164, %v753
    %v755 = vadd.f32 %v754, %v165
    %v756 = vmul.f32 %v755, %v659
    %758 = vrot.lane.b32.xlu0 %v755, 32
    %v759 = vpop.permute.xlu0 %758
    %v761 = vmul.f32 %v755, %v759
    %763 = vrot.lane.b32.xlu0 %v761, 32
    %v764 = vpop.permute.xlu0 %763
    %v766 = vadd.f32 %v756, %v764
    %v767 = vtanh.pop %v766
    %769 = vrot.lane.b32.xlu0 %v767, 32
    %v770 = vpop.permute.xlu0 %769
    %v772 = vmul.f32 %v755, %v770
    %v773 = vpack.c.bf16 %v772, %v772
    %775 = vrot.lane.b32.xlu0 %v773, 64
    %v776 = vpop.permute.xlu0 %775
    %s778 = scalar_lea.vmem [#allocation7], 12
    %779 = vst.msk [vmem:[%s778] sm:$0xf] %vm457, %v776
    %s780 = scalar_lea.vmem [#allocation6], 32
    %v781 = vld [vmem:[%s780] sm:$0xff]
    %782 = vmatpush.bf16.msra.mxu0 0
    %783 = vmatpush.bf16.msra.mxu0 0
    %784 = vmatpush.bf16.msra.mxu0 0
    %785 = vmatpush.bf16.msra.mxu0 0
    %786 = vmatpush.bf16.msra.mxu0 0
    %787 = vmatpush.bf16.msra.mxu0 0
    %788 = vmatpush.bf16.msra.mxu0 %v318
    %789 = vmatpush.bf16.msra.mxu0 %v317
    %790 = vmatmul.bf16.gmra.mxu0 %v715
    %v791 = vpop.f32.mrf.mxu0
    %v792 = vadd.f32 0.0, %v791
    %v793 = vpop.f32.mrf.mxu0
    %794 = vdwg.mxu0
    %v795 = vadd.f32 %v781, %v792
    %v796 = vmul.f32 %v164, %v795
    %v797 = vtanh.pop %v796
    %v798 = vmul.f32 %v164, %v797
    %v799 = vadd.f32 %v798, %v165
    %v800 = vmul.f32 %v799, %v703
    %802 = vrot.lane.b32.xlu0 %v799, 32
    %v803 = vpop.permute.xlu0 %802
    %v805 = vmul.f32 %v799, %v803
    %807 = vrot.lane.b32.xlu0 %v805, 32
    %v808 = vpop.permute.xlu0 %807
    %v810 = vadd.f32 %v800, %v808
    %v811 = vtanh.pop %v810
    %813 = vrot.lane.b32.xlu0 %v811, 32
    %v814 = vpop.permute.xlu0 %813
    %v816 = vmul.f32 %v799, %v814
    %v817 = vpack.c.bf16 %v816, %v816
    %819 = vrot.lane.b32.xlu0 %v817, 64
    %v820 = vpop.permute.xlu0 %819
    %v822 = vsel %vm321, %v820, 0
    %824 = vmatpush.bf16.msra.mxu0 0
    %825 = vmatpush.bf16.msra.mxu0 0
    %826 = vmatpush.bf16.msra.mxu0 0
    %827 = vmatpush.bf16.msra.mxu0 0
    %828 = vmatpush.bf16.msra.mxu0 0
    %829 = vmatpush.bf16.msra.mxu0 0
    %830 = vmatpush.bf16.msra.mxu0 %v377
    %831 = vmatpush.bf16.msra.mxu0 %v376
    %832 = vmatmul.bf16.gmra.mxu0 %v822
    %v833 = vpop.f32.mrf.mxu0
    %v834 = vadd.f32 0.0, %v833
    %v835 = vpop.f32.mrf.mxu0
    %836 = vdwg.mxu0
    %v837 = vadd.f32 %v159, %v834
    %v838 = vunpack.c.l.b16 %v773
    %v839 = vpack.c.b16 %v838, %v838
    %840 = vrot.lane.b32.xlu0 %v839, 64
    %v841 = vpop.permute.xlu0 %840
    %v843 = vsel %vm321, %v841, 0
    %845 = vmatpush.bf16.msra.mxu0 0
    %846 = vmatpush.bf16.msra.mxu0 0
    %847 = vmatpush.bf16.msra.mxu0 0
    %848 = vmatpush.bf16.msra.mxu0 0
    %849 = vmatpush.bf16.msra.mxu0 0
    %850 = vmatpush.bf16.msra.mxu0 0
    %851 = vmatpush.bf16.msra.mxu0 %v407
    %852 = vmatpush.bf16.msra.mxu0 %v406
    %853 = vmatmul.bf16.gmra.mxu0 %v843
    %v854 = vpop.f32.mrf.mxu0
    %v855 = vadd.f32 0.0, %v854
    %v856 = vpop.f32.mrf.mxu0
    %857 = vdwg.mxu0
    %v858 = vadd.f32 %v837, %v855
    %v859 = vmul.f32 %v164, %v858
    %v860 = vtanh.pop %v859
    %v861 = vmul.f32 %v164, %v860
    %v862 = vadd.f32 %v861, %v165
    %v863 = vmul.f32 %v862, %v766
    %865 = vrot.lane.b32.xlu0 %v862, 32
    %v866 = vpop.permute.xlu0 %865
    %v868 = vmul.f32 %v862, %v866
    %870 = vrot.lane.b32.xlu0 %v868, 32
    %v871 = vpop.permute.xlu0 %870
    %v873 = vadd.f32 %v863, %v871
    %v874 = vtanh.pop %v873
    %876 = vrot.lane.b32.xlu0 %v874, 32
    %v877 = vpop.permute.xlu0 %876
    %v879 = vmul.f32 %v862, %v877
    %v880 = vpack.c.bf16 %v879, %v879
    %882 = vrot.lane.b32.xlu0 %v880, 64
    %v883 = vpop.permute.xlu0 %882
    %s885 = scalar_lea.vmem [#allocation7], 16
    %886 = vst.msk [vmem:[%s885] sm:$0xf] %vm457, %v883
    %s887 = scalar_lea.vmem [#allocation6], 40
    %v888 = vld [vmem:[%s887] sm:$0xff]
    %889 = vmatpush.bf16.msra.mxu0 0
    %890 = vmatpush.bf16.msra.mxu0 0
    %891 = vmatpush.bf16.msra.mxu0 0
    %892 = vmatpush.bf16.msra.mxu0 0
    %893 = vmatpush.bf16.msra.mxu0 0
    %894 = vmatpush.bf16.msra.mxu0 0
    %895 = vmatpush.bf16.msra.mxu0 %v318
    %896 = vmatpush.bf16.msra.mxu0 %v317
    %897 = vmatmul.bf16.gmra.mxu0 %v822
    %v898 = vpop.f32.mrf.mxu0
    %v899 = vadd.f32 0.0, %v898
    %v900 = vpop.f32.mrf.mxu0
    %901 = vdwg.mxu0
    %v902 = vadd.f32 %v888, %v899
    %v903 = vmul.f32 %v164, %v902
    %v904 = vtanh.pop %v903
    %v905 = vmul.f32 %v164, %v904
    %v906 = vadd.f32 %v905, %v165
    %v907 = vmul.f32 %v906, %v810
    %909 = vrot.lane.b32.xlu0 %v906, 32
    %v910 = vpop.permute.xlu0 %909
    %v912 = vmul.f32 %v906, %v910
    %914 = vrot.lane.b32.xlu0 %v912, 32
    %v915 = vpop.permute.xlu0 %914
    %v917 = vadd.f32 %v907, %v915
    %v918 = vtanh.pop %v917
    %920 = vrot.lane.b32.xlu0 %v918, 32
    %v921 = vpop.permute.xlu0 %920
    %v923 = vmul.f32 %v906, %v921
    %v924 = vpack.c.bf16 %v923, %v923
    %926 = vrot.lane.b32.xlu0 %v924, 64
    %v927 = vpop.permute.xlu0 %926
    %v929 = vsel %vm321, %v927, 0
    %931 = vmatpush.bf16.msra.mxu0 0
    %932 = vmatpush.bf16.msra.mxu0 0
    %933 = vmatpush.bf16.msra.mxu0 0
    %934 = vmatpush.bf16.msra.mxu0 0
    %935 = vmatpush.bf16.msra.mxu0 0
    %936 = vmatpush.bf16.msra.mxu0 0
    %937 = vmatpush.bf16.msra.mxu0 %v377
    %938 = vmatpush.bf16.msra.mxu0 %v376
    %939 = vmatmul.bf16.gmra.mxu0 %v929
    %v940 = vpop.f32.mrf.mxu0
    %v941 = vadd.f32 0.0, %v940
    %v942 = vpop.f32.mrf.mxu0
    %943 = vdwg.mxu0
    %v944 = vadd.f32 %v159, %v941
    %v945 = vunpack.c.l.b16 %v880
    %v946 = vpack.c.b16 %v945, %v945
    %947 = vrot.lane.b32.xlu0 %v946, 64
    %v948 = vpop.permute.xlu0 %947
    %v950 = vsel %vm321, %v948, 0
    %952 = vmatpush.bf16.msra.mxu0 0
    %953 = vmatpush.bf16.msra.mxu0 0
    %954 = vmatpush.bf16.msra.mxu0 0
    %955 = vmatpush.bf16.msra.mxu0 0
    %956 = vmatpush.bf16.msra.mxu0 0
    %957 = vmatpush.bf16.msra.mxu0 0
    %958 = vmatpush.bf16.msra.mxu0 %v407
    %959 = vmatpush.bf16.msra.mxu0 %v406
    %960 = vmatmul.bf16.gmra.mxu0 %v950
    %v961 = vpop.f32.mrf.mxu0
    %v962 = vadd.f32 0.0, %v961
    %v963 = vpop.f32.mrf.mxu0
    %964 = vdwg.mxu0
    %v965 = vadd.f32 %v944, %v962
    %v966 = vmul.f32 %v164, %v965
    %v967 = vtanh.pop %v966
    %v968 = vmul.f32 %v164, %v967
    %v969 = vadd.f32 %v968, %v165
    %v970 = vmul.f32 %v969, %v873
    %972 = vrot.lane.b32.xlu0 %v969, 32
    %v973 = vpop.permute.xlu0 %972
    %v975 = vmul.f32 %v969, %v973
    %977 = vrot.lane.b32.xlu0 %v975, 32
    %v978 = vpop.permute.xlu0 %977
    %v980 = vadd.f32 %v970, %v978
    %v981 = vtanh.pop %v980
    %983 = vrot.lane.b32.xlu0 %v981, 32
    %v984 = vpop.permute.xlu0 %983
    %v986 = vmul.f32 %v969, %v984
    %v987 = vpack.c.bf16 %v986, %v986
    %989 = vrot.lane.b32.xlu0 %v987, 64
    %v990 = vpop.permute.xlu0 %989
    %s992 = scalar_lea.vmem [#allocation7], 20
    %993 = vst.msk [vmem:[%s992] sm:$0xf] %vm457, %v990
    %s994 = scalar_lea.vmem [#allocation6], 48
    %v995 = vld [vmem:[%s994] sm:$0xff]
    %996 = vmatpush.bf16.msra.mxu0 0
    %997 = vmatpush.bf16.msra.mxu0 0
    %998 = vmatpush.bf16.msra.mxu0 0
    %999 = vmatpush.bf16.msra.mxu0 0
    %1000 = vmatpush.bf16.msra.mxu0 0
    %1001 = vmatpush.bf16.msra.mxu0 0
    %1002 = vmatpush.bf16.msra.mxu0 %v318
    %1003 = vmatpush.bf16.msra.mxu0 %v317
    %1004 = vmatmul.bf16.gmra.mxu0 %v929
    %v1005 = vpop.f32.mrf.mxu0
    %v1006 = vadd.f32 0.0, %v1005
    %v1007 = vpop.f32.mrf.mxu0
    %1008 = vdwg.mxu0
    %v1009 = vadd.f32 %v995, %v1006
    %v1010 = vmul.f32 %v164, %v1009
    %v1011 = vtanh.pop %v1010
    %v1012 = vmul.f32 %v164, %v1011
    %v1013 = vadd.f32 %v1012, %v165
    %v1014 = vmul.f32 %v1013, %v917
    %1016 = vrot.lane.b32.xlu0 %v1013, 32
    %v1017 = vpop.permute.xlu0 %1016
    %v1019 = vmul.f32 %v1013, %v1017
    %1021 = vrot.lane.b32.xlu0 %v1019, 32
    %v1022 = vpop.permute.xlu0 %1021
    %v1024 = vadd.f32 %v1014, %v1022
    %v1025 = vtanh.pop %v1024
    %1027 = vrot.lane.b32.xlu0 %v1025, 32
    %v1028 = vpop.permute.xlu0 %1027
    %v1030 = vmul.f32 %v1013, %v1028
    %v1031 = vpack.c.bf16 %v1030, %v1030
    %1033 = vrot.lane.b32.xlu0 %v1031, 64
    %v1034 = vpop.permute.xlu0 %1033
    %v1036 = vsel %vm321, %v1034, 0
    %1038 = vmatpush.bf16.msra.mxu0 0
    %1039 = vmatpush.bf16.msra.mxu0 0
    %1040 = vmatpush.bf16.msra.mxu0 0
    %1041 = vmatpush.bf16.msra.mxu0 0
    %1042 = vmatpush.bf16.msra.mxu0 0
    %1043 = vmatpush.bf16.msra.mxu0 0
    %1044 = vmatpush.bf16.msra.mxu0 %v377
    %1045 = vmatpush.bf16.msra.mxu0 %v376
    %1046 = vmatmul.bf16.gmra.mxu0 %v1036
    %v1047 = vpop.f32.mrf.mxu0
    %v1048 = vadd.f32 0.0, %v1047
    %v1049 = vpop.f32.mrf.mxu0
    %1050 = vdwg.mxu0
    %v1051 = vadd.f32 %v159, %v1048
    %v1052 = vunpack.c.l.b16 %v987
    %v1053 = vpack.c.b16 %v1052, %v1052
    %1054 = vrot.lane.b32.xlu0 %v1053, 64
    %v1055 = vpop.permute.xlu0 %1054
    %v1057 = vsel %vm321, %v1055, 0
    %1059 = vmatpush.bf16.msra.mxu0 0
    %1060 = vmatpush.bf16.msra.mxu0 0
    %1061 = vmatpush.bf16.msra.mxu0 0
    %1062 = vmatpush.bf16.msra.mxu0 0
    %1063 = vmatpush.bf16.msra.mxu0 0
    %1064 = vmatpush.bf16.msra.mxu0 0
    %1065 = vmatpush.bf16.msra.mxu0 %v407
    %1066 = vmatpush.bf16.msra.mxu0 %v406
    %1067 = vmatmul.bf16.gmra.mxu0 %v1057
    %v1068 = vpop.f32.mrf.mxu0
    %v1069 = vadd.f32 0.0, %v1068
    %v1070 = vpop.f32.mrf.mxu0
    %1071 = vdwg.mxu0
    %v1072 = vadd.f32 %v1051, %v1069
    %v1073 = vmul.f32 %v164, %v1072
    %v1074 = vtanh.pop %v1073
    %v1075 = vmul.f32 %v164, %v1074
    %v1076 = vadd.f32 %v1075, %v165
    %v1077 = vmul.f32 %v1076, %v980
    %1079 = vrot.lane.b32.xlu0 %v1076, 32
    %v1080 = vpop.permute.xlu0 %1079
    %v1082 = vmul.f32 %v1076, %v1080
    %1084 = vrot.lane.b32.xlu0 %v1082, 32
    %v1085 = vpop.permute.xlu0 %1084
    %v1087 = vadd.f32 %v1077, %v1085
    %v1088 = vtanh.pop %v1087
    %1090 = vrot.lane.b32.xlu0 %v1088, 32
    %v1091 = vpop.permute.xlu0 %1090
    %v1093 = vmul.f32 %v1076, %v1091
    %v1094 = vpack.c.bf16 %v1093, %v1093
    %1096 = vrot.lane.b32.xlu0 %v1094, 64
    %v1097 = vpop.permute.xlu0 %1096
    %s1099 = scalar_lea.vmem [#allocation7], 24
    %1100 = vst.msk [vmem:[%s1099] sm:$0xf] %vm457, %v1097
    %s1101 = scalar_lea.vmem [#allocation6], 56
    %v1102 = vld [vmem:[%s1101] sm:$0xff]
    %1103 = vmatpush.bf16.msra.mxu0 0
    %1104 = vmatpush.bf16.msra.mxu0 0
    %1105 = vmatpush.bf16.msra.mxu0 0
    %1106 = vmatpush.bf16.msra.mxu0 0
    %1107 = vmatpush.bf16.msra.mxu0 0
    %1108 = vmatpush.bf16.msra.mxu0 0
    %1109 = vmatpush.bf16.msra.mxu0 %v318
    %1110 = vmatpush.bf16.msra.mxu0 %v317
    %1111 = vmatmul.bf16.gmra.mxu0 %v1036
    %v1112 = vpop.f32.mrf.mxu0
    %v1113 = vadd.f32 0.0, %v1112
    %v1114 = vpop.f32.mrf.mxu0
    %1115 = vdwg.mxu0
    %v1116 = vadd.f32 %v1102, %v1113
    %v1117 = vmul.f32 %v164, %v1116
    %v1118 = vtanh.pop %v1117
    %v1119 = vmul.f32 %v164, %v1118
    %v1120 = vadd.f32 %v1119, %v165
    %v1121 = vmul.f32 %v1120, %v1024
    %1123 = vrot.lane.b32.xlu0 %v1120, 32
    %v1124 = vpop.permute.xlu0 %1123
    %v1126 = vmul.f32 %v1120, %v1124
    %1128 = vrot.lane.b32.xlu0 %v1126, 32
    %v1129 = vpop.permute.xlu0 %1128
    %v1131 = vadd.f32 %v1121, %v1129
    %v1132 = vtanh.pop %v1131
    %1134 = vrot.lane.b32.xlu0 %v1132, 32
    %v1135 = vpop.permute.xlu0 %1134
    %v1137 = vmul.f32 %v1120, %v1135
    %v1138 = vpack.c.bf16 %v1137, %v1137
    %1140 = vrot.lane.b32.xlu0 %v1138, 64
    %v1141 = vpop.permute.xlu0 %1140
    %v1143 = vsel %vm321, %v1141, 0
    %1145 = vmatpush.bf16.msra.mxu0 0
    %1146 = vmatpush.bf16.msra.mxu0 0
    %1147 = vmatpush.bf16.msra.mxu0 0
    %1148 = vmatpush.bf16.msra.mxu0 0
    %1149 = vmatpush.bf16.msra.mxu0 0
    %1150 = vmatpush.bf16.msra.mxu0 0
    %1151 = vmatpush.bf16.msra.mxu0 %v377
    %1152 = vmatpush.bf16.msra.mxu0 %v376
    %1153 = vmatmul.bf16.gmra.mxu0 %v1143
    %v1154 = vpop.f32.mrf.mxu0
    %v1155 = vadd.f32 0.0, %v1154
    %v1156 = vpop.f32.mrf.mxu0
    %1157 = vdwg.mxu0
    %v1158 = vadd.f32 %v159, %v1155
    %v1159 = vunpack.c.l.b16 %v1094
    %v1160 = vpack.c.b16 %v1159, %v1159
    %1161 = vrot.lane.b32.xlu0 %v1160, 64
    %v1162 = vpop.permute.xlu0 %1161
    %v1164 = vsel %vm321, %v1162, 0
    %1166 = vmatpush.bf16.msra.mxu0 0
    %1167 = vmatpush.bf16.msra.mxu0 0
    %1168 = vmatpush.bf16.msra.mxu0 0
    %1169 = vmatpush.bf16.msra.mxu0 0
    %1170 = vmatpush.bf16.msra.mxu0 0
    %1171 = vmatpush.bf16.msra.mxu0 0
    %1172 = vmatpush.bf16.msra.mxu0 %v407
    %1173 = vmatpush.bf16.msra.mxu0 %v406
    %1174 = vmatmul.bf16.gmra.mxu0 %v1164
    %v1175 = vpop.f32.mrf.mxu0
    %v1176 = vadd.f32 0.0, %v1175
    %v1177 = vpop.f32.mrf.mxu0
    %1178 = vdwg.mxu0
    %v1179 = vadd.f32 %v1158, %v1176
    %v1180 = vmul.f32 %v164, %v1179
    %v1181 = vtanh.pop %v1180
    %v1182 = vmul.f32 %v164, %v1181
    %v1183 = vadd.f32 %v1182, %v165
    %v1184 = vmul.f32 %v1183, %v1087
    %1186 = vrot.lane.b32.xlu0 %v1183, 32
    %v1187 = vpop.permute.xlu0 %1186
    %v1189 = vmul.f32 %v1183, %v1187
    %1191 = vrot.lane.b32.xlu0 %v1189, 32
    %v1192 = vpop.permute.xlu0 %1191
    %v1194 = vadd.f32 %v1184, %v1192
    %v1195 = vtanh.pop %v1194
    %1197 = vrot.lane.b32.xlu0 %v1195, 32
    %v1198 = vpop.permute.xlu0 %1197
    %v1200 = vmul.f32 %v1183, %v1198
    %v1201 = vpack.c.bf16 %v1200, %v1200
    %1203 = vrot.lane.b32.xlu0 %v1201, 64
    %v1204 = vpop.permute.xlu0 %1203
    %s1206 = scalar_lea.vmem [#allocation7], 28
    %1207 = vst.msk [vmem:[%s1206] sm:$0xf] %vm457, %v1204
    %1209 = vrot.lane.b32.xlu0 %v1137, 64
    %v1210 = vpop.permute.xlu0 %1209
    %1212 = vst.msk [vmem:[#allocation2] sm:$0xff] %vm321, %v1210
    %1214 = vrot.lane.b32.xlu0 %v1131, 96
    %v1215 = vpop.permute.xlu0 %1214
    %1217 = vst.msk [vmem:[#allocation3] sm:$0xff] %vm321, %v1215
    %1219 = vrot.lane.b32.xlu0 %v1200, 64
    %v1220 = vpop.permute.xlu0 %1219
    %1222 = vst.msk [vmem:[#allocation4] sm:$0xff] %vm321, %v1220
    %1224 = vrot.lane.b32.xlu0 %v1194, 96
    %v1225 = vpop.permute.xlu0 %1224
    %1227 = vst.msk [vmem:[#allocation5] sm:$0xff] %vm321, %v1225
    %v1228 = vld [vmem:[#allocation7] sm:$0xf]
    %v1229 = vld [vmem:[#allocation7 + $0x4] sm:$0xf]
    %v1230 = vld [vmem:[#allocation7 + $0x8] sm:$0xf]
    %v1231 = vld [vmem:[#allocation7 + $0xc] sm:$0xf]
    %v1232 = vld [vmem:[#allocation7 + $0x10] sm:$0xf]
    %v1233 = vld [vmem:[#allocation7 + $0x14] sm:$0xf]
    %v1234 = vld [vmem:[#allocation7 + $0x18] sm:$0xf]
    %v1235 = vld [vmem:[#allocation7 + $0x1c] sm:$0xf]
    %v1236 = vld [vmem:[#allocation17] sm:$0xf]
    %v1237 = vld [vmem:[#allocation17 + $0x4] sm:$0xf]
    %v1238 = vld [vmem:[#allocation17 + $0x8] sm:$0xf]
    %v1239 = vld [vmem:[#allocation17 + $0xc] sm:$0xf]
    %v1240 = vld [vmem:[%s8] sm:$0x1]
    %v1242 = vperm.slane %v1240, 0
    %v1252 = vunpack.c.l.b16 %v1228
    %v1253 = vunpack.c.l.b16 %v1229
    %v1254 = vunpack.c.l.b16 %v1230
    %v1255 = vunpack.c.l.b16 %v1231
    %v1256 = vunpack.c.l.b16 %v1232
    %v1257 = vunpack.c.l.b16 %v1233
    %v1258 = vunpack.c.l.b16 %v1234
    %v1259 = vunpack.c.l.b16 %v1235
    %v1260 = vpack.c.b16 %v1253, %v1252
    %v1261 = vpack.c.b16 %v1255, %v1254
    %v1262 = vpack.c.b16 %v1257, %v1256
    %v1263 = vpack.c.b16 %v1259, %v1258
    %v1268 = vunpack.c.l.b16 %v1236
    %v1269 = vunpack.c.l.b16 %v1237
    %v1270 = vunpack.c.l.b16 %v1238
    %v1271 = vunpack.c.l.b16 %v1239
    %v1272 = vpack.c.b16 %v1269, %v1268
    %v1273 = vpack.c.b16 %v1271, %v1270
    %v1277 = vsel %vm321, %v1260, 0
    %v1280 = vsel %vm321, %v1261, 0
    %v1283 = vsel %vm321, %v1262, 0
    %v1286 = vsel %vm321, %v1263, 0
    %1288 = vmatpush.bf16.msra.mxu0 0
    %1289 = vmatpush.bf16.msra.mxu0 0
    %1290 = vmatpush.bf16.msra.mxu0 0
    %1291 = vmatpush.bf16.msra.mxu0 0
    %1292 = vmatpush.bf16.msra.mxu0 0
    %1293 = vmatpush.bf16.msra.mxu0 0
    %1294 = vmatpush.bf16.msra.mxu0 %v1273
    %1295 = vmatpush.bf16.msra.mxu0 %v1272
    %1296 = vmatmul.bf16.gmra.mxu0 %v1277
    %v1297 = vpop.f32.mrf.mxu0
    %v1298 = vadd.f32 %v1242, %v1297
    %v1299 = vpop.f32.mrf.mxu0
    %v1300 = vadd.f32 %v1242, %v1299
    %1301 = vmatmul.bf16.gmra.mxu0 %v1280
    %v1302 = vpop.f32.mrf.mxu0
    %v1303 = vadd.f32 %v1242, %v1302
    %v1304 = vpop.f32.mrf.mxu0
    %v1305 = vadd.f32 %v1242, %v1304
    %1306 = vmatmul.bf16.gmra.mxu0 %v1283
    %v1307 = vpop.f32.mrf.mxu0
    %v1308 = vadd.f32 %v1242, %v1307
    %v1309 = vpop.f32.mrf.mxu0
    %v1310 = vadd.f32 %v1242, %v1309
    %1311 = vmatmul.bf16.gmra.mxu0 %v1286
    %v1312 = vpop.f32.mrf.mxu0
    %v1313 = vadd.f32 %v1242, %v1312
    %v1314 = vpop.f32.mrf.mxu0
    %v1315 = vadd.f32 %v1242, %v1314
    %1316 = vdwg.mxu0
    %v1317 = vtanh.pop %v1298
    %v1318 = vtanh.pop %v1300
    %v1319 = vtanh.pop %v1303
    %v1320 = vtanh.pop %v1305
    %v1321 = vtanh.pop %v1308
    %v1322 = vtanh.pop %v1310
    %v1323 = vtanh.pop %v1313
    %v1324 = vtanh.pop %v1315
    %1325 = vst [vmem:[#allocation19] sm:$0xff] %v1317
    %1326 = vst [vmem:[#allocation19 + $0x8] sm:$0xff] %v1318
    %1327 = vst [vmem:[#allocation19 + $0x10] sm:$0xff] %v1319
    %1328 = vst [vmem:[#allocation19 + $0x18] sm:$0xff] %v1320
    %1329 = vst [vmem:[#allocation19 + $0x20] sm:$0xff] %v1321
    %1330 = vst [vmem:[#allocation19 + $0x28] sm:$0xff] %v1322
    %1331 = vst [vmem:[#allocation19 + $0x30] sm:$0xff] %v1323
    %1332 = vst [vmem:[#allocation19 + $0x38] sm:$0xff] %v1324
    // Predicated region
    $region66: #{tpu_custom_call.1} parent=1 // pred_check
      _
    $region67: #{tpu_custom_call.1} parent=1 // pred_check_branch
      %1334 = sbr.rel (0) target = $region69
    $region68: #{tpu_custom_call.1} parent=1 // pred_region
      %s1335 = sadd.s32 0, 0
      %s1336 = smul.u32 8, %s1335
      %1338 = vsyncadd [#allocation10], 0
      %s1339 = smul.addr %s1336, 8
      %s1340 = scalar_lea.hbm %s9, %s1339
      %s1341 = sshll.u32 [#allocation19], 4
      %s1342 = int_to_ptr.vmem [resolvable:$true] %s1341
      %s1343 = sshll.u32 %s1340, 4
      %s1344 = int_to_ptr.hbm [resolvable:$true] %s1343
      %1349 = dma.vmem_to_hbm [thread:$0]  %s1342, 1024, %s1344, [#allocation10], 128, 128, 8
    $region69: #{tpu_custom_call.1} parent=1 // pred_fallthru
      _
    // Predicated region
    $region70: #{tpu_custom_call.1} parent=1 // pred_check
      _
    $region71: #{tpu_custom_call.1} parent=1 // pred_check_branch
      %1351 = sbr.rel (0) target = $region73
    $region72: #{tpu_custom_call.1} parent=1 // pred_region
      %1353 = dma.done [#allocation10], 1024
    $region73: #{tpu_custom_call.1} parent=1 // pred_fallthru
      _
    %1354 = vsyncpa [#allocation9], 1
    %1355 = vsyncpa [#allocation12], 1
    %1356 = vsyncpa [#allocation15], 1
    %1357 = vsyncpa [#allocation18], 1
    %1358 = vsyncpa [#allocation10], 1

</llo_original>
